<compile_context>
chip_gen: v6e
topology: v6e:2x2x1
jax: 0.10.0
libtpu: 0.0.40
codegen_flags: <defaults>
</compile_context>

<pallas_src>
import jax
import jax.numpy as jnp
from jax import lax
from jax.experimental import pallas as pl
from jax.experimental.pallas import tpu as pltpu


def _layernorm(h, gamma, beta, eps=1e-5):
    # PyTorch nn.LayerNorm: population variance over the last dim, elementwise affine.
    mu = jnp.mean(h, axis=-1, keepdims=True)
    var = jnp.mean((h - mu) * (h - mu), axis=-1, keepdims=True)
    return (h - mu) * lax.rsqrt(var + eps) * gamma + beta


def actor_kernel(x_ref,
                 w1_ref, b1_ref, g1_ref, be1_ref,
                 w2_ref, b2_ref, g2_ref, be2_ref,
                 w3_ref, b3_ref,
                 o_ref):
    x = x_ref[...].astype(jnp.float32)           # (TILE_B, S)

    # ---- fc1 on the VPU: K = state_size is tiny, an MXU pass would be ~97% padding.
    w1 = w1_ref[...]                             # (S, H1) float32
    h = x[:, 0:1] * w1[0:1, :]                   # (TILE_B, H1)
    for k in range(1, x.shape[1]):               # static, fully unrolled (S is tiny)
        h = h + x[:, k:k + 1] * w1[k:k + 1, :]
    h = h + b1_ref[...]
    h = _layernorm(h, g1_ref[...], be1_ref[...])
    h = jnp.maximum(h, 0.0)

    # ---- fc2 (bf16 operands, f32 accumulate on the MXU) + LayerNorm + ReLU
    h = jnp.dot(h.astype(jnp.bfloat16), w2_ref[...],
                preferred_element_type=jnp.float32) + b2_ref[...]
    h = _layernorm(h, g2_ref[...], be2_ref[...])
    h = jnp.maximum(h, 0.0)

    # ---- fc3 (bf16 operands, f32 accumulate) + tanh (EUP)
    h = jnp.dot(h.astype(jnp.bfloat16), w3_ref[...],
                preferred_element_type=jnp.float32) + b3_ref[...]
    o_ref[...] = jnp.tanh(h).astype(o_ref.dtype)


def actor_forward(x, params, tile_b=128):
    (w1, b1, g1, be1, w2, b2, g2, be2, w3, b3) = params
    B, S = x.shape
    H1 = w1.shape[1]
    H2 = w2.shape[1]
    A = w3.shape[1]

    # Batch tile: multiple of 8, capped at tile_b; pad batch to a whole number of tiles.
    tb = min(tile_b, max(8, ((B + 7) // 8) * 8))
    tb = ((tb + 7) // 8) * 8
    b_pad = ((B + tb - 1) // tb) * tb
    if b_pad != B:
        x = jnp.pad(x, ((0, b_pad - B), (0, 0)))
    grid = (b_pad // tb,)

    const = lambda i: (0, 0)   # weights/biases: resident in VMEM across all grid steps

    out = pl.pallas_call(
        actor_kernel,
        out_shape=jax.ShapeDtypeStruct((b_pad, A), jnp.float32),
        grid_spec=pltpu.PrefetchScalarGridSpec(
            num_scalar_prefetch=0,
            grid=grid,
            in_specs=[
                pl.BlockSpec((tb, S), lambda i: (i, 0)),     # x: tiled over batch
                pl.BlockSpec((S, H1), const),                # w1 (f32)
                pl.BlockSpec((1, H1), const),                # b1
                pl.BlockSpec((1, H1), const),                # gamma1
                pl.BlockSpec((1, H1), const),                # beta1
                pl.BlockSpec((H1, H2), const),               # w2 (bf16)
                pl.BlockSpec((1, H2), const),                # b2
                pl.BlockSpec((1, H2), const),                # gamma2
                pl.BlockSpec((1, H2), const),                # beta2
                pl.BlockSpec((H2, A), const),                # w3 (bf16)
                pl.BlockSpec((1, A), const),                 # b3
            ],
            out_specs=pl.BlockSpec((tb, A), lambda i: (i, 0)),
        ),
        compiler_params=pltpu.CompilerParams(
            dimension_semantics=("parallel",)),
    )(x, w1, b1, g1, be1, w2, b2, g2, be2, w3, b3)
    return out[:B]


def init_actor_params(key, state_size, action_size,
                      hidden_layer1=400, hidden_layer2=300):
    """Deterministic init mirroring Actor.__init__ (uniform bounds per layer).

    Weights are stored pre-transposed (in, out).  w2/w3 are cast to bfloat16
    (MXU operands); w1, biases and LayerNorm affine params stay float32.
    """
    k1w, k1b, k2w, k2b, k3w, k3b = jax.random.split(key, 6)

    # PyTorch code uses 1/sqrt(weight.size()[0]) == 1/sqrt(out_features).
    t1 = 1.0 / jnp.sqrt(jnp.float32(hidden_layer1))
    t2 = 1.0 / jnp.sqrt(jnp.float32(hidden_layer2))
    t3 = 0.003

    w1 = jax.random.uniform(k1w, (state_size, hidden_layer1), jnp.float32, -t1, t1)
    b1 = jax.random.uniform(k1b, (1, hidden_layer1), jnp.float32, -t1, t1)
    w2 = jax.random.uniform(k2w, (hidden_layer1, hidden_layer2), jnp.float32, -t2, t2)
    b2 = jax.random.uniform(k2b, (1, hidden_layer2), jnp.float32, -t2, t2)
    w3 = jax.random.uniform(k3w, (hidden_layer2, action_size), jnp.float32, -t3, t3)
    b3 = jax.random.uniform(k3b, (1, action_size), jnp.float32, -t3, t3)

    # LayerNorm affine params (default PyTorch init: gamma=1, beta=0).
    g1 = jnp.ones((1, hidden_layer1), jnp.float32)
    be1 = jnp.zeros((1, hidden_layer1), jnp.float32)
    g2 = jnp.ones((1, hidden_layer2), jnp.float32)
    be2 = jnp.zeros((1, hidden_layer2), jnp.float32)

    # bf16 MXU operands for the two big matmuls (halves the dominant weight
    # HBM traffic; accumulation is f32 in-kernel).  w1 stays f32 (tiny, VPU path).
    w2 = w2.astype(jnp.bfloat16)
    w3 = w3.astype(jnp.bfloat16)

    return (w1, b1, g1, be1, w2, b2, g2, be2, w3, b3)


def actor_reference(x, params):
    """Pure-JAX reference mirroring the kernel's precision choices."""
    (w1, b1, g1, be1, w2, b2, g2, be2, w3, b3) = params
    h = x @ w1 + b1
    h = _layernorm(h, g1, be1)
    h = jnp.maximum(h, 0.0)
    h = jnp.dot(h.astype(jnp.bfloat16), w2, preferred_element_type=jnp.float32) + b2
    h = _layernorm(h, g2, be2)
    h = jnp.maximum(h, 0.0)
    h = jnp.dot(h.astype(jnp.bfloat16), w3, preferred_element_type=jnp.float32) + b3
    return jnp.tanh(h)


if __name__ == "__main__":
    # Pendulum-v1: state_size=3, action_size=1.
    state_size, action_size = 3, 1
    batch = 200  # non-multiple of the 128-row tile: exercises grid (2 steps) + padding

    key = jax.random.PRNGKey(0)
    kx, kp = jax.random.split(key)
    x = jax.random.normal(kx, (batch, state_size), jnp.float32)
    params = init_actor_params(kp, state_size, action_size)

    out = actor_forward(x, params)
    out = jax.block_until_ready(out)

    ref = actor_reference(x, params)
    assert out.shape == (batch, action_size)
    assert bool(jnp.all(jnp.isfinite(out)))
    assert jnp.allclose(out, ref, atol=2e-3, rtol=2e-3), "mismatch vs reference"

    print("KERNEL_OK")
</pallas_src>

<mosaic_0001>
module attributes {stable_mosaic.version = 11 : i64} {
  func.func @actor_kernel(%arg0: i32, %arg1: memref<128x3xf32, #tpu.memory_space<vmem>>, %arg2: memref<3x400xf32, #tpu.memory_space<vmem>>, %arg3: memref<1x400xf32, #tpu.memory_space<vmem>>, %arg4: memref<1x400xf32, #tpu.memory_space<vmem>>, %arg5: memref<1x400xf32, #tpu.memory_space<vmem>>, %arg6: memref<400x300xbf16, #tpu.memory_space<vmem>>, %arg7: memref<1x300xf32, #tpu.memory_space<vmem>>, %arg8: memref<1x300xf32, #tpu.memory_space<vmem>>, %arg9: memref<1x300xf32, #tpu.memory_space<vmem>>, %arg10: memref<300x1xbf16, #tpu.memory_space<vmem>>, %arg11: memref<1x1xf32, #tpu.memory_space<vmem>>, %arg12: memref<128x1xf32, #tpu.memory_space<vmem>>) attributes {dimension_semantics = [#tpu.dimension_semantics<parallel>], iteration_bounds = array<i64: 2>, scalar_prefetch = 0 : i64, scratch_operands = 0 : i64, tpu.core_type = #tpu.core_type<tc>, window_params = [{transform_indices = @transform_0, window_bounds = array<i64: 128, 3>}, {pipeline_mode = #tpu.pipeline_mode<synchronous>, transform_indices = @transform_1, window_bounds = array<i64: 3, 400>}, {pipeline_mode = #tpu.pipeline_mode<synchronous>, transform_indices = @transform_2, window_bounds = array<i64: 1, 400>}, {pipeline_mode = #tpu.pipeline_mode<synchronous>, transform_indices = @transform_3, window_bounds = array<i64: 1, 400>}, {pipeline_mode = #tpu.pipeline_mode<synchronous>, transform_indices = @transform_4, window_bounds = array<i64: 1, 400>}, {pipeline_mode = #tpu.pipeline_mode<synchronous>, transform_indices = @transform_5, window_bounds = array<i64: 400, 300>}, {pipeline_mode = #tpu.pipeline_mode<synchronous>, transform_indices = @transform_6, window_bounds = array<i64: 1, 300>}, {pipeline_mode = #tpu.pipeline_mode<synchronous>, transform_indices = @transform_7, window_bounds = array<i64: 1, 300>}, {pipeline_mode = #tpu.pipeline_mode<synchronous>, transform_indices = @transform_8, window_bounds = array<i64: 1, 300>}, {pipeline_mode = #tpu.pipeline_mode<synchronous>, transform_indices = @transform_9, window_bounds = array<i64: 300, 1>}, {pipeline_mode = #tpu.pipeline_mode<synchronous>, transform_indices = @transform_10, window_bounds = array<i64: 1, 1>}, {transform_indices = @transform_11, window_bounds = array<i64: 128, 1>}]} {
    %c0 = arith.constant 0 : index
    %c0_0 = arith.constant 0 : index
    %0 = vector.load %arg1[%c0, %c0_0] : memref<128x3xf32, #tpu.memory_space<vmem>>, vector<128x3xf32>
    %c0_1 = arith.constant 0 : index
    %c0_2 = arith.constant 0 : index
    %1 = vector.load %arg2[%c0_1, %c0_2] : memref<3x400xf32, #tpu.memory_space<vmem>>, vector<3x400xf32>
    %2 = vector.extract_strided_slice %0 {offsets = [0, 0], sizes = [128, 1], strides = [1, 1]} : vector<128x3xf32> to vector<128x1xf32>
    %3 = vector.extract_strided_slice %1 {offsets = [0, 0], sizes = [1, 400], strides = [1, 1]} : vector<3x400xf32> to vector<1x400xf32>
    %4 = vector.broadcast %2 : vector<128x1xf32> to vector<128x400xf32>
    %5 = vector.broadcast %3 : vector<1x400xf32> to vector<128x400xf32>
    %6 = arith.mulf %4, %5 : vector<128x400xf32>
    %7 = vector.extract_strided_slice %0 {offsets = [0, 1], sizes = [128, 1], strides = [1, 1]} : vector<128x3xf32> to vector<128x1xf32>
    %8 = vector.extract_strided_slice %1 {offsets = [1, 0], sizes = [1, 400], strides = [1, 1]} : vector<3x400xf32> to vector<1x400xf32>
    %9 = vector.broadcast %7 : vector<128x1xf32> to vector<128x400xf32>
    %10 = vector.broadcast %8 : vector<1x400xf32> to vector<128x400xf32>
    %11 = arith.mulf %9, %10 : vector<128x400xf32>
    %12 = arith.addf %6, %11 : vector<128x400xf32>
    %13 = vector.extract_strided_slice %0 {offsets = [0, 2], sizes = [128, 1], strides = [1, 1]} : vector<128x3xf32> to vector<128x1xf32>
    %14 = vector.extract_strided_slice %1 {offsets = [2, 0], sizes = [1, 400], strides = [1, 1]} : vector<3x400xf32> to vector<1x400xf32>
    %15 = vector.broadcast %13 : vector<128x1xf32> to vector<128x400xf32>
    %16 = vector.broadcast %14 : vector<1x400xf32> to vector<128x400xf32>
    %17 = arith.mulf %15, %16 : vector<128x400xf32>
    %18 = arith.addf %12, %17 : vector<128x400xf32>
    %c0_3 = arith.constant 0 : index
    %c0_4 = arith.constant 0 : index
    %19 = vector.load %arg3[%c0_3, %c0_4] : memref<1x400xf32, #tpu.memory_space<vmem>>, vector<1x400xf32>
    %20 = vector.broadcast %19 : vector<1x400xf32> to vector<128x400xf32>
    %21 = arith.addf %18, %20 : vector<128x400xf32>
    %c0_5 = arith.constant 0 : index
    %c0_6 = arith.constant 0 : index
    %22 = vector.load %arg4[%c0_5, %c0_6] : memref<1x400xf32, #tpu.memory_space<vmem>>, vector<1x400xf32>
    %c0_7 = arith.constant 0 : index
    %c0_8 = arith.constant 0 : index
    %23 = vector.load %arg5[%c0_7, %c0_8] : memref<1x400xf32, #tpu.memory_space<vmem>>, vector<1x400xf32>
    %cst = arith.constant dense<0.000000e+00> : vector<128xf32>
    %24 = vector.multi_reduction <add>, %21, %cst [1] : vector<128x400xf32> to vector<128xf32>
    %25 = vector.shape_cast %24 : vector<128xf32> to vector<128x1xf32>
    %cst_9 = arith.constant 4.000000e+02 : f32
    %26 = vector.broadcast %cst_9 : f32 to vector<128x1xf32>
    %27 = arith.divf %25, %26 : vector<128x1xf32>
    %28 = vector.broadcast %27 : vector<128x1xf32> to vector<128x400xf32>
    %29 = arith.subf %21, %28 : vector<128x400xf32>
    %30 = vector.broadcast %27 : vector<128x1xf32> to vector<128x400xf32>
    %31 = arith.subf %21, %30 : vector<128x400xf32>
    %32 = arith.mulf %29, %31 : vector<128x400xf32>
    %cst_10 = arith.constant dense<0.000000e+00> : vector<128xf32>
    %33 = vector.multi_reduction <add>, %32, %cst_10 [1] : vector<128x400xf32> to vector<128xf32>
    %34 = vector.shape_cast %33 : vector<128xf32> to vector<128x1xf32>
    %cst_11 = arith.constant 4.000000e+02 : f32
    %35 = vector.broadcast %cst_11 : f32 to vector<128x1xf32>
    %36 = arith.divf %34, %35 : vector<128x1xf32>
    %37 = vector.broadcast %27 : vector<128x1xf32> to vector<128x400xf32>
    %38 = arith.subf %21, %37 : vector<128x400xf32>
    %cst_12 = arith.constant 9.99999974E-6 : f32
    %39 = vector.broadcast %cst_12 : f32 to vector<128x1xf32>
    %40 = arith.addf %36, %39 : vector<128x1xf32>
    %41 = math.rsqrt %40 : vector<128x1xf32>
    %42 = vector.broadcast %41 : vector<128x1xf32> to vector<128x400xf32>
    %43 = arith.mulf %38, %42 : vector<128x400xf32>
    %44 = vector.broadcast %22 : vector<1x400xf32> to vector<128x400xf32>
    %45 = arith.mulf %43, %44 : vector<128x400xf32>
    %46 = vector.broadcast %23 : vector<1x400xf32> to vector<128x400xf32>
    %47 = arith.addf %45, %46 : vector<128x400xf32>
    %cst_13 = arith.constant 0.000000e+00 : f32
    %48 = vector.broadcast %cst_13 : f32 to vector<128x400xf32>
    %49 = arith.maximumf %47, %48 : vector<128x400xf32>
    %50 = arith.truncf %49 : vector<128x400xf32> to vector<128x400xbf16>
    %c0_14 = arith.constant 0 : index
    %c0_15 = arith.constant 0 : index
    %51 = vector.load %arg6[%c0_14, %c0_15] : memref<400x300xbf16, #tpu.memory_space<vmem>>, vector<400x300xbf16>
    %cst_16 = arith.constant dense<0.000000e+00> : vector<128x300xf32>
    %52 = tpu.matmul %50, %51, %cst_16 {dimension_numbers = #tpu.dot_dimension_numbers<[1], [0], [0], [1], [0, 0, 1, 1], [], []>} : vector<128x400xbf16>, vector<400x300xbf16>, vector<128x300xf32> -> vector<128x300xf32>
    %c0_17 = arith.constant 0 : index
    %c0_18 = arith.constant 0 : index
    %53 = vector.load %arg7[%c0_17, %c0_18] : memref<1x300xf32, #tpu.memory_space<vmem>>, vector<1x300xf32>
    %54 = vector.broadcast %53 : vector<1x300xf32> to vector<128x300xf32>
    %55 = arith.addf %52, %54 : vector<128x300xf32>
    %c0_19 = arith.constant 0 : index
    %c0_20 = arith.constant 0 : index
    %56 = vector.load %arg8[%c0_19, %c0_20] : memref<1x300xf32, #tpu.memory_space<vmem>>, vector<1x300xf32>
    %c0_21 = arith.constant 0 : index
    %c0_22 = arith.constant 0 : index
    %57 = vector.load %arg9[%c0_21, %c0_22] : memref<1x300xf32, #tpu.memory_space<vmem>>, vector<1x300xf32>
    %cst_23 = arith.constant dense<0.000000e+00> : vector<128xf32>
    %58 = vector.multi_reduction <add>, %55, %cst_23 [1] : vector<128x300xf32> to vector<128xf32>
    %59 = vector.shape_cast %58 : vector<128xf32> to vector<128x1xf32>
    %cst_24 = arith.constant 3.000000e+02 : f32
    %60 = vector.broadcast %cst_24 : f32 to vector<128x1xf32>
    %61 = arith.divf %59, %60 : vector<128x1xf32>
    %62 = vector.broadcast %61 : vector<128x1xf32> to vector<128x300xf32>
    %63 = arith.subf %55, %62 : vector<128x300xf32>
    %64 = vector.broadcast %61 : vector<128x1xf32> to vector<128x300xf32>
    %65 = arith.subf %55, %64 : vector<128x300xf32>
    %66 = arith.mulf %63, %65 : vector<128x300xf32>
    %cst_25 = arith.constant dense<0.000000e+00> : vector<128xf32>
    %67 = vector.multi_reduction <add>, %66, %cst_25 [1] : vector<128x300xf32> to vector<128xf32>
    %68 = vector.shape_cast %67 : vector<128xf32> to vector<128x1xf32>
    %cst_26 = arith.constant 3.000000e+02 : f32
    %69 = vector.broadcast %cst_26 : f32 to vector<128x1xf32>
    %70 = arith.divf %68, %69 : vector<128x1xf32>
    %71 = vector.broadcast %61 : vector<128x1xf32> to vector<128x300xf32>
    %72 = arith.subf %55, %71 : vector<128x300xf32>
    %cst_27 = arith.constant 9.99999974E-6 : f32
    %73 = vector.broadcast %cst_27 : f32 to vector<128x1xf32>
    %74 = arith.addf %70, %73 : vector<128x1xf32>
    %75 = math.rsqrt %74 : vector<128x1xf32>
    %76 = vector.broadcast %75 : vector<128x1xf32> to vector<128x300xf32>
    %77 = arith.mulf %72, %76 : vector<128x300xf32>
    %78 = vector.broadcast %56 : vector<1x300xf32> to vector<128x300xf32>
    %79 = arith.mulf %77, %78 : vector<128x300xf32>
    %80 = vector.broadcast %57 : vector<1x300xf32> to vector<128x300xf32>
    %81 = arith.addf %79, %80 : vector<128x300xf32>
    %cst_28 = arith.constant 0.000000e+00 : f32
    %82 = vector.broadcast %cst_28 : f32 to vector<128x300xf32>
    %83 = arith.maximumf %81, %82 : vector<128x300xf32>
    %84 = arith.truncf %83 : vector<128x300xf32> to vector<128x300xbf16>
    %c0_29 = arith.constant 0 : index
    %c0_30 = arith.constant 0 : index
    %85 = vector.load %arg10[%c0_29, %c0_30] : memref<300x1xbf16, #tpu.memory_space<vmem>>, vector<300x1xbf16>
    %cst_31 = arith.constant dense<0.000000e+00> : vector<128x1xf32>
    %86 = tpu.matmul %84, %85, %cst_31 {dimension_numbers = #tpu.dot_dimension_numbers<[1], [0], [0], [1], [0, 0, 1, 1], [], []>} : vector<128x300xbf16>, vector<300x1xbf16>, vector<128x1xf32> -> vector<128x1xf32>
    %c0_32 = arith.constant 0 : index
    %c0_33 = arith.constant 0 : index
    %87 = vector.load %arg11[%c0_32, %c0_33] : memref<1x1xf32, #tpu.memory_space<vmem>>, vector<1x1xf32>
    %88 = vector.broadcast %87 : vector<1x1xf32> to vector<128x1xf32>
    %89 = arith.addf %86, %88 : vector<128x1xf32>
    %90 = math.tanh %89 : vector<128x1xf32>
    %c0_34 = arith.constant 0 : index
    %c0_35 = arith.constant 0 : index
    %91 = vector.load %arg12[%c0_34, %c0_35] : memref<128x1xf32, #tpu.memory_space<vmem>>, vector<128x1xf32>
    tpu.vector_store %arg12[%c0_34, %c0_35], %90 {strides = array<i32>} : memref<128x1xf32, #tpu.memory_space<vmem>>, vector<128x1xf32>,
    return
  }
  func.func @transform_0(%arg0: i32) -> (i32, i32) {
    %c0_i32 = arith.constant 0 : i32
    %c0_i32_0 = arith.constant 0 : i32
    return %arg0, %c0_i32 : i32, i32
  }
  func.func @transform_1(%arg0: i32) -> (i32, i32) {
    %c0_i32 = arith.constant 0 : i32
    %c0_i32_0 = arith.constant 0 : i32
    %c0_i32_1 = arith.constant 0 : i32
    return %c0_i32, %c0_i32_0 : i32, i32
  }
  func.func @transform_2(%arg0: i32) -> (i32, i32) {
    %c0_i32 = arith.constant 0 : i32
    %c0_i32_0 = arith.constant 0 : i32
    %c0_i32_1 = arith.constant 0 : i32
    return %c0_i32, %c0_i32_0 : i32, i32
  }
  func.func @transform_3(%arg0: i32) -> (i32, i32) {
    %c0_i32 = arith.constant 0 : i32
    %c0_i32_0 = arith.constant 0 : i32
    %c0_i32_1 = arith.constant 0 : i32
    return %c0_i32, %c0_i32_0 : i32, i32
  }
  func.func @transform_4(%arg0: i32) -> (i32, i32) {
    %c0_i32 = arith.constant 0 : i32
    %c0_i32_0 = arith.constant 0 : i32
    %c0_i32_1 = arith.constant 0 : i32
    return %c0_i32, %c0_i32_0 : i32, i32
  }
  func.func @transform_5(%arg0: i32) -> (i32, i32) {
    %c0_i32 = arith.constant 0 : i32
    %c0_i32_0 = arith.constant 0 : i32
    %c0_i32_1 = arith.constant 0 : i32
    return %c0_i32, %c0_i32_0 : i32, i32
  }
  func.func @transform_6(%arg0: i32) -> (i32, i32) {
    %c0_i32 = arith.constant 0 : i32
    %c0_i32_0 = arith.constant 0 : i32
    %c0_i32_1 = arith.constant 0 : i32
    return %c0_i32, %c0_i32_0 : i32, i32
  }
  func.func @transform_7(%arg0: i32) -> (i32, i32) {
    %c0_i32 = arith.constant 0 : i32
    %c0_i32_0 = arith.constant 0 : i32
    %c0_i32_1 = arith.constant 0 : i32
    return %c0_i32, %c0_i32_0 : i32, i32
  }
  func.func @transform_8(%arg0: i32) -> (i32, i32) {
    %c0_i32 = arith.constant 0 : i32
    %c0_i32_0 = arith.constant 0 : i32
    %c0_i32_1 = arith.constant 0 : i32
    return %c0_i32, %c0_i32_0 : i32, i32
  }
  func.func @transform_9(%arg0: i32) -> (i32, i32) {
    %c0_i32 = arith.constant 0 : i32
    %c0_i32_0 = arith.constant 0 : i32
    %c0_i32_1 = arith.constant 0 : i32
    return %c0_i32, %c0_i32_0 : i32, i32
  }
  func.func @transform_10(%arg0: i32) -> (i32, i32) {
    %c0_i32 = arith.constant 0 : i32
    %c0_i32_0 = arith.constant 0 : i32
    %c0_i32_1 = arith.constant 0 : i32
    return %c0_i32, %c0_i32_0 : i32, i32
  }
  func.func @transform_11(%arg0: i32) -> (i32, i32) {
    %c0_i32 = arith.constant 0 : i32
    %c0_i32_0 = arith.constant 0 : i32
    return %arg0, %c0_i32 : i32, i32
  }
}

</mosaic_0001>

<llo_original>
// kernel: tpu_custom_call.1
$region0: #{tpu_custom_call.1}
  #allocation0 [shape = 'u32[]', space=smem, size = 0x4, offset = 0x4, fixed_abs, tag = 'smem constant byte address 0x4 - core index']
  #allocation1 [shape = 'u32[144,128]{1,0:T(1,128)}', space=vmem, size = 0x12000, scoped, tag = 'internal scratch']
  #allocation2 [shape = 'f32[1,1]{1,0:T(1,128)S(1)}', space=vmem, size = 0x200, scoped, tag = 'scoped memory for tpu_custom_call.1']
  %s0 = inlined_call_operand.vmem [shape: f32[256,3], index: 0, kind: input, shape index: {}]
  %s1 = inlined_call_operand.vmem [shape: f32[3,400], index: 1, kind: input, shape index: {}]
  %s2 = inlined_call_operand.vmem [shape: f32[1,400], index: 2, kind: input, shape index: {}]
  %s3 = inlined_call_operand.vmem [shape: f32[1,400], index: 3, kind: input, shape index: {}]
  %s4 = inlined_call_operand.vmem [shape: f32[1,400], index: 4, kind: input, shape index: {}]
  %s5 = inlined_call_operand.hbm [shape: bf16[400,300], index: 5, kind: input, shape index: {}]
  %s6 = inlined_call_operand.vmem [shape: f32[1,300], index: 6, kind: input, shape index: {}]
  %s7 = inlined_call_operand.vmem [shape: f32[1,300], index: 7, kind: input, shape index: {}]
  %s8 = inlined_call_operand.vmem [shape: f32[1,300], index: 8, kind: input, shape index: {}]
  %s9 = inlined_call_operand.vmem [shape: bf16[300,1], index: 9, kind: input, shape index: {}]
  %s10 = inlined_call_operand.<no memory space> [shape: f32[1,1], index: 10, kind: input, shape index: {}]
  %s11 = inlined_call_operand.vmem [shape: f32[256,1], index: 11, kind: output, shape index: {}]
  %s12 = sld [smem:[#allocation0]]
  $region81: #{tpu_custom_call.1} parent=0
    _
  %s14 = ssub.s32 1, %s12
  %s15 = scalar_select 0, %s14, %s12
  %v16 = vstv %s10
  %17 = vst [vmem:[#allocation2] sm:$0x1] %v16
  $region1: #{tpu_custom_call.1} parent=0
    #allocation3 [shape = 'u8[307200]{0}', space=vmem, size = 0x4b000, scoped, tag = 'input window, operand 5, single buffered']
    #allocation4 [shape = 's32[2]{0}', space=sflag, size = 0x8, scoped, tag = 'scoped memory for tpu_custom_call.1']
    %18 = vsyncpa [#allocation4], 0
    loop: start=0, step=1, limit=4
    $region2: #{tpu_custom_call.1} parent=1 // loop_pre_header
      _
    $region3: #{tpu_custom_call.1} parent=1 // loop_header
      %s20 = sphi 0, %s24
      %p21 = scmp.ge.s32.totalorder %s20, 4
      %s30 = sphi 0, %s32
      %s33 = sphi 0, %s30
      %s34 = sphi 0, %s33
      %s50 = sphi 0, %s34
      %s54 = sphi 0, %s54
      %s56 = sphi 0, %s54
      %s57 = sphi 0, %s56
      %s71 = sphi 0, %s57
      %s75 = sphi 0, %s75
      %s77 = sphi 0, %s75
      %s78 = sphi 0, %s77
      %s92 = sphi 0, %s78
      %s96 = sphi 0, %s96
      %s98 = sphi 0, %s96
      %s99 = sphi 0, %s98
      %s113 = sphi 0, %s99
      %s117 = sphi 0, %s117
      %s119 = sphi 0, %s117
      %s120 = sphi 0, %s119
      %s134 = sphi 0, %s120
      %s138 = sphi 0, %s138
      %s140 = sphi 0, %s138
      %s141 = sphi 0, %s140
      %s155 = sphi 0, %s141
      %s159 = sphi 0, %s159
      %s161 = sphi 0, %s159
      %s162 = sphi 0, %s161
      %s176 = sphi 0, %s162
      %s180 = sphi 0, %s180
      %s182 = sphi 0, %s180
      %s183 = sphi 0, %s182
      %s197 = sphi 0, %s183
      %s201 = sphi 0, %s201
      %s203 = sphi 0, %s201
      %s204 = sphi 0, %s203
      %s218 = sphi 0, %s204
      %s222 = sphi 0, %s222
      %s224 = sphi 0, %s222
      %s225 = sphi 0, %s224
      %s239 = sphi 0, %s225
      %s243 = sphi 0, %s243
      %s245 = sphi 0, %s243
      %s246 = sphi 0, %s245
      %s260 = sphi 0, %s246
      %s266 = sphi 0, %s268
      %s269 = sphi 0, %s266
      %s270 = sphi 0, %s269
      %s286 = sphi 0, %s270
    $region4: #{tpu_custom_call.1} parent=1 // loop_header_branch
      %23 = sbr.rel (%p21) target = $region8
    $region5: #{tpu_custom_call.1} parent=1 // loop_body
      %s25 = ssub.s32 %s20, 1
      %s26 = ssub.s32 %s20, 2
      %s27 = sadd.s32 %s20, 1
      %s28 = ssub.s32 %s20, %s27
      %p29 = scmp.eq.s32.totalorder %s28, 0
      %s31 = sadd.s32 %s30, 1
      %s32 = scalar_select %p29, %s30, %s31
      %p35 = pneg %p29
      %p36 = scmp.eq.s32.totalorder %s20, 1
      %p37 = por %p35, %p36
      %p38 = scmp.ne.s32.totalorder %s30, %s33
      %p39 = scmp.eq.s32.totalorder %s20, 0
      %p40 = por %p38, %p39
      %p41 = scmp.ne.s32.totalorder %s30, %s33
      %p42 = scmp.eq.s32.totalorder %s25, 1
      %p43 = por %p41, %p42
      %p44 = scmp.ne.s32.totalorder %s33, %s34
      %p45 = scmp.eq.s32.totalorder %s25, 0
      %p46 = por %p44, %p45
      %p47 = scmp.ne.s32.totalorder %s33, %s34
      %p48 = scmp.eq.s32.totalorder %s26, 1
      %p49 = por %p47, %p48
      %p51 = scmp.ne.s32.totalorder %s34, %s50
      %p52 = scmp.eq.s32.totalorder %s26, 0
      %p53 = por %p51, %p52
      %s55 = sadd.s32 %s54, 1
      %p58 = scmp.eq.s32.totalorder %s20, 1
      %p59 = scmp.ne.s32.totalorder %s54, %s56
      %p60 = scmp.eq.s32.totalorder %s20, 0
      %p61 = por %p59, %p60
      %p62 = scmp.ne.s32.totalorder %s54, %s56
      %p63 = scmp.eq.s32.totalorder %s25, 1
      %p64 = por %p62, %p63
      %p65 = scmp.ne.s32.totalorder %s56, %s57
      %p66 = scmp.eq.s32.totalorder %s25, 0
      %p67 = por %p65, %p66
      %p68 = scmp.ne.s32.totalorder %s56, %s57
      %p69 = scmp.eq.s32.totalorder %s26, 1
      %p70 = por %p68, %p69
      %p72 = scmp.ne.s32.totalorder %s57, %s71
      %p73 = scmp.eq.s32.totalorder %s26, 0
      %p74 = por %p72, %p73
      %s76 = sadd.s32 %s75, 1
      %p79 = scmp.eq.s32.totalorder %s20, 1
      %p80 = scmp.ne.s32.totalorder %s75, %s77
      %p81 = scmp.eq.s32.totalorder %s20, 0
      %p82 = por %p80, %p81
      %p83 = scmp.ne.s32.totalorder %s75, %s77
      %p84 = scmp.eq.s32.totalorder %s25, 1
      %p85 = por %p83, %p84
      %p86 = scmp.ne.s32.totalorder %s77, %s78
      %p87 = scmp.eq.s32.totalorder %s25, 0
      %p88 = por %p86, %p87
      %p89 = scmp.ne.s32.totalorder %s77, %s78
      %p90 = scmp.eq.s32.totalorder %s26, 1
      %p91 = por %p89, %p90
      %p93 = scmp.ne.s32.totalorder %s78, %s92
      %p94 = scmp.eq.s32.totalorder %s26, 0
      %p95 = por %p93, %p94
      %s97 = sadd.s32 %s96, 1
      %p100 = scmp.eq.s32.totalorder %s20, 1
      %p101 = scmp.ne.s32.totalorder %s96, %s98
      %p102 = scmp.eq.s32.totalorder %s20, 0
      %p103 = por %p101, %p102
      %p104 = scmp.ne.s32.totalorder %s96, %s98
      %p105 = scmp.eq.s32.totalorder %s25, 1
      %p106 = por %p104, %p105
      %p107 = scmp.ne.s32.totalorder %s98, %s99
      %p108 = scmp.eq.s32.totalorder %s25, 0
      %p109 = por %p107, %p108
      %p110 = scmp.ne.s32.totalorder %s98, %s99
      %p111 = scmp.eq.s32.totalorder %s26, 1
      %p112 = por %p110, %p111
      %p114 = scmp.ne.s32.totalorder %s99, %s113
      %p115 = scmp.eq.s32.totalorder %s26, 0
      %p116 = por %p114, %p115
      %s118 = sadd.s32 %s117, 1
      %p121 = scmp.eq.s32.totalorder %s20, 1
      %p122 = scmp.ne.s32.totalorder %s117, %s119
      %p123 = scmp.eq.s32.totalorder %s20, 0
      %p124 = por %p122, %p123
      %p125 = scmp.ne.s32.totalorder %s117, %s119
      %p126 = scmp.eq.s32.totalorder %s25, 1
      %p127 = por %p125, %p126
      %p128 = scmp.ne.s32.totalorder %s119, %s120
      %p129 = scmp.eq.s32.totalorder %s25, 0
      %p130 = por %p128, %p129
      %p131 = scmp.ne.s32.totalorder %s119, %s120
      %p132 = scmp.eq.s32.totalorder %s26, 1
      %p133 = por %p131, %p132
      %p135 = scmp.ne.s32.totalorder %s120, %s134
      %p136 = scmp.eq.s32.totalorder %s26, 0
      %p137 = por %p135, %p136
      %s139 = sadd.s32 %s138, 1
      %p142 = scmp.eq.s32.totalorder %s20, 1
      %p143 = scmp.ne.s32.totalorder %s138, %s140
      %p144 = scmp.eq.s32.totalorder %s20, 0
      %p145 = por %p143, %p144
      %p146 = scmp.ne.s32.totalorder %s138, %s140
      %p147 = scmp.eq.s32.totalorder %s25, 1
      %p148 = por %p146, %p147
      %p149 = scmp.ne.s32.totalorder %s140, %s141
      %p150 = scmp.eq.s32.totalorder %s25, 0
      %p151 = por %p149, %p150
      %p152 = scmp.ne.s32.totalorder %s140, %s141
      %p153 = scmp.eq.s32.totalorder %s26, 1
      %p154 = por %p152, %p153
      %p156 = scmp.ne.s32.totalorder %s141, %s155
      %p157 = scmp.eq.s32.totalorder %s26, 0
      %p158 = por %p156, %p157
      %s160 = sadd.s32 %s159, 1
      %p163 = scmp.eq.s32.totalorder %s20, 1
      %p164 = scmp.ne.s32.totalorder %s159, %s161
      %p165 = scmp.eq.s32.totalorder %s20, 0
      %p166 = por %p164, %p165
      %p167 = scmp.ne.s32.totalorder %s159, %s161
      %p168 = scmp.eq.s32.totalorder %s25, 1
      %p169 = por %p167, %p168
      %p170 = scmp.ne.s32.totalorder %s161, %s162
      %p171 = scmp.eq.s32.totalorder %s25, 0
      %p172 = por %p170, %p171
      %p173 = scmp.ne.s32.totalorder %s161, %s162
      %p174 = scmp.eq.s32.totalorder %s26, 1
      %p175 = por %p173, %p174
      %p177 = scmp.ne.s32.totalorder %s162, %s176
      %p178 = scmp.eq.s32.totalorder %s26, 0
      %p179 = por %p177, %p178
      %s181 = sadd.s32 %s180, 1
      %p184 = scmp.eq.s32.totalorder %s20, 1
      %p185 = scmp.ne.s32.totalorder %s180, %s182
      %p186 = scmp.eq.s32.totalorder %s20, 0
      %p187 = por %p185, %p186
      %p188 = scmp.ne.s32.totalorder %s180, %s182
      %p189 = scmp.eq.s32.totalorder %s25, 1
      %p190 = por %p188, %p189
      %p191 = scmp.ne.s32.totalorder %s182, %s183
      %p192 = scmp.eq.s32.totalorder %s25, 0
      %p193 = por %p191, %p192
      %p194 = scmp.ne.s32.totalorder %s182, %s183
      %p195 = scmp.eq.s32.totalorder %s26, 1
      %p196 = por %p194, %p195
      %p198 = scmp.ne.s32.totalorder %s183, %s197
      %p199 = scmp.eq.s32.totalorder %s26, 0
      %p200 = por %p198, %p199
      %s202 = sadd.s32 %s201, 1
      %p205 = scmp.eq.s32.totalorder %s20, 1
      %p206 = scmp.ne.s32.totalorder %s201, %s203
      %p207 = scmp.eq.s32.totalorder %s20, 0
      %p208 = por %p206, %p207
      %p209 = scmp.ne.s32.totalorder %s201, %s203
      %p210 = scmp.eq.s32.totalorder %s25, 1
      %p211 = por %p209, %p210
      %p212 = scmp.ne.s32.totalorder %s203, %s204
      %p213 = scmp.eq.s32.totalorder %s25, 0
      %p214 = por %p212, %p213
      %p215 = scmp.ne.s32.totalorder %s203, %s204
      %p216 = scmp.eq.s32.totalorder %s26, 1
      %p217 = por %p215, %p216
      %p219 = scmp.ne.s32.totalorder %s204, %s218
      %p220 = scmp.eq.s32.totalorder %s26, 0
      %p221 = por %p219, %p220
      %s223 = sadd.s32 %s222, 1
      %p226 = scmp.eq.s32.totalorder %s20, 1
      %p227 = scmp.ne.s32.totalorder %s222, %s224
      %p228 = scmp.eq.s32.totalorder %s20, 0
      %p229 = por %p227, %p228
      %p230 = scmp.ne.s32.totalorder %s222, %s224
      %p231 = scmp.eq.s32.totalorder %s25, 1
      %p232 = por %p230, %p231
      %p233 = scmp.ne.s32.totalorder %s224, %s225
      %p234 = scmp.eq.s32.totalorder %s25, 0
      %p235 = por %p233, %p234
      %p236 = scmp.ne.s32.totalorder %s224, %s225
      %p237 = scmp.eq.s32.totalorder %s26, 1
      %p238 = por %p236, %p237
      %p240 = scmp.ne.s32.totalorder %s225, %s239
      %p241 = scmp.eq.s32.totalorder %s26, 0
      %p242 = por %p240, %p241
      %s244 = sadd.s32 %s243, 1
      %p247 = scmp.eq.s32.totalorder %s20, 1
      %p248 = scmp.ne.s32.totalorder %s243, %s245
      %p249 = scmp.eq.s32.totalorder %s20, 0
      %p250 = por %p248, %p249
      %p251 = scmp.ne.s32.totalorder %s243, %s245
      %p252 = scmp.eq.s32.totalorder %s25, 1
      %p253 = por %p251, %p252
      %p254 = scmp.ne.s32.totalorder %s245, %s246
      %p255 = scmp.eq.s32.totalorder %s25, 0
      %p256 = por %p254, %p255
      %p257 = scmp.ne.s32.totalorder %s245, %s246
      %p258 = scmp.eq.s32.totalorder %s26, 1
      %p259 = por %p257, %p258
      %p261 = scmp.ne.s32.totalorder %s246, %s260
      %p262 = scmp.eq.s32.totalorder %s26, 0
      %p263 = por %p261, %p262
      %s264 = ssub.s32 %s20, %s27
      %p265 = scmp.eq.s32.totalorder %s264, 0
      %s267 = sadd.s32 %s266, 1
      %s268 = scalar_select %p265, %s266, %s267
      %p271 = pneg %p265
      %p272 = scmp.eq.s32.totalorder %s20, 1
      %p273 = por %p271, %p272
      %p274 = scmp.ne.s32.totalorder %s266, %s269
      %p275 = scmp.eq.s32.totalorder %s20, 0
      %p276 = por %p274, %p275
      %p277 = scmp.ne.s32.totalorder %s266, %s269
      %p278 = scmp.eq.s32.totalorder %s25, 1
      %p279 = por %p277, %p278
      %p280 = scmp.ne.s32.totalorder %s269, %s270
      %p281 = scmp.eq.s32.totalorder %s25, 0
      %p282 = por %p280, %p281
      %p283 = scmp.ne.s32.totalorder %s269, %s270
      %p284 = scmp.eq.s32.totalorder %s26, 1
      %p285 = por %p283, %p284
      %p287 = scmp.ne.s32.totalorder %s270, %s286
      %p288 = scmp.eq.s32.totalorder %s26, 0
      %p289 = por %p287, %p288
      %p290 = scmp.le.s32.totalorder 1, %s20
      %p291 = scmp.lt.s32.totalorder %s20, 3
      %p292 = pnand %p290, %p291
      %p293 = pneg %p292
      // Predicated region
      $region9: #{tpu_custom_call.1} parent=5 // pred_check
        _
      $region10: #{tpu_custom_call.1} parent=5 // pred_check_branch
        %295 = sbr.rel (%p292) target = $region12
      $region11: #{tpu_custom_call.1} parent=5 // pred_region
        %s296 = ssub.s32 %s20, 1
        // Predicated region
        $region13: #{tpu_custom_call.1} parent=11 // pred_check
          %p297 = pneg %p67
        $region14: #{tpu_custom_call.1} parent=11 // pred_check_branch
          %299 = sbr.rel (%p297) target = $region16
        $region15: #{tpu_custom_call.1} parent=11 // pred_region
          _
        $region16: #{tpu_custom_call.1} parent=11 // pred_fallthru
          _
        // Predicated region
        $region17: #{tpu_custom_call.1} parent=11 // pred_check
          %p300 = pneg %p88
        $region18: #{tpu_custom_call.1} parent=11 // pred_check_branch
          %302 = sbr.rel (%p300) target = $region20
        $region19: #{tpu_custom_call.1} parent=11 // pred_region
          _
        $region20: #{tpu_custom_call.1} parent=11 // pred_fallthru
          _
        // Predicated region
        $region21: #{tpu_custom_call.1} parent=11 // pred_check
          %p303 = pneg %p109
        $region22: #{tpu_custom_call.1} parent=11 // pred_check_branch
          %305 = sbr.rel (%p303) target = $region24
        $region23: #{tpu_custom_call.1} parent=11 // pred_region
          _
        $region24: #{tpu_custom_call.1} parent=11 // pred_fallthru
          _
        // Predicated region
        $region25: #{tpu_custom_call.1} parent=11 // pred_check
          %p306 = pneg %p130
        $region26: #{tpu_custom_call.1} parent=11 // pred_check_branch
          %308 = sbr.rel (%p306) target = $region28
        $region27: #{tpu_custom_call.1} parent=11 // pred_region
          _
        $region28: #{tpu_custom_call.1} parent=11 // pred_fallthru
          _
        // Predicated region
        $region29: #{tpu_custom_call.1} parent=11 // pred_check
          %p309 = pneg %p151
        $region30: #{tpu_custom_call.1} parent=11 // pred_check_branch
          %311 = sbr.rel (%p309) target = $region32
        $region31: #{tpu_custom_call.1} parent=11 // pred_region
          %s313 = ssub.s32 9600, 9600
          %314 = vsyncadd [#allocation4], %s313
          %s315 = sshll.u32 [#allocation3], 4
          %s316 = int_to_ptr.vmem [resolvable:$true] %s315
          %321 = dma.hbm_to_vmem [thread:$0]  %s5, 9600, %s316, [#allocation4], 192, 192, 12
        $region32: #{tpu_custom_call.1} parent=11 // pred_fallthru
          _
        // Predicated region
        $region33: #{tpu_custom_call.1} parent=11 // pred_check
          %p322 = pneg %p172
        $region34: #{tpu_custom_call.1} parent=11 // pred_check_branch
          %324 = sbr.rel (%p322) target = $region36
        $region35: #{tpu_custom_call.1} parent=11 // pred_region
          _
        $region36: #{tpu_custom_call.1} parent=11 // pred_fallthru
          _
        // Predicated region
        $region37: #{tpu_custom_call.1} parent=11 // pred_check
          %p325 = pneg %p193
        $region38: #{tpu_custom_call.1} parent=11 // pred_check_branch
          %327 = sbr.rel (%p325) target = $region40
        $region39: #{tpu_custom_call.1} parent=11 // pred_region
          _
        $region40: #{tpu_custom_call.1} parent=11 // pred_fallthru
          _
        // Predicated region
        $region41: #{tpu_custom_call.1} parent=11 // pred_check
          %p328 = pneg %p214
        $region42: #{tpu_custom_call.1} parent=11 // pred_check_branch
          %330 = sbr.rel (%p328) target = $region44
        $region43: #{tpu_custom_call.1} parent=11 // pred_region
          _
        $region44: #{tpu_custom_call.1} parent=11 // pred_fallthru
          _
        // Predicated region
        $region45: #{tpu_custom_call.1} parent=11 // pred_check
          %p331 = pneg %p235
        $region46: #{tpu_custom_call.1} parent=11 // pred_check_branch
          %333 = sbr.rel (%p331) target = $region48
        $region47: #{tpu_custom_call.1} parent=11 // pred_region
          _
        $region48: #{tpu_custom_call.1} parent=11 // pred_fallthru
          _
        // Predicated region
        $region49: #{tpu_custom_call.1} parent=11 // pred_check
          %p334 = pneg %p256
        $region50: #{tpu_custom_call.1} parent=11 // pred_check_branch
          %336 = sbr.rel (%p334) target = $region52
        $region51: #{tpu_custom_call.1} parent=11 // pred_region
          _
        $region52: #{tpu_custom_call.1} parent=11 // pred_fallthru
          _
      $region12: #{tpu_custom_call.1} parent=5 // pred_fallthru
        _
      %p337 = scmp.lt.s32.totalorder %s20, 2
      // Predicated region
      $region53: #{tpu_custom_call.1} parent=5 // pred_check
        %p338 = pneg %p337
      $region54: #{tpu_custom_call.1} parent=5 // pred_check_branch
        %340 = sbr.rel (%p338) target = $region56
      $region55: #{tpu_custom_call.1} parent=5 // pred_region
        // Predicated region
        $region57: #{tpu_custom_call.1} parent=55 // pred_check
          %p341 = pneg %p40
        $region58: #{tpu_custom_call.1} parent=55 // pred_check_branch
          %343 = sbr.rel (%p341) target = $region60
        $region59: #{tpu_custom_call.1} parent=55 // pred_region
          %s344 = smul.u32 16, %s20
          %p345 = scmp.lt.s32.totalorder %s344, 31
          %s346 = scalar_select %p345, %s344, 31
          %s347 = smul.addr %s346, 8
          %s348 = scalar_lea.vmem %s0, %s347
          %s349 = smul.u32 16, %s20
        $region60: #{tpu_custom_call.1} parent=55 // pred_fallthru
          _
      $region56: #{tpu_custom_call.1} parent=5 // pred_fallthru
        _
      %p350 = scmp.le.s32.totalorder 1, %s20
      %p351 = scmp.lt.s32.totalorder %s20, 3
      %p352 = pnand %p350, %p351
      %p353 = pneg %p352
      // Predicated region
      $region61: #{tpu_custom_call.1} parent=5 // pred_check
        _
      $region62: #{tpu_custom_call.1} parent=5 // pred_check_branch
        %355 = sbr.rel (%p352) target = $region64
      $region63: #{tpu_custom_call.1} parent=5 // pred_region
        %s356 = ssub.s32 %s20, 1
        // Predicated region
        $region65: #{tpu_custom_call.1} parent=63 // pred_check
          %p357 = pneg %p151
        $region66: #{tpu_custom_call.1} parent=63 // pred_check_branch
          %359 = sbr.rel (%p357) target = $region68
        $region67: #{tpu_custom_call.1} parent=63 // pred_region
          %360 = dma.done [#allocation4], 9600
        $region68: #{tpu_custom_call.1} parent=63 // pred_fallthru
          _
        %s361 = smul.u32 16, %s25
        %p362 = scmp.lt.s32.totalorder %s361, 31
        %s363 = scalar_select %p362, %s361, 31
        %s364 = smul.addr %s363, 8
        %s365 = scalar_lea.vmem %s0, %s364
        %p366 = pneg %p46
        %p367 = pneg %p43
        %p368 = pneg %p67
        %p369 = pneg %p64
        %p370 = pneg %p88
        %p371 = pneg %p85
        %p372 = pneg %p109
        %p373 = pneg %p106
        %p374 = pneg %p130
        %p375 = pneg %p127
        %p376 = pneg %p151
        %p377 = pneg %p148
        %p378 = pneg %p172
        %p379 = pneg %p169
        %p380 = pneg %p193
        %p381 = pneg %p190
        %p382 = pneg %p214
        %p383 = pneg %p211
        %p384 = pneg %p235
        %p385 = pneg %p232
        %p386 = pneg %p256
        %p387 = pneg %p253
        %p388 = pneg %p282
        %p389 = pneg %p279
        %s390 = smul.u32 16, %s25
        %p391 = scmp.lt.s32.totalorder %s390, 31
        %s392 = scalar_select %p391, %s390, 31
        %s393 = smul.addr %s392, 8
        %s394 = scalar_lea.vmem %s11, %s393
        %s395 = smul.u32 16, %s25
        %p396 = scmp.lt.s32.totalorder %s395, 31
        %s397 = scalar_select %p396, %s395, 31
        %s398 = smul.addr %s397, 8
        %s399 = scalar_lea.vmem %s0, %s398
        %s400 = smul.u32 16, %s25
        %s401 = smul.u32 16, %s25
        %p402 = scmp.lt.s32.totalorder %s401, 31
        %s403 = scalar_select %p402, %s401, 31
        %s404 = smul.addr %s403, 8
        %s405 = scalar_lea.vmem %s11, %s404
        %s406 = smul.u32 16, %s25
        %v408 = vld [vmem:[%s399] sm:$0xff]
        %v409 = vld [vmem:[%s399 + $0x8] sm:$0xff]
        %v410 = vld [vmem:[%s399 + $0x10] sm:$0xff]
        %v411 = vld [vmem:[%s399 + $0x18] sm:$0xff]
        %v412 = vld [vmem:[%s399 + $0x20] sm:$0xff]
        %v413 = vld [vmem:[%s399 + $0x28] sm:$0xff]
        %v414 = vld [vmem:[%s399 + $0x30] sm:$0xff]
        %v415 = vld [vmem:[%s399 + $0x38] sm:$0xff]
        %v416 = vld [vmem:[%s399 + $0x40] sm:$0xff]
        %v417 = vld [vmem:[%s399 + $0x48] sm:$0xff]
        %v418 = vld [vmem:[%s399 + $0x50] sm:$0xff]
        %v419 = vld [vmem:[%s399 + $0x58] sm:$0xff]
        %v420 = vld [vmem:[%s399 + $0x60] sm:$0xff]
        %v421 = vld [vmem:[%s399 + $0x68] sm:$0xff]
        %v422 = vld [vmem:[%s399 + $0x70] sm:$0xff]
        %v423 = vld [vmem:[%s399 + $0x78] sm:$0xff]
        %v424 = vld [vmem:[%s1] sm:$0x77]
        %v425 = vld [vmem:[%s1 + $0x8] sm:$0x77]
        %427 = vset.pattern.permute.xlu0 0
        %428 = vperm.xlu0 %427, %v408
        %v429 = vpop.permute.xlu0 %428
        %432 = vset.pattern.permute.xlu0 0
        %433 = vperm.xlu0 %432, %v409
        %v434 = vpop.permute.xlu0 %433
        %437 = vset.pattern.permute.xlu0 0
        %438 = vperm.xlu0 %437, %v410
        %v439 = vpop.permute.xlu0 %438
        %442 = vset.pattern.permute.xlu0 0
        %443 = vperm.xlu0 %442, %v411
        %v444 = vpop.permute.xlu0 %443
        %447 = vset.pattern.permute.xlu0 0
        %448 = vperm.xlu0 %447, %v412
        %v449 = vpop.permute.xlu0 %448
        %452 = vset.pattern.permute.xlu0 0
        %453 = vperm.xlu0 %452, %v413
        %v454 = vpop.permute.xlu0 %453
        %457 = vset.pattern.permute.xlu0 0
        %458 = vperm.xlu0 %457, %v414
        %v459 = vpop.permute.xlu0 %458
        %462 = vset.pattern.permute.xlu0 0
        %463 = vperm.xlu0 %462, %v415
        %v464 = vpop.permute.xlu0 %463
        %467 = vset.pattern.permute.xlu0 0
        %468 = vperm.xlu0 %467, %v416
        %v469 = vpop.permute.xlu0 %468
        %472 = vset.pattern.permute.xlu0 0
        %473 = vperm.xlu0 %472, %v417
        %v474 = vpop.permute.xlu0 %473
        %477 = vset.pattern.permute.xlu0 0
        %478 = vperm.xlu0 %477, %v418
        %v479 = vpop.permute.xlu0 %478
        %482 = vset.pattern.permute.xlu0 0
        %483 = vperm.xlu0 %482, %v419
        %v484 = vpop.permute.xlu0 %483
        %487 = vset.pattern.permute.xlu0 0
        %488 = vperm.xlu0 %487, %v420
        %v489 = vpop.permute.xlu0 %488
        %492 = vset.pattern.permute.xlu0 0
        %493 = vperm.xlu0 %492, %v421
        %v494 = vpop.permute.xlu0 %493
        %497 = vset.pattern.permute.xlu0 0
        %498 = vperm.xlu0 %497, %v422
        %v499 = vpop.permute.xlu0 %498
        %502 = vset.pattern.permute.xlu0 0
        %503 = vperm.xlu0 %502, %v423
        %v504 = vpop.permute.xlu0 %503
        %v508 = vlaneseq
        %v509 = vshrl.u32 %v508, 7
        %v510 = vsub.s32 0, %v509
        %v511 = vrot.slane %v424, %v510
        %v512 = vlaneseq
        %v513 = vshrl.u32 %v512, 7
        %v514 = vsub.s32 4, %v513
        %v515 = vrot.slane %v424, %v514
        %v516 = vlaneseq
        %v517 = vshrl.u32 %v516, 7
        %v518 = vsub.s32 0, %v517
        %v519 = vrot.slane %v425, %v518
        %v520 = vlaneseq
        %v521 = vshrl.u32 %v520, 7
        %v522 = vsub.s32 4, %v521
        %v523 = vrot.slane %v425, %v522
        %v528 = vlaneseq
        %v529 = vshrl.u32 %v528, 7
        %v530 = vsub.s32 0, %v529
        %v531 = vrot.slane %v511, %v530
        %v532 = vlaneseq
        %v533 = vshrl.u32 %v532, 7
        %v534 = vsub.s32 0, %v533
        %v535 = vrot.slane %v515, %v534
        %v536 = vlaneseq
        %v537 = vshrl.u32 %v536, 7
        %v538 = vsub.s32 0, %v537
        %v539 = vrot.slane %v519, %v538
        %v540 = vlaneseq
        %v541 = vshrl.u32 %v540, 7
        %v542 = vsub.s32 0, %v541
        %v543 = vrot.slane %v523, %v542
        %v544 = vmul.f32 %v429, %v531
        %v545 = vmul.f32 %v429, %v535
        %v546 = vmul.f32 %v429, %v539
        %v547 = vmul.f32 %v429, %v543
        %v548 = vmul.f32 %v434, %v531
        %v549 = vmul.f32 %v434, %v535
        %v550 = vmul.f32 %v434, %v539
        %v551 = vmul.f32 %v434, %v543
        %v552 = vmul.f32 %v439, %v531
        %v553 = vmul.f32 %v439, %v535
        %v554 = vmul.f32 %v439, %v539
        %v555 = vmul.f32 %v439, %v543
        %v556 = vmul.f32 %v444, %v531
        %v557 = vmul.f32 %v444, %v535
        %v558 = vmul.f32 %v444, %v539
        %v559 = vmul.f32 %v444, %v543
        %v560 = vmul.f32 %v449, %v531
        %v561 = vmul.f32 %v449, %v535
        %v562 = vmul.f32 %v449, %v539
        %v563 = vmul.f32 %v449, %v543
        %v564 = vmul.f32 %v454, %v531
        %v565 = vmul.f32 %v454, %v535
        %v566 = vmul.f32 %v454, %v539
        %v567 = vmul.f32 %v454, %v543
        %v568 = vmul.f32 %v459, %v531
        %v569 = vmul.f32 %v459, %v535
        %v570 = vmul.f32 %v459, %v539
        %v571 = vmul.f32 %v459, %v543
        %v572 = vmul.f32 %v464, %v531
        %v573 = vmul.f32 %v464, %v535
        %v574 = vmul.f32 %v464, %v539
        %v575 = vmul.f32 %v464, %v543
        %v576 = vmul.f32 %v469, %v531
        %v577 = vmul.f32 %v469, %v535
        %v578 = vmul.f32 %v469, %v539
        %v579 = vmul.f32 %v469, %v543
        %v580 = vmul.f32 %v474, %v531
        %v581 = vmul.f32 %v474, %v535
        %v582 = vmul.f32 %v474, %v539
        %v583 = vmul.f32 %v474, %v543
        %v584 = vmul.f32 %v479, %v531
        %v585 = vmul.f32 %v479, %v535
        %v586 = vmul.f32 %v479, %v539
        %v587 = vmul.f32 %v479, %v543
        %v588 = vmul.f32 %v484, %v531
        %v589 = vmul.f32 %v484, %v535
        %v590 = vmul.f32 %v484, %v539
        %v591 = vmul.f32 %v484, %v543
        %v592 = vmul.f32 %v489, %v531
        %v593 = vmul.f32 %v489, %v535
        %v594 = vmul.f32 %v489, %v539
        %v595 = vmul.f32 %v489, %v543
        %v596 = vmul.f32 %v494, %v531
        %v597 = vmul.f32 %v494, %v535
        %v598 = vmul.f32 %v494, %v539
        %v599 = vmul.f32 %v494, %v543
        %v600 = vmul.f32 %v499, %v531
        %v601 = vmul.f32 %v499, %v535
        %v602 = vmul.f32 %v499, %v539
        %v603 = vmul.f32 %v499, %v543
        %v604 = vmul.f32 %v504, %v531
        %v605 = vmul.f32 %v504, %v535
        %v606 = vmul.f32 %v504, %v539
        %v607 = vmul.f32 %v504, %v543
        %608 = vset.pattern.permute.xlu0 1
        %609 = vperm.xlu0 %608, %v408
        %v610 = vpop.permute.xlu0 %609
        %612 = vset.pattern.permute.xlu0 1
        %613 = vperm.xlu0 %612, %v409
        %v614 = vpop.permute.xlu0 %613
        %616 = vset.pattern.permute.xlu0 1
        %617 = vperm.xlu0 %616, %v410
        %v618 = vpop.permute.xlu0 %617
        %620 = vset.pattern.permute.xlu0 1
        %621 = vperm.xlu0 %620, %v411
        %v622 = vpop.permute.xlu0 %621
        %624 = vset.pattern.permute.xlu0 1
        %625 = vperm.xlu0 %624, %v412
        %v626 = vpop.permute.xlu0 %625
        %628 = vset.pattern.permute.xlu0 1
        %629 = vperm.xlu0 %628, %v413
        %v630 = vpop.permute.xlu0 %629
        %632 = vset.pattern.permute.xlu0 1
        %633 = vperm.xlu0 %632, %v414
        %v634 = vpop.permute.xlu0 %633
        %636 = vset.pattern.permute.xlu0 1
        %637 = vperm.xlu0 %636, %v415
        %v638 = vpop.permute.xlu0 %637
        %640 = vset.pattern.permute.xlu0 1
        %641 = vperm.xlu0 %640, %v416
        %v642 = vpop.permute.xlu0 %641
        %644 = vset.pattern.permute.xlu0 1
        %645 = vperm.xlu0 %644, %v417
        %v646 = vpop.permute.xlu0 %645
        %648 = vset.pattern.permute.xlu0 1
        %649 = vperm.xlu0 %648, %v418
        %v650 = vpop.permute.xlu0 %649
        %652 = vset.pattern.permute.xlu0 1
        %653 = vperm.xlu0 %652, %v419
        %v654 = vpop.permute.xlu0 %653
        %656 = vset.pattern.permute.xlu0 1
        %657 = vperm.xlu0 %656, %v420
        %v658 = vpop.permute.xlu0 %657
        %660 = vset.pattern.permute.xlu0 1
        %661 = vperm.xlu0 %660, %v421
        %v662 = vpop.permute.xlu0 %661
        %664 = vset.pattern.permute.xlu0 1
        %665 = vperm.xlu0 %664, %v422
        %v666 = vpop.permute.xlu0 %665
        %668 = vset.pattern.permute.xlu0 1
        %669 = vperm.xlu0 %668, %v423
        %v670 = vpop.permute.xlu0 %669
        %v672 = vlaneseq
        %v673 = vshrl.u32 %v672, 7
        %v674 = vsub.s32 1, %v673
        %v675 = vrot.slane %v424, %v674
        %v676 = vlaneseq
        %v677 = vshrl.u32 %v676, 7
        %v678 = vsub.s32 5, %v677
        %v679 = vrot.slane %v424, %v678
        %v680 = vlaneseq
        %v681 = vshrl.u32 %v680, 7
        %v682 = vsub.s32 1, %v681
        %v683 = vrot.slane %v425, %v682
        %v684 = vlaneseq
        %v685 = vshrl.u32 %v684, 7
        %v686 = vsub.s32 5, %v685
        %v687 = vrot.slane %v425, %v686
        %v692 = vlaneseq
        %v693 = vshrl.u32 %v692, 7
        %v694 = vsub.s32 1, %v693
        %v695 = vrot.slane %v675, %v694
        %v696 = vlaneseq
        %v697 = vshrl.u32 %v696, 7
        %v698 = vsub.s32 1, %v697
        %v699 = vrot.slane %v679, %v698
        %v700 = vlaneseq
        %v701 = vshrl.u32 %v700, 7
        %v702 = vsub.s32 1, %v701
        %v703 = vrot.slane %v683, %v702
        %v704 = vlaneseq
        %v705 = vshrl.u32 %v704, 7
        %v706 = vsub.s32 1, %v705
        %v707 = vrot.slane %v687, %v706
        %v708 = vmul.f32 %v610, %v695
        %v709 = vmul.f32 %v610, %v699
        %v710 = vmul.f32 %v610, %v703
        %v711 = vmul.f32 %v610, %v707
        %v712 = vmul.f32 %v614, %v695
        %v713 = vmul.f32 %v614, %v699
        %v714 = vmul.f32 %v614, %v703
        %v715 = vmul.f32 %v614, %v707
        %v716 = vmul.f32 %v618, %v695
        %v717 = vmul.f32 %v618, %v699
        %v718 = vmul.f32 %v618, %v703
        %v719 = vmul.f32 %v618, %v707
        %v720 = vmul.f32 %v622, %v695
        %v721 = vmul.f32 %v622, %v699
        %v722 = vmul.f32 %v622, %v703
        %v723 = vmul.f32 %v622, %v707
        %v724 = vmul.f32 %v626, %v695
        %v725 = vmul.f32 %v626, %v699
        %v726 = vmul.f32 %v626, %v703
        %v727 = vmul.f32 %v626, %v707
        %v728 = vmul.f32 %v630, %v695
        %v729 = vmul.f32 %v630, %v699
        %v730 = vmul.f32 %v630, %v703
        %v731 = vmul.f32 %v630, %v707
        %v732 = vmul.f32 %v634, %v695
        %v733 = vmul.f32 %v634, %v699
        %v734 = vmul.f32 %v634, %v703
        %v735 = vmul.f32 %v634, %v707
        %v736 = vmul.f32 %v638, %v695
        %v737 = vmul.f32 %v638, %v699
        %v738 = vmul.f32 %v638, %v703
        %v739 = vmul.f32 %v638, %v707
        %v740 = vmul.f32 %v642, %v695
        %v741 = vmul.f32 %v642, %v699
        %v742 = vmul.f32 %v642, %v703
        %v743 = vmul.f32 %v642, %v707
        %v744 = vmul.f32 %v646, %v695
        %v745 = vmul.f32 %v646, %v699
        %v746 = vmul.f32 %v646, %v703
        %v747 = vmul.f32 %v646, %v707
        %v748 = vmul.f32 %v650, %v695
        %v749 = vmul.f32 %v650, %v699
        %v750 = vmul.f32 %v650, %v703
        %v751 = vmul.f32 %v650, %v707
        %v752 = vmul.f32 %v654, %v695
        %v753 = vmul.f32 %v654, %v699
        %v754 = vmul.f32 %v654, %v703
        %v755 = vmul.f32 %v654, %v707
        %v756 = vmul.f32 %v658, %v695
        %v757 = vmul.f32 %v658, %v699
        %v758 = vmul.f32 %v658, %v703
        %v759 = vmul.f32 %v658, %v707
        %v760 = vmul.f32 %v662, %v695
        %v761 = vmul.f32 %v662, %v699
        %v762 = vmul.f32 %v662, %v703
        %v763 = vmul.f32 %v662, %v707
        %v764 = vmul.f32 %v666, %v695
        %v765 = vmul.f32 %v666, %v699
        %v766 = vmul.f32 %v666, %v703
        %v767 = vmul.f32 %v666, %v707
        %v768 = vmul.f32 %v670, %v695
        %v769 = vmul.f32 %v670, %v699
        %v770 = vmul.f32 %v670, %v703
        %v771 = vmul.f32 %v670, %v707
        %v772 = vadd.f32 %v544, %v708
        %v773 = vadd.f32 %v545, %v709
        %v774 = vadd.f32 %v546, %v710
        %v775 = vadd.f32 %v547, %v711
        %v776 = vadd.f32 %v548, %v712
        %v777 = vadd.f32 %v549, %v713
        %v778 = vadd.f32 %v550, %v714
        %v779 = vadd.f32 %v551, %v715
        %v780 = vadd.f32 %v552, %v716
        %v781 = vadd.f32 %v553, %v717
        %v782 = vadd.f32 %v554, %v718
        %v783 = vadd.f32 %v555, %v719
        %v784 = vadd.f32 %v556, %v720
        %v785 = vadd.f32 %v557, %v721
        %v786 = vadd.f32 %v558, %v722
        %v787 = vadd.f32 %v559, %v723
        %v788 = vadd.f32 %v560, %v724
        %v789 = vadd.f32 %v561, %v725
        %v790 = vadd.f32 %v562, %v726
        %v791 = vadd.f32 %v563, %v727
        %v792 = vadd.f32 %v564, %v728
        %v793 = vadd.f32 %v565, %v729
        %v794 = vadd.f32 %v566, %v730
        %v795 = vadd.f32 %v567, %v731
        %v796 = vadd.f32 %v568, %v732
        %v797 = vadd.f32 %v569, %v733
        %v798 = vadd.f32 %v570, %v734
        %v799 = vadd.f32 %v571, %v735
        %v800 = vadd.f32 %v572, %v736
        %v801 = vadd.f32 %v573, %v737
        %v802 = vadd.f32 %v574, %v738
        %v803 = vadd.f32 %v575, %v739
        %v804 = vadd.f32 %v576, %v740
        %v805 = vadd.f32 %v577, %v741
        %v806 = vadd.f32 %v578, %v742
        %v807 = vadd.f32 %v579, %v743
        %v808 = vadd.f32 %v580, %v744
        %v809 = vadd.f32 %v581, %v745
        %v810 = vadd.f32 %v582, %v746
        %v811 = vadd.f32 %v583, %v747
        %v812 = vadd.f32 %v584, %v748
        %v813 = vadd.f32 %v585, %v749
        %v814 = vadd.f32 %v586, %v750
        %v815 = vadd.f32 %v587, %v751
        %v816 = vadd.f32 %v588, %v752
        %v817 = vadd.f32 %v589, %v753
        %v818 = vadd.f32 %v590, %v754
        %v819 = vadd.f32 %v591, %v755
        %v820 = vadd.f32 %v592, %v756
        %v821 = vadd.f32 %v593, %v757
        %v822 = vadd.f32 %v594, %v758
        %v823 = vadd.f32 %v595, %v759
        %v824 = vadd.f32 %v596, %v760
        %v825 = vadd.f32 %v597, %v761
        %v826 = vadd.f32 %v598, %v762
        %v827 = vadd.f32 %v599, %v763
        %v828 = vadd.f32 %v600, %v764
        %v829 = vadd.f32 %v601, %v765
        %v830 = vadd.f32 %v602, %v766
        %v831 = vadd.f32 %v603, %v767
        %v832 = vadd.f32 %v604, %v768
        %v833 = vadd.f32 %v605, %v769
        %v834 = vadd.f32 %v606, %v770
        %v835 = vadd.f32 %v607, %v771
        %836 = vset.pattern.permute.xlu0 2
        %837 = vperm.xlu0 %836, %v408
        %v838 = vpop.permute.xlu0 %837
        %840 = vset.pattern.permute.xlu0 2
        %841 = vperm.xlu0 %840, %v409
        %v842 = vpop.permute.xlu0 %841
        %844 = vset.pattern.permute.xlu0 2
        %845 = vperm.xlu0 %844, %v410
        %v846 = vpop.permute.xlu0 %845
        %848 = vset.pattern.permute.xlu0 2
        %849 = vperm.xlu0 %848, %v411
        %v850 = vpop.permute.xlu0 %849
        %852 = vset.pattern.permute.xlu0 2
        %853 = vperm.xlu0 %852, %v412
        %v854 = vpop.permute.xlu0 %853
        %856 = vset.pattern.permute.xlu0 2
        %857 = vperm.xlu0 %856, %v413
        %v858 = vpop.permute.xlu0 %857
        %860 = vset.pattern.permute.xlu0 2
        %861 = vperm.xlu0 %860, %v414
        %v862 = vpop.permute.xlu0 %861
        %864 = vset.pattern.permute.xlu0 2
        %865 = vperm.xlu0 %864, %v415
        %v866 = vpop.permute.xlu0 %865
        %868 = vset.pattern.permute.xlu0 2
        %869 = vperm.xlu0 %868, %v416
        %v870 = vpop.permute.xlu0 %869
        %872 = vset.pattern.permute.xlu0 2
        %873 = vperm.xlu0 %872, %v417
        %v874 = vpop.permute.xlu0 %873
        %876 = vset.pattern.permute.xlu0 2
        %877 = vperm.xlu0 %876, %v418
        %v878 = vpop.permute.xlu0 %877
        %880 = vset.pattern.permute.xlu0 2
        %881 = vperm.xlu0 %880, %v419
        %v882 = vpop.permute.xlu0 %881
        %884 = vset.pattern.permute.xlu0 2
        %885 = vperm.xlu0 %884, %v420
        %v886 = vpop.permute.xlu0 %885
        %888 = vset.pattern.permute.xlu0 2
        %889 = vperm.xlu0 %888, %v421
        %v890 = vpop.permute.xlu0 %889
        %892 = vset.pattern.permute.xlu0 2
        %893 = vperm.xlu0 %892, %v422
        %v894 = vpop.permute.xlu0 %893
        %896 = vset.pattern.permute.xlu0 2
        %897 = vperm.xlu0 %896, %v423
        %v898 = vpop.permute.xlu0 %897
        %v900 = vlaneseq
        %v901 = vshrl.u32 %v900, 7
        %v902 = vsub.s32 2, %v901
        %v903 = vrot.slane %v424, %v902
        %v904 = vlaneseq
        %v905 = vshrl.u32 %v904, 7
        %v906 = vsub.s32 6, %v905
        %v907 = vrot.slane %v424, %v906
        %v908 = vlaneseq
        %v909 = vshrl.u32 %v908, 7
        %v910 = vsub.s32 2, %v909
        %v911 = vrot.slane %v425, %v910
        %v912 = vlaneseq
        %v913 = vshrl.u32 %v912, 7
        %v914 = vsub.s32 6, %v913
        %v915 = vrot.slane %v425, %v914
        %v920 = vlaneseq
        %v921 = vshrl.u32 %v920, 7
        %v922 = vsub.s32 2, %v921
        %v923 = vrot.slane %v903, %v922
        %v924 = vlaneseq
        %v925 = vshrl.u32 %v924, 7
        %v926 = vsub.s32 2, %v925
        %v927 = vrot.slane %v907, %v926
        %v928 = vlaneseq
        %v929 = vshrl.u32 %v928, 7
        %v930 = vsub.s32 2, %v929
        %v931 = vrot.slane %v911, %v930
        %v932 = vlaneseq
        %v933 = vshrl.u32 %v932, 7
        %v934 = vsub.s32 2, %v933
        %v935 = vrot.slane %v915, %v934
        %v936 = vmul.f32 %v838, %v923
        %v937 = vmul.f32 %v838, %v927
        %v938 = vmul.f32 %v838, %v931
        %v939 = vmul.f32 %v838, %v935
        %v940 = vmul.f32 %v842, %v923
        %v941 = vmul.f32 %v842, %v927
        %v942 = vmul.f32 %v842, %v931
        %v943 = vmul.f32 %v842, %v935
        %v944 = vmul.f32 %v846, %v923
        %v945 = vmul.f32 %v846, %v927
        %v946 = vmul.f32 %v846, %v931
        %v947 = vmul.f32 %v846, %v935
        %v948 = vmul.f32 %v850, %v923
        %v949 = vmul.f32 %v850, %v927
        %v950 = vmul.f32 %v850, %v931
        %v951 = vmul.f32 %v850, %v935
        %v952 = vmul.f32 %v854, %v923
        %v953 = vmul.f32 %v854, %v927
        %v954 = vmul.f32 %v854, %v931
        %v955 = vmul.f32 %v854, %v935
        %v956 = vmul.f32 %v858, %v923
        %v957 = vmul.f32 %v858, %v927
        %v958 = vmul.f32 %v858, %v931
        %v959 = vmul.f32 %v858, %v935
        %v960 = vmul.f32 %v862, %v923
        %v961 = vmul.f32 %v862, %v927
        %v962 = vmul.f32 %v862, %v931
        %v963 = vmul.f32 %v862, %v935
        %v964 = vmul.f32 %v866, %v923
        %v965 = vmul.f32 %v866, %v927
        %v966 = vmul.f32 %v866, %v931
        %v967 = vmul.f32 %v866, %v935
        %v968 = vmul.f32 %v870, %v923
        %v969 = vmul.f32 %v870, %v927
        %v970 = vmul.f32 %v870, %v931
        %v971 = vmul.f32 %v870, %v935
        %v972 = vmul.f32 %v874, %v923
        %v973 = vmul.f32 %v874, %v927
        %v974 = vmul.f32 %v874, %v931
        %v975 = vmul.f32 %v874, %v935
        %v976 = vmul.f32 %v878, %v923
        %v977 = vmul.f32 %v878, %v927
        %v978 = vmul.f32 %v878, %v931
        %v979 = vmul.f32 %v878, %v935
        %v980 = vmul.f32 %v882, %v923
        %v981 = vmul.f32 %v882, %v927
        %v982 = vmul.f32 %v882, %v931
        %v983 = vmul.f32 %v882, %v935
        %v984 = vmul.f32 %v886, %v923
        %v985 = vmul.f32 %v886, %v927
        %v986 = vmul.f32 %v886, %v931
        %v987 = vmul.f32 %v886, %v935
        %v988 = vmul.f32 %v890, %v923
        %v989 = vmul.f32 %v890, %v927
        %v990 = vmul.f32 %v890, %v931
        %v991 = vmul.f32 %v890, %v935
        %v992 = vmul.f32 %v894, %v923
        %v993 = vmul.f32 %v894, %v927
        %v994 = vmul.f32 %v894, %v931
        %v995 = vmul.f32 %v894, %v935
        %v996 = vmul.f32 %v898, %v923
        %v997 = vmul.f32 %v898, %v927
        %v998 = vmul.f32 %v898, %v931
        %v999 = vmul.f32 %v898, %v935
        %v1000 = vadd.f32 %v772, %v936
        %v1001 = vadd.f32 %v773, %v937
        %v1002 = vadd.f32 %v774, %v938
        %v1003 = vadd.f32 %v775, %v939
        %v1004 = vadd.f32 %v776, %v940
        %v1005 = vadd.f32 %v777, %v941
        %v1006 = vadd.f32 %v778, %v942
        %v1007 = vadd.f32 %v779, %v943
        %v1008 = vadd.f32 %v780, %v944
        %v1009 = vadd.f32 %v781, %v945
        %v1010 = vadd.f32 %v782, %v946
        %v1011 = vadd.f32 %v783, %v947
        %v1012 = vadd.f32 %v784, %v948
        %v1013 = vadd.f32 %v785, %v949
        %v1014 = vadd.f32 %v786, %v950
        %v1015 = vadd.f32 %v787, %v951
        %v1016 = vadd.f32 %v788, %v952
        %v1017 = vadd.f32 %v789, %v953
        %v1018 = vadd.f32 %v790, %v954
        %v1019 = vadd.f32 %v791, %v955
        %v1020 = vadd.f32 %v792, %v956
        %v1021 = vadd.f32 %v793, %v957
        %v1022 = vadd.f32 %v794, %v958
        %v1023 = vadd.f32 %v795, %v959
        %v1024 = vadd.f32 %v796, %v960
        %v1025 = vadd.f32 %v797, %v961
        %v1026 = vadd.f32 %v798, %v962
        %v1027 = vadd.f32 %v799, %v963
        %v1028 = vadd.f32 %v800, %v964
        %v1029 = vadd.f32 %v801, %v965
        %v1030 = vadd.f32 %v802, %v966
        %v1031 = vadd.f32 %v803, %v967
        %v1032 = vadd.f32 %v804, %v968
        %v1033 = vadd.f32 %v805, %v969
        %v1034 = vadd.f32 %v806, %v970
        %v1035 = vadd.f32 %v807, %v971
        %v1036 = vadd.f32 %v808, %v972
        %v1037 = vadd.f32 %v809, %v973
        %v1038 = vadd.f32 %v810, %v974
        %v1039 = vadd.f32 %v811, %v975
        %v1040 = vadd.f32 %v812, %v976
        %v1041 = vadd.f32 %v813, %v977
        %v1042 = vadd.f32 %v814, %v978
        %v1043 = vadd.f32 %v815, %v979
        %v1044 = vadd.f32 %v816, %v980
        %v1045 = vadd.f32 %v817, %v981
        %v1046 = vadd.f32 %v818, %v982
        %v1047 = vadd.f32 %v819, %v983
        %v1048 = vadd.f32 %v820, %v984
        %v1049 = vadd.f32 %v821, %v985
        %v1050 = vadd.f32 %v822, %v986
        %v1051 = vadd.f32 %v823, %v987
        %v1052 = vadd.f32 %v824, %v988
        %v1053 = vadd.f32 %v825, %v989
        %v1054 = vadd.f32 %v826, %v990
        %v1055 = vadd.f32 %v827, %v991
        %v1056 = vadd.f32 %v828, %v992
        %v1057 = vadd.f32 %v829, %v993
        %v1058 = vadd.f32 %v830, %v994
        %v1059 = vadd.f32 %v831, %v995
        %v1060 = vadd.f32 %v832, %v996
        %v1061 = vadd.f32 %v833, %v997
        %v1062 = vadd.f32 %v834, %v998
        %v1063 = vadd.f32 %v835, %v999
        %v1064 = vld [vmem:[%s2] sm:$0xf]
        %v1066 = vlaneseq
        %v1067 = vshrl.u32 %v1066, 7
        %v1068 = vsub.s32 0, %v1067
        %v1069 = vrot.slane %v1064, %v1068
        %v1070 = vlaneseq
        %v1071 = vshrl.u32 %v1070, 7
        %v1072 = vsub.s32 1, %v1071
        %v1073 = vrot.slane %v1064, %v1072
        %v1074 = vlaneseq
        %v1075 = vshrl.u32 %v1074, 7
        %v1076 = vsub.s32 2, %v1075
        %v1077 = vrot.slane %v1064, %v1076
        %v1078 = vlaneseq
        %v1079 = vshrl.u32 %v1078, 7
        %v1080 = vsub.s32 3, %v1079
        %v1081 = vrot.slane %v1064, %v1080
        %v1086 = vadd.f32 %v1000, %v1069
        %v1087 = vadd.f32 %v1001, %v1073
        %v1088 = vadd.f32 %v1002, %v1077
        %v1089 = vadd.f32 %v1003, %v1081
        %v1090 = vadd.f32 %v1004, %v1069
        %v1091 = vadd.f32 %v1005, %v1073
        %v1092 = vadd.f32 %v1006, %v1077
        %v1093 = vadd.f32 %v1007, %v1081
        %v1094 = vadd.f32 %v1008, %v1069
        %v1095 = vadd.f32 %v1009, %v1073
        %v1096 = vadd.f32 %v1010, %v1077
        %v1097 = vadd.f32 %v1011, %v1081
        %v1098 = vadd.f32 %v1012, %v1069
        %v1099 = vadd.f32 %v1013, %v1073
        %v1100 = vadd.f32 %v1014, %v1077
        %v1101 = vadd.f32 %v1015, %v1081
        %v1102 = vadd.f32 %v1016, %v1069
        %v1103 = vadd.f32 %v1017, %v1073
        %v1104 = vadd.f32 %v1018, %v1077
        %v1105 = vadd.f32 %v1019, %v1081
        %v1106 = vadd.f32 %v1020, %v1069
        %v1107 = vadd.f32 %v1021, %v1073
        %v1108 = vadd.f32 %v1022, %v1077
        %v1109 = vadd.f32 %v1023, %v1081
        %v1110 = vadd.f32 %v1024, %v1069
        %v1111 = vadd.f32 %v1025, %v1073
        %v1112 = vadd.f32 %v1026, %v1077
        %v1113 = vadd.f32 %v1027, %v1081
        %v1114 = vadd.f32 %v1028, %v1069
        %v1115 = vadd.f32 %v1029, %v1073
        %v1116 = vadd.f32 %v1030, %v1077
        %v1117 = vadd.f32 %v1031, %v1081
        %v1118 = vadd.f32 %v1032, %v1069
        %v1119 = vadd.f32 %v1033, %v1073
        %v1120 = vadd.f32 %v1034, %v1077
        %v1121 = vadd.f32 %v1035, %v1081
        %v1122 = vadd.f32 %v1036, %v1069
        %v1123 = vadd.f32 %v1037, %v1073
        %v1124 = vadd.f32 %v1038, %v1077
        %v1125 = vadd.f32 %v1039, %v1081
        %v1126 = vadd.f32 %v1040, %v1069
        %v1127 = vadd.f32 %v1041, %v1073
        %v1128 = vadd.f32 %v1042, %v1077
        %v1129 = vadd.f32 %v1043, %v1081
        %v1130 = vadd.f32 %v1044, %v1069
        %v1131 = vadd.f32 %v1045, %v1073
        %v1132 = vadd.f32 %v1046, %v1077
        %v1133 = vadd.f32 %v1047, %v1081
        %v1134 = vadd.f32 %v1048, %v1069
        %v1135 = vadd.f32 %v1049, %v1073
        %v1136 = vadd.f32 %v1050, %v1077
        %v1137 = vadd.f32 %v1051, %v1081
        %v1138 = vadd.f32 %v1052, %v1069
        %v1139 = vadd.f32 %v1053, %v1073
        %v1140 = vadd.f32 %v1054, %v1077
        %v1141 = vadd.f32 %v1055, %v1081
        %v1142 = vadd.f32 %v1056, %v1069
        %v1143 = vadd.f32 %v1057, %v1073
        %v1144 = vadd.f32 %v1058, %v1077
        %v1145 = vadd.f32 %v1059, %v1081
        %v1146 = vadd.f32 %v1060, %v1069
        %v1147 = vadd.f32 %v1061, %v1073
        %v1148 = vadd.f32 %v1062, %v1077
        %v1149 = vadd.f32 %v1063, %v1081
        %v1150 = vld [vmem:[%s3] sm:$0xf]
        %v1151 = vld [vmem:[%s4] sm:$0xf]
        %v1152 = vadd.f32 %v1086, %v1087
        %v1153 = vadd.f32 %v1152, %v1088
        %vm1154 = vcmask 130048
        %v1155 = vsel %vm1154, %v1089, 0.0
        %v1156 = vadd.f32 %v1153, %v1155
        %1157 = vadd.xlane.f32.xlu0 %v1156
        %v1158 = vpop.xlane.xlu0 %1157
        %v1159 = vadd.f32 %v1090, %v1091
        %v1160 = vadd.f32 %v1159, %v1092
        %v1161 = vsel %vm1154, %v1093, 0.0
        %v1162 = vadd.f32 %v1160, %v1161
        %1163 = vadd.xlane.f32.xlu0 %v1162
        %v1164 = vpop.xlane.xlu0 %1163
        %v1165 = vadd.f32 %v1094, %v1095
        %v1166 = vadd.f32 %v1165, %v1096
        %v1167 = vsel %vm1154, %v1097, 0.0
        %v1168 = vadd.f32 %v1166, %v1167
        %1169 = vadd.xlane.f32.xlu0 %v1168
        %v1170 = vpop.xlane.xlu0 %1169
        %v1171 = vadd.f32 %v1098, %v1099
        %v1172 = vadd.f32 %v1171, %v1100
        %v1173 = vsel %vm1154, %v1101, 0.0
        %v1174 = vadd.f32 %v1172, %v1173
        %1175 = vadd.xlane.f32.xlu0 %v1174
        %v1176 = vpop.xlane.xlu0 %1175
        %v1177 = vadd.f32 %v1102, %v1103
        %v1178 = vadd.f32 %v1177, %v1104
        %v1179 = vsel %vm1154, %v1105, 0.0
        %v1180 = vadd.f32 %v1178, %v1179
        %1181 = vadd.xlane.f32.xlu0 %v1180
        %v1182 = vpop.xlane.xlu0 %1181
        %v1183 = vadd.f32 %v1106, %v1107
        %v1184 = vadd.f32 %v1183, %v1108
        %v1185 = vsel %vm1154, %v1109, 0.0
        %v1186 = vadd.f32 %v1184, %v1185
        %1187 = vadd.xlane.f32.xlu0 %v1186
        %v1188 = vpop.xlane.xlu0 %1187
        %v1189 = vadd.f32 %v1110, %v1111
        %v1190 = vadd.f32 %v1189, %v1112
        %v1191 = vsel %vm1154, %v1113, 0.0
        %v1192 = vadd.f32 %v1190, %v1191
        %1193 = vadd.xlane.f32.xlu0 %v1192
        %v1194 = vpop.xlane.xlu0 %1193
        %v1195 = vadd.f32 %v1114, %v1115
        %v1196 = vadd.f32 %v1195, %v1116
        %v1197 = vsel %vm1154, %v1117, 0.0
        %v1198 = vadd.f32 %v1196, %v1197
        %1199 = vadd.xlane.f32.xlu0 %v1198
        %v1200 = vpop.xlane.xlu0 %1199
        %v1201 = vadd.f32 %v1118, %v1119
        %v1202 = vadd.f32 %v1201, %v1120
        %v1203 = vsel %vm1154, %v1121, 0.0
        %v1204 = vadd.f32 %v1202, %v1203
        %1205 = vadd.xlane.f32.xlu0 %v1204
        %v1206 = vpop.xlane.xlu0 %1205
        %v1207 = vadd.f32 %v1122, %v1123
        %v1208 = vadd.f32 %v1207, %v1124
        %v1209 = vsel %vm1154, %v1125, 0.0
        %v1210 = vadd.f32 %v1208, %v1209
        %1211 = vadd.xlane.f32.xlu0 %v1210
        %v1212 = vpop.xlane.xlu0 %1211
        %v1213 = vadd.f32 %v1126, %v1127
        %v1214 = vadd.f32 %v1213, %v1128
        %v1215 = vsel %vm1154, %v1129, 0.0
        %v1216 = vadd.f32 %v1214, %v1215
        %1217 = vadd.xlane.f32.xlu0 %v1216
        %v1218 = vpop.xlane.xlu0 %1217
        %v1219 = vadd.f32 %v1130, %v1131
        %v1220 = vadd.f32 %v1219, %v1132
        %v1221 = vsel %vm1154, %v1133, 0.0
        %v1222 = vadd.f32 %v1220, %v1221
        %1223 = vadd.xlane.f32.xlu0 %v1222
        %v1224 = vpop.xlane.xlu0 %1223
        %v1225 = vadd.f32 %v1134, %v1135
        %v1226 = vadd.f32 %v1225, %v1136
        %v1227 = vsel %vm1154, %v1137, 0.0
        %v1228 = vadd.f32 %v1226, %v1227
        %1229 = vadd.xlane.f32.xlu0 %v1228
        %v1230 = vpop.xlane.xlu0 %1229
        %v1231 = vadd.f32 %v1138, %v1139
        %v1232 = vadd.f32 %v1231, %v1140
        %v1233 = vsel %vm1154, %v1141, 0.0
        %v1234 = vadd.f32 %v1232, %v1233
        %1235 = vadd.xlane.f32.xlu0 %v1234
        %v1236 = vpop.xlane.xlu0 %1235
        %v1237 = vadd.f32 %v1142, %v1143
        %v1238 = vadd.f32 %v1237, %v1144
        %v1239 = vsel %vm1154, %v1145, 0.0
        %v1240 = vadd.f32 %v1238, %v1239
        %1241 = vadd.xlane.f32.xlu0 %v1240
        %v1242 = vpop.xlane.xlu0 %1241
        %v1243 = vadd.f32 %v1146, %v1147
        %v1244 = vadd.f32 %v1243, %v1148
        %v1245 = vsel %vm1154, %v1149, 0.0
        %v1246 = vadd.f32 %v1244, %v1245
        %1247 = vadd.xlane.f32.xlu0 %v1246
        %v1248 = vpop.xlane.xlu0 %1247
        %v1249 = vrcp.pop 400.0
        %v1250 = vmul.f32 %v1158, %v1249
        %v1251 = vmul.f32 %v1164, %v1249
        %v1252 = vmul.f32 %v1170, %v1249
        %v1253 = vmul.f32 %v1176, %v1249
        %v1254 = vmul.f32 %v1182, %v1249
        %v1255 = vmul.f32 %v1188, %v1249
        %v1256 = vmul.f32 %v1194, %v1249
        %v1257 = vmul.f32 %v1200, %v1249
        %v1258 = vmul.f32 %v1206, %v1249
        %v1259 = vmul.f32 %v1212, %v1249
        %v1260 = vmul.f32 %v1218, %v1249
        %v1261 = vmul.f32 %v1224, %v1249
        %v1262 = vmul.f32 %v1230, %v1249
        %v1263 = vmul.f32 %v1236, %v1249
        %v1264 = vmul.f32 %v1242, %v1249
        %v1265 = vmul.f32 %v1248, %v1249
        %v1266 = vsub.f32 %v1086, %v1250
        %v1267 = vsub.f32 %v1087, %v1250
        %v1268 = vsub.f32 %v1088, %v1250
        %v1269 = vsub.f32 %v1089, %v1250
        %v1270 = vsub.f32 %v1090, %v1251
        %v1271 = vsub.f32 %v1091, %v1251
        %v1272 = vsub.f32 %v1092, %v1251
        %v1273 = vsub.f32 %v1093, %v1251
        %v1274 = vsub.f32 %v1094, %v1252
        %v1275 = vsub.f32 %v1095, %v1252
        %v1276 = vsub.f32 %v1096, %v1252
        %v1277 = vsub.f32 %v1097, %v1252
        %v1278 = vsub.f32 %v1098, %v1253
        %v1279 = vsub.f32 %v1099, %v1253
        %v1280 = vsub.f32 %v1100, %v1253
        %v1281 = vsub.f32 %v1101, %v1253
        %v1282 = vsub.f32 %v1102, %v1254
        %v1283 = vsub.f32 %v1103, %v1254
        %v1284 = vsub.f32 %v1104, %v1254
        %v1285 = vsub.f32 %v1105, %v1254
        %v1286 = vsub.f32 %v1106, %v1255
        %v1287 = vsub.f32 %v1107, %v1255
        %v1288 = vsub.f32 %v1108, %v1255
        %v1289 = vsub.f32 %v1109, %v1255
        %v1290 = vsub.f32 %v1110, %v1256
        %v1291 = vsub.f32 %v1111, %v1256
        %v1292 = vsub.f32 %v1112, %v1256
        %v1293 = vsub.f32 %v1113, %v1256
        %v1294 = vsub.f32 %v1114, %v1257
        %v1295 = vsub.f32 %v1115, %v1257
        %v1296 = vsub.f32 %v1116, %v1257
        %v1297 = vsub.f32 %v1117, %v1257
        %v1298 = vsub.f32 %v1118, %v1258
        %v1299 = vsub.f32 %v1119, %v1258
        %v1300 = vsub.f32 %v1120, %v1258
        %v1301 = vsub.f32 %v1121, %v1258
        %v1302 = vsub.f32 %v1122, %v1259
        %v1303 = vsub.f32 %v1123, %v1259
        %v1304 = vsub.f32 %v1124, %v1259
        %v1305 = vsub.f32 %v1125, %v1259
        %v1306 = vsub.f32 %v1126, %v1260
        %v1307 = vsub.f32 %v1127, %v1260
        %v1308 = vsub.f32 %v1128, %v1260
        %v1309 = vsub.f32 %v1129, %v1260
        %v1310 = vsub.f32 %v1130, %v1261
        %v1311 = vsub.f32 %v1131, %v1261
        %v1312 = vsub.f32 %v1132, %v1261
        %v1313 = vsub.f32 %v1133, %v1261
        %v1314 = vsub.f32 %v1134, %v1262
        %v1315 = vsub.f32 %v1135, %v1262
        %v1316 = vsub.f32 %v1136, %v1262
        %v1317 = vsub.f32 %v1137, %v1262
        %v1318 = vsub.f32 %v1138, %v1263
        %v1319 = vsub.f32 %v1139, %v1263
        %v1320 = vsub.f32 %v1140, %v1263
        %v1321 = vsub.f32 %v1141, %v1263
        %v1322 = vsub.f32 %v1142, %v1264
        %v1323 = vsub.f32 %v1143, %v1264
        %v1324 = vsub.f32 %v1144, %v1264
        %v1325 = vsub.f32 %v1145, %v1264
        %v1326 = vsub.f32 %v1146, %v1265
        %v1327 = vsub.f32 %v1147, %v1265
        %v1328 = vsub.f32 %v1148, %v1265
        %v1329 = vsub.f32 %v1149, %v1265
        %v1330 = vmul.f32 %v1266, %v1266
        %v1331 = vmul.f32 %v1267, %v1267
        %v1332 = vmul.f32 %v1268, %v1268
        %v1333 = vmul.f32 %v1269, %v1269
        %v1334 = vmul.f32 %v1270, %v1270
        %v1335 = vmul.f32 %v1271, %v1271
        %v1336 = vmul.f32 %v1272, %v1272
        %v1337 = vmul.f32 %v1273, %v1273
        %v1338 = vmul.f32 %v1274, %v1274
        %v1339 = vmul.f32 %v1275, %v1275
        %v1340 = vmul.f32 %v1276, %v1276
        %v1341 = vmul.f32 %v1277, %v1277
        %v1342 = vmul.f32 %v1278, %v1278
        %v1343 = vmul.f32 %v1279, %v1279
        %v1344 = vmul.f32 %v1280, %v1280
        %v1345 = vmul.f32 %v1281, %v1281
        %v1346 = vmul.f32 %v1282, %v1282
        %v1347 = vmul.f32 %v1283, %v1283
        %v1348 = vmul.f32 %v1284, %v1284
        %v1349 = vmul.f32 %v1285, %v1285
        %v1350 = vmul.f32 %v1286, %v1286
        %v1351 = vmul.f32 %v1287, %v1287
        %v1352 = vmul.f32 %v1288, %v1288
        %v1353 = vmul.f32 %v1289, %v1289
        %v1354 = vmul.f32 %v1290, %v1290
        %v1355 = vmul.f32 %v1291, %v1291
        %v1356 = vmul.f32 %v1292, %v1292
        %v1357 = vmul.f32 %v1293, %v1293
        %v1358 = vmul.f32 %v1294, %v1294
        %v1359 = vmul.f32 %v1295, %v1295
        %v1360 = vmul.f32 %v1296, %v1296
        %v1361 = vmul.f32 %v1297, %v1297
        %v1362 = vmul.f32 %v1298, %v1298
        %v1363 = vmul.f32 %v1299, %v1299
        %v1364 = vmul.f32 %v1300, %v1300
        %v1365 = vmul.f32 %v1301, %v1301
        %v1366 = vmul.f32 %v1302, %v1302
        %v1367 = vmul.f32 %v1303, %v1303
        %v1368 = vmul.f32 %v1304, %v1304
        %v1369 = vmul.f32 %v1305, %v1305
        %v1370 = vmul.f32 %v1306, %v1306
        %v1371 = vmul.f32 %v1307, %v1307
        %v1372 = vmul.f32 %v1308, %v1308
        %v1373 = vmul.f32 %v1309, %v1309
        %v1374 = vmul.f32 %v1310, %v1310
        %v1375 = vmul.f32 %v1311, %v1311
        %v1376 = vmul.f32 %v1312, %v1312
        %v1377 = vmul.f32 %v1313, %v1313
        %v1378 = vmul.f32 %v1314, %v1314
        %v1379 = vmul.f32 %v1315, %v1315
        %v1380 = vmul.f32 %v1316, %v1316
        %v1381 = vmul.f32 %v1317, %v1317
        %v1382 = vmul.f32 %v1318, %v1318
        %v1383 = vmul.f32 %v1319, %v1319
        %v1384 = vmul.f32 %v1320, %v1320
        %v1385 = vmul.f32 %v1321, %v1321
        %v1386 = vmul.f32 %v1322, %v1322
        %v1387 = vmul.f32 %v1323, %v1323
        %v1388 = vmul.f32 %v1324, %v1324
        %v1389 = vmul.f32 %v1325, %v1325
        %v1390 = vmul.f32 %v1326, %v1326
        %v1391 = vmul.f32 %v1327, %v1327
        %v1392 = vmul.f32 %v1328, %v1328
        %v1393 = vmul.f32 %v1329, %v1329
        %v1394 = vadd.f32 %v1330, %v1331
        %v1395 = vadd.f32 %v1394, %v1332
        %v1396 = vsel %vm1154, %v1333, 0.0
        %v1397 = vadd.f32 %v1395, %v1396
        %1398 = vadd.xlane.f32.xlu0 %v1397
        %v1399 = vpop.xlane.xlu0 %1398
        %v1400 = vadd.f32 %v1334, %v1335
        %v1401 = vadd.f32 %v1400, %v1336
        %v1402 = vsel %vm1154, %v1337, 0.0
        %v1403 = vadd.f32 %v1401, %v1402
        %1404 = vadd.xlane.f32.xlu0 %v1403
        %v1405 = vpop.xlane.xlu0 %1404
        %v1406 = vadd.f32 %v1338, %v1339
        %v1407 = vadd.f32 %v1406, %v1340
        %v1408 = vsel %vm1154, %v1341, 0.0
        %v1409 = vadd.f32 %v1407, %v1408
        %1410 = vadd.xlane.f32.xlu0 %v1409
        %v1411 = vpop.xlane.xlu0 %1410
        %v1412 = vadd.f32 %v1342, %v1343
        %v1413 = vadd.f32 %v1412, %v1344
        %v1414 = vsel %vm1154, %v1345, 0.0
        %v1415 = vadd.f32 %v1413, %v1414
        %1416 = vadd.xlane.f32.xlu0 %v1415
        %v1417 = vpop.xlane.xlu0 %1416
        %v1418 = vadd.f32 %v1346, %v1347
        %v1419 = vadd.f32 %v1418, %v1348
        %v1420 = vsel %vm1154, %v1349, 0.0
        %v1421 = vadd.f32 %v1419, %v1420
        %1422 = vadd.xlane.f32.xlu0 %v1421
        %v1423 = vpop.xlane.xlu0 %1422
        %v1424 = vadd.f32 %v1350, %v1351
        %v1425 = vadd.f32 %v1424, %v1352
        %v1426 = vsel %vm1154, %v1353, 0.0
        %v1427 = vadd.f32 %v1425, %v1426
        %1428 = vadd.xlane.f32.xlu0 %v1427
        %v1429 = vpop.xlane.xlu0 %1428
        %v1430 = vadd.f32 %v1354, %v1355
        %v1431 = vadd.f32 %v1430, %v1356
        %v1432 = vsel %vm1154, %v1357, 0.0
        %v1433 = vadd.f32 %v1431, %v1432
        %1434 = vadd.xlane.f32.xlu0 %v1433
        %v1435 = vpop.xlane.xlu0 %1434
        %v1436 = vadd.f32 %v1358, %v1359
        %v1437 = vadd.f32 %v1436, %v1360
        %v1438 = vsel %vm1154, %v1361, 0.0
        %v1439 = vadd.f32 %v1437, %v1438
        %1440 = vadd.xlane.f32.xlu0 %v1439
        %v1441 = vpop.xlane.xlu0 %1440
        %v1442 = vadd.f32 %v1362, %v1363
        %v1443 = vadd.f32 %v1442, %v1364
        %v1444 = vsel %vm1154, %v1365, 0.0
        %v1445 = vadd.f32 %v1443, %v1444
        %1446 = vadd.xlane.f32.xlu0 %v1445
        %v1447 = vpop.xlane.xlu0 %1446
        %v1448 = vadd.f32 %v1366, %v1367
        %v1449 = vadd.f32 %v1448, %v1368
        %v1450 = vsel %vm1154, %v1369, 0.0
        %v1451 = vadd.f32 %v1449, %v1450
        %1452 = vadd.xlane.f32.xlu0 %v1451
        %v1453 = vpop.xlane.xlu0 %1452
        %v1454 = vadd.f32 %v1370, %v1371
        %v1455 = vadd.f32 %v1454, %v1372
        %v1456 = vsel %vm1154, %v1373, 0.0
        %v1457 = vadd.f32 %v1455, %v1456
        %1458 = vadd.xlane.f32.xlu0 %v1457
        %v1459 = vpop.xlane.xlu0 %1458
        %v1460 = vadd.f32 %v1374, %v1375
        %v1461 = vadd.f32 %v1460, %v1376
        %v1462 = vsel %vm1154, %v1377, 0.0
        %v1463 = vadd.f32 %v1461, %v1462
        %1464 = vadd.xlane.f32.xlu0 %v1463
        %v1465 = vpop.xlane.xlu0 %1464
        %v1466 = vadd.f32 %v1378, %v1379
        %v1467 = vadd.f32 %v1466, %v1380
        %v1468 = vsel %vm1154, %v1381, 0.0
        %v1469 = vadd.f32 %v1467, %v1468
        %1470 = vadd.xlane.f32.xlu0 %v1469
        %v1471 = vpop.xlane.xlu0 %1470
        %v1472 = vadd.f32 %v1382, %v1383
        %v1473 = vadd.f32 %v1472, %v1384
        %v1474 = vsel %vm1154, %v1385, 0.0
        %v1475 = vadd.f32 %v1473, %v1474
        %1476 = vadd.xlane.f32.xlu0 %v1475
        %v1477 = vpop.xlane.xlu0 %1476
        %v1478 = vadd.f32 %v1386, %v1387
        %v1479 = vadd.f32 %v1478, %v1388
        %v1480 = vsel %vm1154, %v1389, 0.0
        %v1481 = vadd.f32 %v1479, %v1480
        %1482 = vadd.xlane.f32.xlu0 %v1481
        %v1483 = vpop.xlane.xlu0 %1482
        %v1484 = vadd.f32 %v1390, %v1391
        %v1485 = vadd.f32 %v1484, %v1392
        %v1486 = vsel %vm1154, %v1393, 0.0
        %v1487 = vadd.f32 %v1485, %v1486
        %1488 = vadd.xlane.f32.xlu0 %v1487
        %v1489 = vpop.xlane.xlu0 %1488
        %v1490 = vmul.f32 %v1399, %v1249
        %v1491 = vmul.f32 %v1405, %v1249
        %v1492 = vmul.f32 %v1411, %v1249
        %v1493 = vmul.f32 %v1417, %v1249
        %v1494 = vmul.f32 %v1423, %v1249
        %v1495 = vmul.f32 %v1429, %v1249
        %v1496 = vmul.f32 %v1435, %v1249
        %v1497 = vmul.f32 %v1441, %v1249
        %v1498 = vmul.f32 %v1447, %v1249
        %v1499 = vmul.f32 %v1453, %v1249
        %v1500 = vmul.f32 %v1459, %v1249
        %v1501 = vmul.f32 %v1465, %v1249
        %v1502 = vmul.f32 %v1471, %v1249
        %v1503 = vmul.f32 %v1477, %v1249
        %v1504 = vmul.f32 %v1483, %v1249
        %v1505 = vmul.f32 %v1489, %v1249
        %v1506 = vadd.f32 %v1490, 1e-05
        %v1507 = vadd.f32 %v1491, 1e-05
        %v1508 = vadd.f32 %v1492, 1e-05
        %v1509 = vadd.f32 %v1493, 1e-05
        %v1510 = vadd.f32 %v1494, 1e-05
        %v1511 = vadd.f32 %v1495, 1e-05
        %v1512 = vadd.f32 %v1496, 1e-05
        %v1513 = vadd.f32 %v1497, 1e-05
        %v1514 = vadd.f32 %v1498, 1e-05
        %v1515 = vadd.f32 %v1499, 1e-05
        %v1516 = vadd.f32 %v1500, 1e-05
        %v1517 = vadd.f32 %v1501, 1e-05
        %v1518 = vadd.f32 %v1502, 1e-05
        %v1519 = vadd.f32 %v1503, 1e-05
        %v1520 = vadd.f32 %v1504, 1e-05
        %v1521 = vadd.f32 %v1505, 1e-05
        %v1522 = vrsqrt.pop %v1506
        %v1523 = vrsqrt.pop %v1507
        %v1524 = vrsqrt.pop %v1508
        %v1525 = vrsqrt.pop %v1509
        %v1526 = vrsqrt.pop %v1510
        %v1527 = vrsqrt.pop %v1511
        %v1528 = vrsqrt.pop %v1512
        %v1529 = vrsqrt.pop %v1513
        %v1530 = vrsqrt.pop %v1514
        %v1531 = vrsqrt.pop %v1515
        %v1532 = vrsqrt.pop %v1516
        %v1533 = vrsqrt.pop %v1517
        %v1534 = vrsqrt.pop %v1518
        %v1535 = vrsqrt.pop %v1519
        %v1536 = vrsqrt.pop %v1520
        %v1537 = vrsqrt.pop %v1521
        %v1538 = vmul.f32 %v1266, %v1522
        %v1539 = vmul.f32 %v1267, %v1522
        %v1540 = vmul.f32 %v1268, %v1522
        %v1541 = vmul.f32 %v1269, %v1522
        %v1542 = vmul.f32 %v1270, %v1523
        %v1543 = vmul.f32 %v1271, %v1523
        %v1544 = vmul.f32 %v1272, %v1523
        %v1545 = vmul.f32 %v1273, %v1523
        %v1546 = vmul.f32 %v1274, %v1524
        %v1547 = vmul.f32 %v1275, %v1524
        %v1548 = vmul.f32 %v1276, %v1524
        %v1549 = vmul.f32 %v1277, %v1524
        %v1550 = vmul.f32 %v1278, %v1525
        %v1551 = vmul.f32 %v1279, %v1525
        %v1552 = vmul.f32 %v1280, %v1525
        %v1553 = vmul.f32 %v1281, %v1525
        %v1554 = vmul.f32 %v1282, %v1526
        %v1555 = vmul.f32 %v1283, %v1526
        %v1556 = vmul.f32 %v1284, %v1526
        %v1557 = vmul.f32 %v1285, %v1526
        %v1558 = vmul.f32 %v1286, %v1527
        %v1559 = vmul.f32 %v1287, %v1527
        %v1560 = vmul.f32 %v1288, %v1527
        %v1561 = vmul.f32 %v1289, %v1527
        %v1562 = vmul.f32 %v1290, %v1528
        %v1563 = vmul.f32 %v1291, %v1528
        %v1564 = vmul.f32 %v1292, %v1528
        %v1565 = vmul.f32 %v1293, %v1528
        %v1566 = vmul.f32 %v1294, %v1529
        %v1567 = vmul.f32 %v1295, %v1529
        %v1568 = vmul.f32 %v1296, %v1529
        %v1569 = vmul.f32 %v1297, %v1529
        %v1570 = vmul.f32 %v1298, %v1530
        %v1571 = vmul.f32 %v1299, %v1530
        %v1572 = vmul.f32 %v1300, %v1530
        %v1573 = vmul.f32 %v1301, %v1530
        %v1574 = vmul.f32 %v1302, %v1531
        %v1575 = vmul.f32 %v1303, %v1531
        %v1576 = vmul.f32 %v1304, %v1531
        %v1577 = vmul.f32 %v1305, %v1531
        %v1578 = vmul.f32 %v1306, %v1532
        %v1579 = vmul.f32 %v1307, %v1532
        %v1580 = vmul.f32 %v1308, %v1532
        %v1581 = vmul.f32 %v1309, %v1532
        %v1582 = vmul.f32 %v1310, %v1533
        %v1583 = vmul.f32 %v1311, %v1533
        %v1584 = vmul.f32 %v1312, %v1533
        %v1585 = vmul.f32 %v1313, %v1533
        %v1586 = vmul.f32 %v1314, %v1534
        %v1587 = vmul.f32 %v1315, %v1534
        %v1588 = vmul.f32 %v1316, %v1534
        %v1589 = vmul.f32 %v1317, %v1534
        %v1590 = vmul.f32 %v1318, %v1535
        %v1591 = vmul.f32 %v1319, %v1535
        %v1592 = vmul.f32 %v1320, %v1535
        %v1593 = vmul.f32 %v1321, %v1535
        %v1594 = vmul.f32 %v1322, %v1536
        %v1595 = vmul.f32 %v1323, %v1536
        %v1596 = vmul.f32 %v1324, %v1536
        %v1597 = vmul.f32 %v1325, %v1536
        %v1598 = vmul.f32 %v1326, %v1537
        %v1599 = vmul.f32 %v1327, %v1537
        %v1600 = vmul.f32 %v1328, %v1537
        %v1601 = vmul.f32 %v1329, %v1537
        %v1603 = vlaneseq
        %v1604 = vshrl.u32 %v1603, 7
        %v1605 = vsub.s32 0, %v1604
        %v1606 = vrot.slane %v1150, %v1605
        %v1607 = vlaneseq
        %v1608 = vshrl.u32 %v1607, 7
        %v1609 = vsub.s32 1, %v1608
        %v1610 = vrot.slane %v1150, %v1609
        %v1611 = vlaneseq
        %v1612 = vshrl.u32 %v1611, 7
        %v1613 = vsub.s32 2, %v1612
        %v1614 = vrot.slane %v1150, %v1613
        %v1615 = vlaneseq
        %v1616 = vshrl.u32 %v1615, 7
        %v1617 = vsub.s32 3, %v1616
        %v1618 = vrot.slane %v1150, %v1617
        %v1623 = vmul.f32 %v1538, %v1606
        %v1624 = vmul.f32 %v1539, %v1610
        %v1625 = vmul.f32 %v1540, %v1614
        %v1626 = vmul.f32 %v1541, %v1618
        %v1627 = vmul.f32 %v1542, %v1606
        %v1628 = vmul.f32 %v1543, %v1610
        %v1629 = vmul.f32 %v1544, %v1614
        %v1630 = vmul.f32 %v1545, %v1618
        %v1631 = vmul.f32 %v1546, %v1606
        %v1632 = vmul.f32 %v1547, %v1610
        %v1633 = vmul.f32 %v1548, %v1614
        %v1634 = vmul.f32 %v1549, %v1618
        %v1635 = vmul.f32 %v1550, %v1606
        %v1636 = vmul.f32 %v1551, %v1610
        %v1637 = vmul.f32 %v1552, %v1614
        %v1638 = vmul.f32 %v1553, %v1618
        %v1639 = vmul.f32 %v1554, %v1606
        %v1640 = vmul.f32 %v1555, %v1610
        %v1641 = vmul.f32 %v1556, %v1614
        %v1642 = vmul.f32 %v1557, %v1618
        %v1643 = vmul.f32 %v1558, %v1606
        %v1644 = vmul.f32 %v1559, %v1610
        %v1645 = vmul.f32 %v1560, %v1614
        %v1646 = vmul.f32 %v1561, %v1618
        %v1647 = vmul.f32 %v1562, %v1606
        %v1648 = vmul.f32 %v1563, %v1610
        %v1649 = vmul.f32 %v1564, %v1614
        %v1650 = vmul.f32 %v1565, %v1618
        %v1651 = vmul.f32 %v1566, %v1606
        %v1652 = vmul.f32 %v1567, %v1610
        %v1653 = vmul.f32 %v1568, %v1614
        %v1654 = vmul.f32 %v1569, %v1618
        %v1655 = vmul.f32 %v1570, %v1606
        %v1656 = vmul.f32 %v1571, %v1610
        %v1657 = vmul.f32 %v1572, %v1614
        %v1658 = vmul.f32 %v1573, %v1618
        %v1659 = vmul.f32 %v1574, %v1606
        %v1660 = vmul.f32 %v1575, %v1610
        %v1661 = vmul.f32 %v1576, %v1614
        %v1662 = vmul.f32 %v1577, %v1618
        %v1663 = vmul.f32 %v1578, %v1606
        %v1664 = vmul.f32 %v1579, %v1610
        %v1665 = vmul.f32 %v1580, %v1614
        %v1666 = vmul.f32 %v1581, %v1618
        %v1667 = vmul.f32 %v1582, %v1606
        %v1668 = vmul.f32 %v1583, %v1610
        %v1669 = vmul.f32 %v1584, %v1614
        %v1670 = vmul.f32 %v1585, %v1618
        %v1671 = vmul.f32 %v1586, %v1606
        %v1672 = vmul.f32 %v1587, %v1610
        %v1673 = vmul.f32 %v1588, %v1614
        %v1674 = vmul.f32 %v1589, %v1618
        %v1675 = vmul.f32 %v1590, %v1606
        %v1676 = vmul.f32 %v1591, %v1610
        %v1677 = vmul.f32 %v1592, %v1614
        %v1678 = vmul.f32 %v1593, %v1618
        %v1679 = vmul.f32 %v1594, %v1606
        %v1680 = vmul.f32 %v1595, %v1610
        %v1681 = vmul.f32 %v1596, %v1614
        %v1682 = vmul.f32 %v1597, %v1618
        %v1683 = vmul.f32 %v1598, %v1606
        %v1684 = vmul.f32 %v1599, %v1610
        %v1685 = vmul.f32 %v1600, %v1614
        %v1686 = vmul.f32 %v1601, %v1618
        %v1688 = vlaneseq
        %v1689 = vshrl.u32 %v1688, 7
        %v1690 = vsub.s32 0, %v1689
        %v1691 = vrot.slane %v1151, %v1690
        %v1692 = vlaneseq
        %v1693 = vshrl.u32 %v1692, 7
        %v1694 = vsub.s32 1, %v1693
        %v1695 = vrot.slane %v1151, %v1694
        %v1696 = vlaneseq
        %v1697 = vshrl.u32 %v1696, 7
        %v1698 = vsub.s32 2, %v1697
        %v1699 = vrot.slane %v1151, %v1698
        %v1700 = vlaneseq
        %v1701 = vshrl.u32 %v1700, 7
        %v1702 = vsub.s32 3, %v1701
        %v1703 = vrot.slane %v1151, %v1702
        %v1708 = vadd.f32 %v1623, %v1691
        %v1709 = vadd.f32 %v1624, %v1695
        %v1710 = vadd.f32 %v1625, %v1699
        %v1711 = vadd.f32 %v1626, %v1703
        %v1712 = vadd.f32 %v1627, %v1691
        %v1713 = vadd.f32 %v1628, %v1695
        %v1714 = vadd.f32 %v1629, %v1699
        %v1715 = vadd.f32 %v1630, %v1703
        %v1716 = vadd.f32 %v1631, %v1691
        %v1717 = vadd.f32 %v1632, %v1695
        %v1718 = vadd.f32 %v1633, %v1699
        %v1719 = vadd.f32 %v1634, %v1703
        %v1720 = vadd.f32 %v1635, %v1691
        %v1721 = vadd.f32 %v1636, %v1695
        %v1722 = vadd.f32 %v1637, %v1699
        %v1723 = vadd.f32 %v1638, %v1703
        %v1724 = vadd.f32 %v1639, %v1691
        %v1725 = vadd.f32 %v1640, %v1695
        %v1726 = vadd.f32 %v1641, %v1699
        %v1727 = vadd.f32 %v1642, %v1703
        %v1728 = vadd.f32 %v1643, %v1691
        %v1729 = vadd.f32 %v1644, %v1695
        %v1730 = vadd.f32 %v1645, %v1699
        %v1731 = vadd.f32 %v1646, %v1703
        %v1732 = vadd.f32 %v1647, %v1691
        %v1733 = vadd.f32 %v1648, %v1695
        %v1734 = vadd.f32 %v1649, %v1699
        %v1735 = vadd.f32 %v1650, %v1703
        %v1736 = vadd.f32 %v1651, %v1691
        %v1737 = vadd.f32 %v1652, %v1695
        %v1738 = vadd.f32 %v1653, %v1699
        %v1739 = vadd.f32 %v1654, %v1703
        %v1740 = vadd.f32 %v1655, %v1691
        %v1741 = vadd.f32 %v1656, %v1695
        %v1742 = vadd.f32 %v1657, %v1699
        %v1743 = vadd.f32 %v1658, %v1703
        %v1744 = vadd.f32 %v1659, %v1691
        %v1745 = vadd.f32 %v1660, %v1695
        %v1746 = vadd.f32 %v1661, %v1699
        %v1747 = vadd.f32 %v1662, %v1703
        %v1748 = vadd.f32 %v1663, %v1691
        %v1749 = vadd.f32 %v1664, %v1695
        %v1750 = vadd.f32 %v1665, %v1699
        %v1751 = vadd.f32 %v1666, %v1703
        %v1752 = vadd.f32 %v1667, %v1691
        %v1753 = vadd.f32 %v1668, %v1695
        %v1754 = vadd.f32 %v1669, %v1699
        %v1755 = vadd.f32 %v1670, %v1703
        %v1756 = vadd.f32 %v1671, %v1691
        %v1757 = vadd.f32 %v1672, %v1695
        %v1758 = vadd.f32 %v1673, %v1699
        %v1759 = vadd.f32 %v1674, %v1703
        %v1760 = vadd.f32 %v1675, %v1691
        %v1761 = vadd.f32 %v1676, %v1695
        %v1762 = vadd.f32 %v1677, %v1699
        %v1763 = vadd.f32 %v1678, %v1703
        %v1764 = vadd.f32 %v1679, %v1691
        %v1765 = vadd.f32 %v1680, %v1695
        %v1766 = vadd.f32 %v1681, %v1699
        %v1767 = vadd.f32 %v1682, %v1703
        %v1768 = vadd.f32 %v1683, %v1691
        %v1769 = vadd.f32 %v1684, %v1695
        %v1770 = vadd.f32 %v1685, %v1699
        %v1771 = vadd.f32 %v1686, %v1703
        %v1772 = vmax.f32 %v1708, 0.0
        %v1773 = vmax.f32 %v1709, 0.0
        %v1774 = vmax.f32 %v1710, 0.0
        %v1775 = vmax.f32 %v1711, 0.0
        %v1776 = vmax.f32 %v1712, 0.0
        %v1777 = vmax.f32 %v1713, 0.0
        %v1778 = vmax.f32 %v1714, 0.0
        %v1779 = vmax.f32 %v1715, 0.0
        %v1780 = vmax.f32 %v1716, 0.0
        %v1781 = vmax.f32 %v1717, 0.0
        %v1782 = vmax.f32 %v1718, 0.0
        %v1783 = vmax.f32 %v1719, 0.0
        %v1784 = vmax.f32 %v1720, 0.0
        %v1785 = vmax.f32 %v1721, 0.0
        %v1786 = vmax.f32 %v1722, 0.0
        %v1787 = vmax.f32 %v1723, 0.0
        %v1788 = vmax.f32 %v1724, 0.0
        %v1789 = vmax.f32 %v1725, 0.0
        %v1790 = vmax.f32 %v1726, 0.0
        %v1791 = vmax.f32 %v1727, 0.0
        %v1792 = vmax.f32 %v1728, 0.0
        %v1793 = vmax.f32 %v1729, 0.0
        %v1794 = vmax.f32 %v1730, 0.0
        %v1795 = vmax.f32 %v1731, 0.0
        %v1796 = vmax.f32 %v1732, 0.0
        %v1797 = vmax.f32 %v1733, 0.0
        %v1798 = vmax.f32 %v1734, 0.0
        %v1799 = vmax.f32 %v1735, 0.0
        %v1800 = vmax.f32 %v1736, 0.0
        %v1801 = vmax.f32 %v1737, 0.0
        %v1802 = vmax.f32 %v1738, 0.0
        %v1803 = vmax.f32 %v1739, 0.0
        %v1804 = vmax.f32 %v1740, 0.0
        %v1805 = vmax.f32 %v1741, 0.0
        %v1806 = vmax.f32 %v1742, 0.0
        %v1807 = vmax.f32 %v1743, 0.0
        %v1808 = vmax.f32 %v1744, 0.0
        %v1809 = vmax.f32 %v1745, 0.0
        %v1810 = vmax.f32 %v1746, 0.0
        %v1811 = vmax.f32 %v1747, 0.0
        %v1812 = vmax.f32 %v1748, 0.0
        %v1813 = vmax.f32 %v1749, 0.0
        %v1814 = vmax.f32 %v1750, 0.0
        %v1815 = vmax.f32 %v1751, 0.0
        %v1816 = vmax.f32 %v1752, 0.0
        %v1817 = vmax.f32 %v1753, 0.0
        %v1818 = vmax.f32 %v1754, 0.0
        %v1819 = vmax.f32 %v1755, 0.0
        %v1820 = vmax.f32 %v1756, 0.0
        %v1821 = vmax.f32 %v1757, 0.0
        %v1822 = vmax.f32 %v1758, 0.0
        %v1823 = vmax.f32 %v1759, 0.0
        %v1824 = vmax.f32 %v1760, 0.0
        %v1825 = vmax.f32 %v1761, 0.0
        %v1826 = vmax.f32 %v1762, 0.0
        %v1827 = vmax.f32 %v1763, 0.0
        %v1828 = vmax.f32 %v1764, 0.0
        %v1829 = vmax.f32 %v1765, 0.0
        %v1830 = vmax.f32 %v1766, 0.0
        %v1831 = vmax.f32 %v1767, 0.0
        %v1832 = vmax.f32 %v1768, 0.0
        %v1833 = vmax.f32 %v1769, 0.0
        %v1834 = vmax.f32 %v1770, 0.0
        %v1835 = vmax.f32 %v1771, 0.0
        %v1836 = vpack.c.bf16 %v1776, %v1772
        %v1837 = vpack.c.bf16 %v1777, %v1773
        %v1838 = vpack.c.bf16 %v1778, %v1774
        %v1839 = vpack.c.bf16 %v1779, %v1775
        %v1840 = vpack.c.bf16 %v1784, %v1780
        %v1841 = vpack.c.bf16 %v1785, %v1781
        %v1842 = vpack.c.bf16 %v1786, %v1782
        %v1843 = vpack.c.bf16 %v1787, %v1783
        %v1844 = vpack.c.bf16 %v1792, %v1788
        %v1845 = vpack.c.bf16 %v1793, %v1789
        %v1846 = vpack.c.bf16 %v1794, %v1790
        %v1847 = vpack.c.bf16 %v1795, %v1791
        %v1848 = vpack.c.bf16 %v1800, %v1796
        %v1849 = vpack.c.bf16 %v1801, %v1797
        %v1850 = vpack.c.bf16 %v1802, %v1798
        %v1851 = vpack.c.bf16 %v1803, %v1799
        %v1852 = vpack.c.bf16 %v1808, %v1804
        %v1853 = vpack.c.bf16 %v1809, %v1805
        %v1854 = vpack.c.bf16 %v1810, %v1806
        %v1855 = vpack.c.bf16 %v1811, %v1807
        %v1856 = vpack.c.bf16 %v1816, %v1812
        %v1857 = vpack.c.bf16 %v1817, %v1813
        %v1858 = vpack.c.bf16 %v1818, %v1814
        %v1859 = vpack.c.bf16 %v1819, %v1815
        %v1860 = vpack.c.bf16 %v1824, %v1820
        %v1861 = vpack.c.bf16 %v1825, %v1821
        %v1862 = vpack.c.bf16 %v1826, %v1822
        %v1863 = vpack.c.bf16 %v1827, %v1823
        %v1864 = vpack.c.bf16 %v1832, %v1828
        %v1865 = vpack.c.bf16 %v1833, %v1829
        %v1866 = vpack.c.bf16 %v1834, %v1830
        %v1867 = vpack.c.bf16 %v1835, %v1831
        %v1868 = vld [vmem:[#allocation3] sm:$0xff]
        %v1869 = vld [vmem:[#allocation3 + $0x8] sm:$0xf]
        %v1870 = vld [vmem:[#allocation3 + $0xc] sm:$0xff]
        %v1871 = vld [vmem:[#allocation3 + $0x14] sm:$0xf]
        %v1872 = vld [vmem:[#allocation3 + $0x18] sm:$0xff]
        %v1873 = vld [vmem:[#allocation3 + $0x20] sm:$0xf]
        %v1874 = vld [vmem:[#allocation3 + $0x24] sm:$0xff]
        %v1875 = vld [vmem:[#allocation3 + $0x2c] sm:$0xf]
        %v1876 = vld [vmem:[#allocation3 + $0x30] sm:$0xff]
        %v1877 = vld [vmem:[#allocation3 + $0x38] sm:$0xf]
        %v1878 = vld [vmem:[#allocation3 + $0x3c] sm:$0xff]
        %v1879 = vld [vmem:[#allocation3 + $0x44] sm:$0xf]
        %v1880 = vld [vmem:[#allocation3 + $0x48] sm:$0xff]
        %v1881 = vld [vmem:[#allocation3 + $0x50] sm:$0xf]
        %v1882 = vld [vmem:[#allocation3 + $0x54] sm:$0xff]
        %v1883 = vld [vmem:[#allocation3 + $0x5c] sm:$0xf]
        %v1884 = vld [vmem:[#allocation3 + $0x60] sm:$0xff]
        %v1885 = vld [vmem:[#allocation3 + $0x68] sm:$0xf]
        %v1886 = vld [vmem:[#allocation3 + $0x6c] sm:$0xff]
        %v1887 = vld [vmem:[#allocation3 + $0x74] sm:$0xf]
        %v1888 = vld [vmem:[#allocation3 + $0x78] sm:$0xff]
        %v1889 = vld [vmem:[#allocation3 + $0x80] sm:$0xf]
        %v1890 = vld [vmem:[#allocation3 + $0x84] sm:$0xff]
        %v1891 = vld [vmem:[#allocation3 + $0x8c] sm:$0xf]
        %v1892 = vld [vmem:[#allocation3 + $0x90] sm:$0xff]
        %v1893 = vld [vmem:[#allocation3 + $0x98] sm:$0xf]
        %v1894 = vld [vmem:[#allocation3 + $0x9c] sm:$0xff]
        %v1895 = vld [vmem:[#allocation3 + $0xa4] sm:$0xf]
        %v1896 = vld [vmem:[#allocation3 + $0xa8] sm:$0xff]
        %v1897 = vld [vmem:[#allocation3 + $0xb0] sm:$0xf]
        %v1898 = vld [vmem:[#allocation3 + $0xb4] sm:$0xff]
        %v1899 = vld [vmem:[#allocation3 + $0xbc] sm:$0xf]
        %v1900 = vld [vmem:[#allocation3 + $0xc0] sm:$0xff]
        %v1901 = vld [vmem:[#allocation3 + $0xc8] sm:$0xf]
        %v1902 = vld [vmem:[#allocation3 + $0xcc] sm:$0xff]
        %v1903 = vld [vmem:[#allocation3 + $0xd4] sm:$0xf]
        %v1904 = vld [vmem:[#allocation3 + $0xd8] sm:$0xff]
        %v1905 = vld [vmem:[#allocation3 + $0xe0] sm:$0xf]
        %v1906 = vld [vmem:[#allocation3 + $0xe4] sm:$0xff]
        %v1907 = vld [vmem:[#allocation3 + $0xec] sm:$0xf]
        %v1908 = vld [vmem:[#allocation3 + $0xf0] sm:$0xff]
        %v1909 = vld [vmem:[#allocation3 + $0xf8] sm:$0xf]
        %v1910 = vld [vmem:[#allocation3 + $0xfc] sm:$0xff]
        %v1911 = vld [vmem:[#allocation3 + $0x104] sm:$0xf]
        %v1912 = vld [vmem:[#allocation3 + $0x108] sm:$0xff]
        %v1913 = vld [vmem:[#allocation3 + $0x110] sm:$0xf]
        %v1914 = vld [vmem:[#allocation3 + $0x114] sm:$0xff]
        %v1915 = vld [vmem:[#allocation3 + $0x11c] sm:$0xf]
        %v1916 = vld [vmem:[#allocation3 + $0x120] sm:$0xff]
        %v1917 = vld [vmem:[#allocation3 + $0x128] sm:$0xf]
        %v1918 = vld [vmem:[#allocation3 + $0x12c] sm:$0xff]
        %v1919 = vld [vmem:[#allocation3 + $0x134] sm:$0xf]
        %v1920 = vld [vmem:[#allocation3 + $0x138] sm:$0xff]
        %v1921 = vld [vmem:[#allocation3 + $0x140] sm:$0xf]
        %v1922 = vld [vmem:[#allocation3 + $0x144] sm:$0xff]
        %v1923 = vld [vmem:[#allocation3 + $0x14c] sm:$0xf]
        %v1924 = vld [vmem:[#allocation3 + $0x150] sm:$0xff]
        %v1925 = vld [vmem:[#allocation3 + $0x158] sm:$0xf]
        %v1926 = vld [vmem:[#allocation3 + $0x15c] sm:$0xff]
        %v1927 = vld [vmem:[#allocation3 + $0x164] sm:$0xf]
        %v1928 = vld [vmem:[#allocation3 + $0x168] sm:$0xff]
        %v1929 = vld [vmem:[#allocation3 + $0x170] sm:$0xf]
        %v1930 = vld [vmem:[#allocation3 + $0x174] sm:$0xff]
        %v1931 = vld [vmem:[#allocation3 + $0x17c] sm:$0xf]
        %v1932 = vld [vmem:[#allocation3 + $0x180] sm:$0xff]
        %v1933 = vld [vmem:[#allocation3 + $0x188] sm:$0xf]
        %v1934 = vld [vmem:[#allocation3 + $0x18c] sm:$0xff]
        %v1935 = vld [vmem:[#allocation3 + $0x194] sm:$0xf]
        %v1936 = vld [vmem:[#allocation3 + $0x198] sm:$0xff]
        %v1937 = vld [vmem:[#allocation3 + $0x1a0] sm:$0xf]
        %v1938 = vld [vmem:[#allocation3 + $0x1a4] sm:$0xff]
        %v1939 = vld [vmem:[#allocation3 + $0x1ac] sm:$0xf]
        %v1940 = vld [vmem:[#allocation3 + $0x1b0] sm:$0xff]
        %v1941 = vld [vmem:[#allocation3 + $0x1b8] sm:$0xf]
        %v1942 = vld [vmem:[#allocation3 + $0x1bc] sm:$0xff]
        %v1943 = vld [vmem:[#allocation3 + $0x1c4] sm:$0xf]
        %v1944 = vld [vmem:[#allocation3 + $0x1c8] sm:$0xff]
        %v1945 = vld [vmem:[#allocation3 + $0x1d0] sm:$0xf]
        %v1946 = vld [vmem:[#allocation3 + $0x1d4] sm:$0xff]
        %v1947 = vld [vmem:[#allocation3 + $0x1dc] sm:$0xf]
        %v1948 = vld [vmem:[#allocation3 + $0x1e0] sm:$0xff]
        %v1949 = vld [vmem:[#allocation3 + $0x1e8] sm:$0xf]
        %v1950 = vld [vmem:[#allocation3 + $0x1ec] sm:$0xff]
        %v1951 = vld [vmem:[#allocation3 + $0x1f4] sm:$0xf]
        %v1952 = vld [vmem:[#allocation3 + $0x1f8] sm:$0xff]
        %v1953 = vld [vmem:[#allocation3 + $0x200] sm:$0xf]
        %v1954 = vld [vmem:[#allocation3 + $0x204] sm:$0xff]
        %v1955 = vld [vmem:[#allocation3 + $0x20c] sm:$0xf]
        %v1956 = vld [vmem:[#allocation3 + $0x210] sm:$0xff]
        %v1957 = vld [vmem:[#allocation3 + $0x218] sm:$0xf]
        %v1958 = vld [vmem:[#allocation3 + $0x21c] sm:$0xff]
        %v1959 = vld [vmem:[#allocation3 + $0x224] sm:$0xf]
        %v1960 = vld [vmem:[#allocation3 + $0x228] sm:$0xff]
        %v1961 = vld [vmem:[#allocation3 + $0x230] sm:$0xf]
        %v1962 = vld [vmem:[#allocation3 + $0x234] sm:$0xff]
        %v1963 = vld [vmem:[#allocation3 + $0x23c] sm:$0xf]
        %v1964 = vld [vmem:[#allocation3 + $0x240] sm:$0xff]
        %v1965 = vld [vmem:[#allocation3 + $0x248] sm:$0xf]
        %v1966 = vld [vmem:[#allocation3 + $0x24c] sm:$0xff]
        %v1967 = vld [vmem:[#allocation3 + $0x254] sm:$0xf]
        %v1968 = vld [vmem:[%s6] sm:$0x7]
        %v1970 = vlaneseq
        %v1971 = vshrl.u32 %v1970, 7
        %v1972 = vsub.s32 0, %v1971
        %v1973 = vrot.slane %v1968, %v1972
        %v1974 = vlaneseq
        %v1975 = vshrl.u32 %v1974, 7
        %v1976 = vsub.s32 1, %v1975
        %v1977 = vrot.slane %v1968, %v1976
        %v1978 = vlaneseq
        %v1979 = vshrl.u32 %v1978, 7
        %v1980 = vsub.s32 2, %v1979
        %v1981 = vrot.slane %v1968, %v1980
        %v2085 = vunpack.c.l.b16 %v1868
        %v2086 = vunpack.c.h.b16 %v1868
        %v2087 = vunpack.c.l.b16 %v1869
        %v2088 = vunpack.c.l.b16 %v1870
        %v2089 = vunpack.c.h.b16 %v1870
        %v2090 = vunpack.c.l.b16 %v1871
        %v2091 = vunpack.c.l.b16 %v1872
        %v2092 = vunpack.c.h.b16 %v1872
        %v2093 = vunpack.c.l.b16 %v1873
        %v2094 = vunpack.c.l.b16 %v1874
        %v2095 = vunpack.c.h.b16 %v1874
        %v2096 = vunpack.c.l.b16 %v1875
        %v2097 = vunpack.c.l.b16 %v1876
        %v2098 = vunpack.c.h.b16 %v1876
        %v2099 = vunpack.c.l.b16 %v1877
        %v2100 = vunpack.c.l.b16 %v1878
        %v2101 = vunpack.c.h.b16 %v1878
        %v2102 = vunpack.c.l.b16 %v1879
        %v2103 = vunpack.c.l.b16 %v1880
        %v2104 = vunpack.c.h.b16 %v1880
        %v2105 = vunpack.c.l.b16 %v1881
        %v2106 = vunpack.c.l.b16 %v1882
        %v2107 = vunpack.c.h.b16 %v1882
        %v2108 = vunpack.c.l.b16 %v1883
        %v2109 = vunpack.c.l.b16 %v1884
        %v2110 = vunpack.c.h.b16 %v1884
        %v2111 = vunpack.c.l.b16 %v1885
        %v2112 = vunpack.c.l.b16 %v1886
        %v2113 = vunpack.c.h.b16 %v1886
        %v2114 = vunpack.c.l.b16 %v1887
        %v2115 = vunpack.c.l.b16 %v1888
        %v2116 = vunpack.c.h.b16 %v1888
        %v2117 = vunpack.c.l.b16 %v1889
        %v2118 = vunpack.c.l.b16 %v1890
        %v2119 = vunpack.c.h.b16 %v1890
        %v2120 = vunpack.c.l.b16 %v1891
        %v2121 = vunpack.c.l.b16 %v1892
        %v2122 = vunpack.c.h.b16 %v1892
        %v2123 = vunpack.c.l.b16 %v1893
        %v2124 = vunpack.c.l.b16 %v1894
        %v2125 = vunpack.c.h.b16 %v1894
        %v2126 = vunpack.c.l.b16 %v1895
        %v2127 = vunpack.c.l.b16 %v1896
        %v2128 = vunpack.c.h.b16 %v1896
        %v2129 = vunpack.c.l.b16 %v1897
        %v2130 = vunpack.c.l.b16 %v1898
        %v2131 = vunpack.c.h.b16 %v1898
        %v2132 = vunpack.c.l.b16 %v1899
        %v2133 = vunpack.c.l.b16 %v1900
        %v2134 = vunpack.c.h.b16 %v1900
        %v2135 = vunpack.c.l.b16 %v1901
        %v2136 = vunpack.c.l.b16 %v1902
        %v2137 = vunpack.c.h.b16 %v1902
        %v2138 = vunpack.c.l.b16 %v1903
        %v2139 = vunpack.c.l.b16 %v1904
        %v2140 = vunpack.c.h.b16 %v1904
        %v2141 = vunpack.c.l.b16 %v1905
        %v2142 = vunpack.c.l.b16 %v1906
        %v2143 = vunpack.c.h.b16 %v1906
        %v2144 = vunpack.c.l.b16 %v1907
        %v2145 = vunpack.c.l.b16 %v1908
        %v2146 = vunpack.c.h.b16 %v1908
        %v2147 = vunpack.c.l.b16 %v1909
        %v2148 = vunpack.c.l.b16 %v1910
        %v2149 = vunpack.c.h.b16 %v1910
        %v2150 = vunpack.c.l.b16 %v1911
        %v2151 = vunpack.c.l.b16 %v1912
        %v2152 = vunpack.c.h.b16 %v1912
        %v2153 = vunpack.c.l.b16 %v1913
        %v2154 = vunpack.c.l.b16 %v1914
        %v2155 = vunpack.c.h.b16 %v1914
        %v2156 = vunpack.c.l.b16 %v1915
        %v2157 = vunpack.c.l.b16 %v1916
        %v2158 = vunpack.c.h.b16 %v1916
        %v2159 = vunpack.c.l.b16 %v1917
        %v2160 = vunpack.c.l.b16 %v1918
        %v2161 = vunpack.c.h.b16 %v1918
        %v2162 = vunpack.c.l.b16 %v1919
        %v2163 = vunpack.c.l.b16 %v1920
        %v2164 = vunpack.c.h.b16 %v1920
        %v2165 = vunpack.c.l.b16 %v1921
        %v2166 = vunpack.c.l.b16 %v1922
        %v2167 = vunpack.c.h.b16 %v1922
        %v2168 = vunpack.c.l.b16 %v1923
        %v2169 = vunpack.c.l.b16 %v1924
        %v2170 = vunpack.c.h.b16 %v1924
        %v2171 = vunpack.c.l.b16 %v1925
        %v2172 = vunpack.c.l.b16 %v1926
        %v2173 = vunpack.c.h.b16 %v1926
        %v2174 = vunpack.c.l.b16 %v1927
        %v2175 = vunpack.c.l.b16 %v1928
        %v2176 = vunpack.c.h.b16 %v1928
        %v2177 = vunpack.c.l.b16 %v1929
        %v2178 = vunpack.c.l.b16 %v1930
        %v2179 = vunpack.c.h.b16 %v1930
        %v2180 = vunpack.c.l.b16 %v1931
        %v2181 = vunpack.c.l.b16 %v1932
        %v2182 = vunpack.c.h.b16 %v1932
        %v2183 = vunpack.c.l.b16 %v1933
        %v2184 = vunpack.c.l.b16 %v1934
        %v2185 = vunpack.c.h.b16 %v1934
        %v2186 = vunpack.c.l.b16 %v1935
        %v2187 = vunpack.c.l.b16 %v1936
        %v2188 = vunpack.c.h.b16 %v1936
        %v2189 = vunpack.c.l.b16 %v1937
        %v2190 = vunpack.c.l.b16 %v1938
        %v2191 = vunpack.c.h.b16 %v1938
        %v2192 = vunpack.c.l.b16 %v1939
        %v2193 = vunpack.c.l.b16 %v1940
        %v2194 = vunpack.c.h.b16 %v1940
        %v2195 = vunpack.c.l.b16 %v1941
        %v2196 = vunpack.c.l.b16 %v1942
        %v2197 = vunpack.c.h.b16 %v1942
        %v2198 = vunpack.c.l.b16 %v1943
        %v2199 = vunpack.c.l.b16 %v1944
        %v2200 = vunpack.c.h.b16 %v1944
        %v2201 = vunpack.c.l.b16 %v1945
        %v2202 = vunpack.c.l.b16 %v1946
        %v2203 = vunpack.c.h.b16 %v1946
        %v2204 = vunpack.c.l.b16 %v1947
        %v2205 = vunpack.c.l.b16 %v1948
        %v2206 = vunpack.c.h.b16 %v1948
        %v2207 = vunpack.c.l.b16 %v1949
        %v2208 = vunpack.c.l.b16 %v1950
        %v2209 = vunpack.c.h.b16 %v1950
        %v2210 = vunpack.c.l.b16 %v1951
        %v2211 = vunpack.c.l.b16 %v1952
        %v2212 = vunpack.c.h.b16 %v1952
        %v2213 = vunpack.c.l.b16 %v1953
        %v2214 = vunpack.c.l.b16 %v1954
        %v2215 = vunpack.c.h.b16 %v1954
        %v2216 = vunpack.c.l.b16 %v1955
        %v2217 = vunpack.c.l.b16 %v1956
        %v2218 = vunpack.c.h.b16 %v1956
        %v2219 = vunpack.c.l.b16 %v1957
        %v2220 = vunpack.c.l.b16 %v1958
        %v2221 = vunpack.c.h.b16 %v1958
        %v2222 = vunpack.c.l.b16 %v1959
        %v2223 = vunpack.c.l.b16 %v1960
        %v2224 = vunpack.c.h.b16 %v1960
        %v2225 = vunpack.c.l.b16 %v1961
        %v2226 = vunpack.c.l.b16 %v1962
        %v2227 = vunpack.c.h.b16 %v1962
        %v2228 = vunpack.c.l.b16 %v1963
        %v2229 = vunpack.c.l.b16 %v1964
        %v2230 = vunpack.c.h.b16 %v1964
        %v2231 = vunpack.c.l.b16 %v1965
        %v2232 = vunpack.c.l.b16 %v1966
        %v2233 = vunpack.c.h.b16 %v1966
        %v2234 = vunpack.c.l.b16 %v1967
        %v2235 = vpack.c.b16 %v2088, %v2085
        %v2236 = vpack.c.b16 %v2089, %v2086
        %v2237 = vpack.c.b16 %v2090, %v2087
        %v2238 = vpack.c.b16 %v2094, %v2091
        %v2239 = vpack.c.b16 %v2095, %v2092
        %v2240 = vpack.c.b16 %v2096, %v2093
        %v2241 = vpack.c.b16 %v2100, %v2097
        %v2242 = vpack.c.b16 %v2101, %v2098
        %v2243 = vpack.c.b16 %v2102, %v2099
        %v2244 = vpack.c.b16 %v2106, %v2103
        %v2245 = vpack.c.b16 %v2107, %v2104
        %v2246 = vpack.c.b16 %v2108, %v2105
        %v2247 = vpack.c.b16 %v2112, %v2109
        %v2248 = vpack.c.b16 %v2113, %v2110
        %v2249 = vpack.c.b16 %v2114, %v2111
        %v2250 = vpack.c.b16 %v2118, %v2115
        %v2251 = vpack.c.b16 %v2119, %v2116
        %v2252 = vpack.c.b16 %v2120, %v2117
        %v2253 = vpack.c.b16 %v2124, %v2121
        %v2254 = vpack.c.b16 %v2125, %v2122
        %v2255 = vpack.c.b16 %v2126, %v2123
        %v2256 = vpack.c.b16 %v2130, %v2127
        %v2257 = vpack.c.b16 %v2131, %v2128
        %v2258 = vpack.c.b16 %v2132, %v2129
        %v2259 = vpack.c.b16 %v2136, %v2133
        %v2260 = vpack.c.b16 %v2137, %v2134
        %v2261 = vpack.c.b16 %v2138, %v2135
        %v2262 = vpack.c.b16 %v2142, %v2139
        %v2263 = vpack.c.b16 %v2143, %v2140
        %v2264 = vpack.c.b16 %v2144, %v2141
        %v2265 = vpack.c.b16 %v2148, %v2145
        %v2266 = vpack.c.b16 %v2149, %v2146
        %v2267 = vpack.c.b16 %v2150, %v2147
        %v2268 = vpack.c.b16 %v2154, %v2151
        %v2269 = vpack.c.b16 %v2155, %v2152
        %v2270 = vpack.c.b16 %v2156, %v2153
        %v2271 = vpack.c.b16 %v2160, %v2157
        %v2272 = vpack.c.b16 %v2161, %v2158
        %v2273 = vpack.c.b16 %v2162, %v2159
        %v2274 = vpack.c.b16 %v2166, %v2163
        %v2275 = vpack.c.b16 %v2167, %v2164
        %v2276 = vpack.c.b16 %v2168, %v2165
        %v2277 = vpack.c.b16 %v2172, %v2169
        %v2278 = vpack.c.b16 %v2173, %v2170
        %v2279 = vpack.c.b16 %v2174, %v2171
        %v2280 = vpack.c.b16 %v2178, %v2175
        %v2281 = vpack.c.b16 %v2179, %v2176
        %v2282 = vpack.c.b16 %v2180, %v2177
        %v2283 = vpack.c.b16 %v2184, %v2181
        %v2284 = vpack.c.b16 %v2185, %v2182
        %v2285 = vpack.c.b16 %v2186, %v2183
        %v2286 = vpack.c.b16 %v2190, %v2187
        %v2287 = vpack.c.b16 %v2191, %v2188
        %v2288 = vpack.c.b16 %v2192, %v2189
        %v2289 = vpack.c.b16 %v2196, %v2193
        %v2290 = vpack.c.b16 %v2197, %v2194
        %v2291 = vpack.c.b16 %v2198, %v2195
        %v2292 = vpack.c.b16 %v2202, %v2199
        %v2293 = vpack.c.b16 %v2203, %v2200
        %v2294 = vpack.c.b16 %v2204, %v2201
        %v2295 = vpack.c.b16 %v2208, %v2205
        %v2296 = vpack.c.b16 %v2209, %v2206
        %v2297 = vpack.c.b16 %v2210, %v2207
        %v2298 = vpack.c.b16 %v2214, %v2211
        %v2299 = vpack.c.b16 %v2215, %v2212
        %v2300 = vpack.c.b16 %v2216, %v2213
        %v2301 = vpack.c.b16 %v2220, %v2217
        %v2302 = vpack.c.b16 %v2221, %v2218
        %v2303 = vpack.c.b16 %v2222, %v2219
        %v2304 = vpack.c.b16 %v2226, %v2223
        %v2305 = vpack.c.b16 %v2227, %v2224
        %v2306 = vpack.c.b16 %v2228, %v2225
        %v2307 = vpack.c.b16 %v2232, %v2229
        %v2308 = vpack.c.b16 %v2233, %v2230
        %v2309 = vpack.c.b16 %v2234, %v2231
        %v2386 = vsel %vm1154, %v1839, 0
        %v2389 = vsel %vm1154, %v1843, 0
        %v2392 = vsel %vm1154, %v1847, 0
        %v2395 = vsel %vm1154, %v1851, 0
        %v2398 = vsel %vm1154, %v1855, 0
        %v2401 = vsel %vm1154, %v1859, 0
        %v2404 = vsel %vm1154, %v1863, 0
        %v2407 = vsel %vm1154, %v1867, 0
        %2409 = vmatprep.subr.bf16.mxu0 %v2257
        %2410 = vmatpush1.bf16.msra.mxu0 %v2256
        %2411 = vmatprep.subr.bf16.mxu0 %v2254
        %2412 = vmatpush1.bf16.msra.mxu0 %v2253
        %2413 = vmatprep.subr.bf16.mxu0 %v2251
        %2414 = vmatpush1.bf16.msra.mxu0 %v2250
        %2415 = vmatprep.subr.bf16.mxu0 %v2248
        %2416 = vmatpush1.bf16.msra.mxu0 %v2247
        %2417 = vmatprep.subr.bf16.mxu0 %v2245
        %2418 = vmatpush1.bf16.msra.mxu0 %v2244
        %2419 = vmatprep.subr.bf16.mxu0 %v2242
        %2420 = vmatpush1.bf16.msra.mxu0 %v2241
        %2421 = vmatprep.subr.bf16.mxu0 %v2239
        %2422 = vmatpush1.bf16.msra.mxu0 %v2238
        %2423 = vmatprep.subr.bf16.mxu0 %v2236
        %2424 = vmatpush1.bf16.msra.mxu0 %v2235
        %2425 = vmatprep.subr.bf16.mxu0 %v2281
        %2426 = vmatpush2.bf16.msra.mxu0 %v2280
        %2427 = vmatprep.subr.bf16.mxu0 %v2278
        %2428 = vmatpush2.bf16.msra.mxu0 %v2277
        %2429 = vmatprep.subr.bf16.mxu0 %v2275
        %2430 = vmatpush2.bf16.msra.mxu0 %v2274
        %2431 = vmatprep.subr.bf16.mxu0 %v2272
        %2432 = vmatpush2.bf16.msra.mxu0 %v2271
        %2433 = vmatprep.subr.bf16.mxu0 %v2269
        %2434 = vmatpush2.bf16.msra.mxu0 %v2268
        %2435 = vmatprep.subr.bf16.mxu0 %v2266
        %2436 = vmatpush2.bf16.msra.mxu0 %v2265
        %2437 = vmatprep.subr.bf16.mxu0 %v2263
        %2438 = vmatpush2.bf16.msra.mxu0 %v2262
        %2439 = vmatprep.subr.bf16.mxu0 %v2260
        %2440 = vmatpush2.bf16.msra.mxu0 %v2259
        %2441 = vmatprep.mubr.bf16.mxu0 %v1837
        %2442 = vmatmul.mubr.bf16.gmra.mxu0 %v1836
        %v2443 = vpop.f32.mrf.mxu0
        %v2444 = vadd.f32 %v1973, %v2443
        %v2445 = vpop.f32.mrf.mxu0
        %v2446 = vadd.f32 %v1977, %v2445
        %v2447 = vpop.f32.mrf.mxu0
        %v2448 = vadd.f32 %v1973, %v2447
        %v2449 = vpop.f32.mrf.mxu0
        %v2450 = vadd.f32 %v1977, %v2449
        %2451 = vmatprep.mubr.bf16.mxu0 %v1841
        %2452 = vmatmul.mubr.bf16.gmra.mxu0 %v1840
        %v2453 = vpop.f32.mrf.mxu0
        %v2454 = vadd.f32 %v1973, %v2453
        %v2455 = vpop.f32.mrf.mxu0
        %v2456 = vadd.f32 %v1977, %v2455
        %v2457 = vpop.f32.mrf.mxu0
        %v2458 = vadd.f32 %v1973, %v2457
        %v2459 = vpop.f32.mrf.mxu0
        %v2460 = vadd.f32 %v1977, %v2459
        %2461 = vmatprep.mubr.bf16.mxu0 %v1845
        %2462 = vmatmul.mubr.bf16.gmra.mxu0 %v1844
        %v2463 = vpop.f32.mrf.mxu0
        %v2464 = vadd.f32 %v1973, %v2463
        %v2465 = vpop.f32.mrf.mxu0
        %v2466 = vadd.f32 %v1977, %v2465
        %v2467 = vpop.f32.mrf.mxu0
        %v2468 = vadd.f32 %v1973, %v2467
        %v2469 = vpop.f32.mrf.mxu0
        %v2470 = vadd.f32 %v1977, %v2469
        %2471 = vmatprep.mubr.bf16.mxu0 %v1849
        %2472 = vmatmul.mubr.bf16.gmra.mxu0 %v1848
        %v2473 = vpop.f32.mrf.mxu0
        %v2474 = vadd.f32 %v1973, %v2473
        %v2475 = vpop.f32.mrf.mxu0
        %v2476 = vadd.f32 %v1977, %v2475
        %v2477 = vpop.f32.mrf.mxu0
        %v2478 = vadd.f32 %v1973, %v2477
        %v2479 = vpop.f32.mrf.mxu0
        %v2480 = vadd.f32 %v1977, %v2479
        %2481 = vmatprep.mubr.bf16.mxu0 %v1853
        %2482 = vmatmul.mubr.bf16.gmra.mxu0 %v1852
        %v2483 = vpop.f32.mrf.mxu0
        %v2484 = vadd.f32 %v1973, %v2483
        %v2485 = vpop.f32.mrf.mxu0
        %v2486 = vadd.f32 %v1977, %v2485
        %v2487 = vpop.f32.mrf.mxu0
        %v2488 = vadd.f32 %v1973, %v2487
        %v2489 = vpop.f32.mrf.mxu0
        %v2490 = vadd.f32 %v1977, %v2489
        %2491 = vmatprep.mubr.bf16.mxu0 %v1857
        %2492 = vmatmul.mubr.bf16.gmra.mxu0 %v1856
        %v2493 = vpop.f32.mrf.mxu0
        %v2494 = vadd.f32 %v1973, %v2493
        %v2495 = vpop.f32.mrf.mxu0
        %v2496 = vadd.f32 %v1977, %v2495
        %v2497 = vpop.f32.mrf.mxu0
        %v2498 = vadd.f32 %v1973, %v2497
        %v2499 = vpop.f32.mrf.mxu0
        %v2500 = vadd.f32 %v1977, %v2499
        %2501 = vmatprep.mubr.bf16.mxu0 %v1861
        %2502 = vmatmul.mubr.bf16.gmra.mxu0 %v1860
        %v2503 = vpop.f32.mrf.mxu0
        %v2504 = vadd.f32 %v1973, %v2503
        %v2505 = vpop.f32.mrf.mxu0
        %v2506 = vadd.f32 %v1977, %v2505
        %v2507 = vpop.f32.mrf.mxu0
        %v2508 = vadd.f32 %v1973, %v2507
        %v2509 = vpop.f32.mrf.mxu0
        %v2510 = vadd.f32 %v1977, %v2509
        %2511 = vmatprep.mubr.bf16.mxu0 %v1865
        %2512 = vmatmul.mubr.bf16.gmra.mxu0 %v1864
        %v2513 = vpop.f32.mrf.mxu0
        %v2514 = vadd.f32 %v1973, %v2513
        %v2515 = vpop.f32.mrf.mxu0
        %v2516 = vadd.f32 %v1977, %v2515
        %v2517 = vpop.f32.mrf.mxu0
        %v2518 = vadd.f32 %v1973, %v2517
        %v2519 = vpop.f32.mrf.mxu0
        %v2520 = vadd.f32 %v1977, %v2519
        %2521 = vdwg.mxu0
        %2522 = vmatprep.subr.bf16.mxu0 %v2305
        %2523 = vmatpush1.bf16.msra.mxu0 %v2304
        %2524 = vmatprep.subr.bf16.mxu0 %v2302
        %2525 = vmatpush1.bf16.msra.mxu0 %v2301
        %2526 = vmatprep.subr.bf16.mxu0 %v2299
        %2527 = vmatpush1.bf16.msra.mxu0 %v2298
        %2528 = vmatprep.subr.bf16.mxu0 %v2296
        %2529 = vmatpush1.bf16.msra.mxu0 %v2295
        %2530 = vmatprep.subr.bf16.mxu0 %v2293
        %2531 = vmatpush1.bf16.msra.mxu0 %v2292
        %2532 = vmatprep.subr.bf16.mxu0 %v2290
        %2533 = vmatpush1.bf16.msra.mxu0 %v2289
        %2534 = vmatprep.subr.bf16.mxu0 %v2287
        %2535 = vmatpush1.bf16.msra.mxu0 %v2286
        %2536 = vmatprep.subr.bf16.mxu0 %v2284
        %2537 = vmatpush1.bf16.msra.mxu0 %v2283
        %2538 = vmatprep.subr.bf16.mxu0 0
        %2539 = vmatpush2.bf16.msra.mxu0 0
        %2540 = vmatprep.subr.bf16.mxu0 0
        %2541 = vmatpush2.bf16.msra.mxu0 0
        %2542 = vmatprep.subr.bf16.mxu0 0
        %2543 = vmatpush2.bf16.msra.mxu0 0
        %2544 = vmatprep.subr.bf16.mxu0 0
        %2545 = vmatpush2.bf16.msra.mxu0 0
        %2546 = vmatprep.subr.bf16.mxu0 0
        %2547 = vmatpush2.bf16.msra.mxu0 0
        %2548 = vmatprep.subr.bf16.mxu0 0
        %2549 = vmatpush2.bf16.msra.mxu0 0
        %2550 = vmatprep.subr.bf16.mxu0 0
        %2551 = vmatpush2.bf16.msra.mxu0 0
        %2552 = vmatprep.subr.bf16.mxu0 %v2308
        %2553 = vmatpush2.bf16.msra.mxu0 %v2307
        %2554 = vmatprep.mubr.bf16.mxu0 %v2386
        %2555 = vmatmul.mubr.bf16.gmra.mxu0 %v1838
        %v2556 = vpop.f32.mrf.mxu0
        %v2557 = vadd.f32 %v2444, %v2556
        %v2558 = vpop.f32.mrf.mxu0
        %v2559 = vadd.f32 %v2446, %v2558
        %v2560 = vpop.f32.mrf.mxu0
        %v2561 = vadd.f32 %v2448, %v2560
        %v2562 = vpop.f32.mrf.mxu0
        %v2563 = vadd.f32 %v2450, %v2562
        %2564 = vmatprep.mubr.bf16.mxu0 %v2389
        %2565 = vmatmul.mubr.bf16.gmra.mxu0 %v1842
        %v2566 = vpop.f32.mrf.mxu0
        %v2567 = vadd.f32 %v2454, %v2566
        %v2568 = vpop.f32.mrf.mxu0
        %v2569 = vadd.f32 %v2456, %v2568
        %v2570 = vpop.f32.mrf.mxu0
        %v2571 = vadd.f32 %v2458, %v2570
        %v2572 = vpop.f32.mrf.mxu0
        %v2573 = vadd.f32 %v2460, %v2572
        %2574 = vmatprep.mubr.bf16.mxu0 %v2392
        %2575 = vmatmul.mubr.bf16.gmra.mxu0 %v1846
        %v2576 = vpop.f32.mrf.mxu0
        %v2577 = vadd.f32 %v2464, %v2576
        %v2578 = vpop.f32.mrf.mxu0
        %v2579 = vadd.f32 %v2466, %v2578
        %v2580 = vpop.f32.mrf.mxu0
        %v2581 = vadd.f32 %v2468, %v2580
        %v2582 = vpop.f32.mrf.mxu0
        %v2583 = vadd.f32 %v2470, %v2582
        %2584 = vmatprep.mubr.bf16.mxu0 %v2395
        %2585 = vmatmul.mubr.bf16.gmra.mxu0 %v1850
        %v2586 = vpop.f32.mrf.mxu0
        %v2587 = vadd.f32 %v2474, %v2586
        %v2588 = vpop.f32.mrf.mxu0
        %v2589 = vadd.f32 %v2476, %v2588
        %v2590 = vpop.f32.mrf.mxu0
        %v2591 = vadd.f32 %v2478, %v2590
        %v2592 = vpop.f32.mrf.mxu0
        %v2593 = vadd.f32 %v2480, %v2592
        %2594 = vmatprep.mubr.bf16.mxu0 %v2398
        %2595 = vmatmul.mubr.bf16.gmra.mxu0 %v1854
        %v2596 = vpop.f32.mrf.mxu0
        %v2597 = vadd.f32 %v2484, %v2596
        %v2598 = vpop.f32.mrf.mxu0
        %v2599 = vadd.f32 %v2486, %v2598
        %v2600 = vpop.f32.mrf.mxu0
        %v2601 = vadd.f32 %v2488, %v2600
        %v2602 = vpop.f32.mrf.mxu0
        %v2603 = vadd.f32 %v2490, %v2602
        %2604 = vmatprep.mubr.bf16.mxu0 %v2401
        %2605 = vmatmul.mubr.bf16.gmra.mxu0 %v1858
        %v2606 = vpop.f32.mrf.mxu0
        %v2607 = vadd.f32 %v2494, %v2606
        %v2608 = vpop.f32.mrf.mxu0
        %v2609 = vadd.f32 %v2496, %v2608
        %v2610 = vpop.f32.mrf.mxu0
        %v2611 = vadd.f32 %v2498, %v2610
        %v2612 = vpop.f32.mrf.mxu0
        %v2613 = vadd.f32 %v2500, %v2612
        %2614 = vmatprep.mubr.bf16.mxu0 %v2404
        %2615 = vmatmul.mubr.bf16.gmra.mxu0 %v1862
        %v2616 = vpop.f32.mrf.mxu0
        %v2617 = vadd.f32 %v2504, %v2616
        %v2618 = vpop.f32.mrf.mxu0
        %v2619 = vadd.f32 %v2506, %v2618
        %v2620 = vpop.f32.mrf.mxu0
        %v2621 = vadd.f32 %v2508, %v2620
        %v2622 = vpop.f32.mrf.mxu0
        %v2623 = vadd.f32 %v2510, %v2622
        %2624 = vmatprep.mubr.bf16.mxu0 %v2407
        %2625 = vmatmul.mubr.bf16.gmra.mxu0 %v1866
        %v2626 = vpop.f32.mrf.mxu0
        %v2627 = vadd.f32 %v2514, %v2626
        %v2628 = vpop.f32.mrf.mxu0
        %v2629 = vadd.f32 %v2516, %v2628
        %v2630 = vpop.f32.mrf.mxu0
        %v2631 = vadd.f32 %v2518, %v2630
        %v2632 = vpop.f32.mrf.mxu0
        %v2633 = vadd.f32 %v2520, %v2632
        %2634 = vdwg.mxu0
        %2635 = vmatprep.subr.bf16.mxu0 0
        %2636 = vmatpush1.bf16.msra.mxu0 %v2258
        %2637 = vmatprep.subr.bf16.mxu0 0
        %2638 = vmatpush1.bf16.msra.mxu0 %v2255
        %2639 = vmatprep.subr.bf16.mxu0 0
        %2640 = vmatpush1.bf16.msra.mxu0 %v2252
        %2641 = vmatprep.subr.bf16.mxu0 0
        %2642 = vmatpush1.bf16.msra.mxu0 %v2249
        %2643 = vmatprep.subr.bf16.mxu0 0
        %2644 = vmatpush1.bf16.msra.mxu0 %v2246
        %2645 = vmatprep.subr.bf16.mxu0 0
        %2646 = vmatpush1.bf16.msra.mxu0 %v2243
        %2647 = vmatprep.subr.bf16.mxu0 0
        %2648 = vmatpush1.bf16.msra.mxu0 %v2240
        %2649 = vmatprep.subr.bf16.mxu0 0
        %2650 = vmatpush1.bf16.msra.mxu0 %v2237
        %2651 = vmatprep.subr.bf16.mxu0 0
        %2652 = vmatpush2.bf16.msra.mxu0 %v2282
        %2653 = vmatprep.subr.bf16.mxu0 0
        %2654 = vmatpush2.bf16.msra.mxu0 %v2279
        %2655 = vmatprep.subr.bf16.mxu0 0
        %2656 = vmatpush2.bf16.msra.mxu0 %v2276
        %2657 = vmatprep.subr.bf16.mxu0 0
        %2658 = vmatpush2.bf16.msra.mxu0 %v2273
        %2659 = vmatprep.subr.bf16.mxu0 0
        %2660 = vmatpush2.bf16.msra.mxu0 %v2270
        %2661 = vmatprep.subr.bf16.mxu0 0
        %2662 = vmatpush2.bf16.msra.mxu0 %v2267
        %2663 = vmatprep.subr.bf16.mxu0 0
        %2664 = vmatpush2.bf16.msra.mxu0 %v2264
        %2665 = vmatprep.subr.bf16.mxu0 0
        %2666 = vmatpush2.bf16.msra.mxu0 %v2261
        %2667 = vmatprep.mubr.bf16.mxu0 %v1837
        %2668 = vmatmul.mubr.bf16.gmra.mxu0 %v1836
        %v2669 = vpop.f32.mrf.mxu0
        %v2670 = vadd.f32 %v1981, %v2669
        %v2671 = vpop.f32.mrf.mxu0
        %v2672 = vpop.f32.mrf.mxu0
        %v2673 = vadd.f32 %v1981, %v2672
        %v2674 = vpop.f32.mrf.mxu0
        %2675 = vmatprep.mubr.bf16.mxu0 %v1841
        %2676 = vmatmul.mubr.bf16.gmra.mxu0 %v1840
        %v2677 = vpop.f32.mrf.mxu0
        %v2678 = vadd.f32 %v1981, %v2677
        %v2679 = vpop.f32.mrf.mxu0
        %v2680 = vpop.f32.mrf.mxu0
        %v2681 = vadd.f32 %v1981, %v2680
        %v2682 = vpop.f32.mrf.mxu0
        %2683 = vmatprep.mubr.bf16.mxu0 %v1845
        %2684 = vmatmul.mubr.bf16.gmra.mxu0 %v1844
        %v2685 = vpop.f32.mrf.mxu0
        %v2686 = vadd.f32 %v1981, %v2685
        %v2687 = vpop.f32.mrf.mxu0
        %v2688 = vpop.f32.mrf.mxu0
        %v2689 = vadd.f32 %v1981, %v2688
        %v2690 = vpop.f32.mrf.mxu0
        %2691 = vmatprep.mubr.bf16.mxu0 %v1849
        %2692 = vmatmul.mubr.bf16.gmra.mxu0 %v1848
        %v2693 = vpop.f32.mrf.mxu0
        %v2694 = vadd.f32 %v1981, %v2693
        %v2695 = vpop.f32.mrf.mxu0
        %v2696 = vpop.f32.mrf.mxu0
        %v2697 = vadd.f32 %v1981, %v2696
        %v2698 = vpop.f32.mrf.mxu0
        %2699 = vmatprep.mubr.bf16.mxu0 %v1853
        %2700 = vmatmul.mubr.bf16.gmra.mxu0 %v1852
        %v2701 = vpop.f32.mrf.mxu0
        %v2702 = vadd.f32 %v1981, %v2701
        %v2703 = vpop.f32.mrf.mxu0
        %v2704 = vpop.f32.mrf.mxu0
        %v2705 = vadd.f32 %v1981, %v2704
        %v2706 = vpop.f32.mrf.mxu0
        %2707 = vmatprep.mubr.bf16.mxu0 %v1857
        %2708 = vmatmul.mubr.bf16.gmra.mxu0 %v1856
        %v2709 = vpop.f32.mrf.mxu0
        %v2710 = vadd.f32 %v1981, %v2709
        %v2711 = vpop.f32.mrf.mxu0
        %v2712 = vpop.f32.mrf.mxu0
        %v2713 = vadd.f32 %v1981, %v2712
        %v2714 = vpop.f32.mrf.mxu0
        %2715 = vmatprep.mubr.bf16.mxu0 %v1861
        %2716 = vmatmul.mubr.bf16.gmra.mxu0 %v1860
        %v2717 = vpop.f32.mrf.mxu0
        %v2718 = vadd.f32 %v1981, %v2717
        %v2719 = vpop.f32.mrf.mxu0
        %v2720 = vpop.f32.mrf.mxu0
        %v2721 = vadd.f32 %v1981, %v2720
        %v2722 = vpop.f32.mrf.mxu0
        %2723 = vmatprep.mubr.bf16.mxu0 %v1865
        %2724 = vmatmul.mubr.bf16.gmra.mxu0 %v1864
        %v2725 = vpop.f32.mrf.mxu0
        %v2726 = vadd.f32 %v1981, %v2725
        %v2727 = vpop.f32.mrf.mxu0
        %v2728 = vpop.f32.mrf.mxu0
        %v2729 = vadd.f32 %v1981, %v2728
        %v2730 = vpop.f32.mrf.mxu0
        %2731 = vdwg.mxu0
        %2732 = vmatprep.subr.bf16.mxu0 0
        %2733 = vmatpush1.bf16.msra.mxu0 %v2306
        %2734 = vmatprep.subr.bf16.mxu0 0
        %2735 = vmatpush1.bf16.msra.mxu0 %v2303
        %2736 = vmatprep.subr.bf16.mxu0 0
        %2737 = vmatpush1.bf16.msra.mxu0 %v2300
        %2738 = vmatprep.subr.bf16.mxu0 0
        %2739 = vmatpush1.bf16.msra.mxu0 %v2297
        %2740 = vmatprep.subr.bf16.mxu0 0
        %2741 = vmatpush1.bf16.msra.mxu0 %v2294
        %2742 = vmatprep.subr.bf16.mxu0 0
        %2743 = vmatpush1.bf16.msra.mxu0 %v2291
        %2744 = vmatprep.subr.bf16.mxu0 0
        %2745 = vmatpush1.bf16.msra.mxu0 %v2288
        %2746 = vmatprep.subr.bf16.mxu0 0
        %2747 = vmatpush1.bf16.msra.mxu0 %v2285
        %2748 = vmatprep.subr.bf16.mxu0 0
        %2749 = vmatpush2.bf16.msra.mxu0 0
        %2750 = vmatprep.subr.bf16.mxu0 0
        %2751 = vmatpush2.bf16.msra.mxu0 0
        %2752 = vmatprep.subr.bf16.mxu0 0
        %2753 = vmatpush2.bf16.msra.mxu0 0
        %2754 = vmatprep.subr.bf16.mxu0 0
        %2755 = vmatpush2.bf16.msra.mxu0 0
        %2756 = vmatprep.subr.bf16.mxu0 0
        %2757 = vmatpush2.bf16.msra.mxu0 0
        %2758 = vmatprep.subr.bf16.mxu0 0
        %2759 = vmatpush2.bf16.msra.mxu0 0
        %2760 = vmatprep.subr.bf16.mxu0 0
        %2761 = vmatpush2.bf16.msra.mxu0 0
        %2762 = vmatprep.subr.bf16.mxu0 0
        %2763 = vmatpush2.bf16.msra.mxu0 %v2309
        %2764 = vmatprep.mubr.bf16.mxu0 %v2386
        %2765 = vmatmul.mubr.bf16.gmra.mxu0 %v1838
        %v2766 = vpop.f32.mrf.mxu0
        %v2767 = vadd.f32 %v2670, %v2766
        %v2768 = vpop.f32.mrf.mxu0
        %v2769 = vpop.f32.mrf.mxu0
        %v2770 = vadd.f32 %v2673, %v2769
        %v2771 = vpop.f32.mrf.mxu0
        %2772 = vmatprep.mubr.bf16.mxu0 %v2389
        %2773 = vmatmul.mubr.bf16.gmra.mxu0 %v1842
        %v2774 = vpop.f32.mrf.mxu0
        %v2775 = vadd.f32 %v2678, %v2774
        %v2776 = vpop.f32.mrf.mxu0
        %v2777 = vpop.f32.mrf.mxu0
        %v2778 = vadd.f32 %v2681, %v2777
        %v2779 = vpop.f32.mrf.mxu0
        %2780 = vmatprep.mubr.bf16.mxu0 %v2392
        %2781 = vmatmul.mubr.bf16.gmra.mxu0 %v1846
        %v2782 = vpop.f32.mrf.mxu0
        %v2783 = vadd.f32 %v2686, %v2782
        %v2784 = vpop.f32.mrf.mxu0
        %v2785 = vpop.f32.mrf.mxu0
        %v2786 = vadd.f32 %v2689, %v2785
        %v2787 = vpop.f32.mrf.mxu0
        %2788 = vmatprep.mubr.bf16.mxu0 %v2395
        %2789 = vmatmul.mubr.bf16.gmra.mxu0 %v1850
        %v2790 = vpop.f32.mrf.mxu0
        %v2791 = vadd.f32 %v2694, %v2790
        %v2792 = vpop.f32.mrf.mxu0
        %v2793 = vpop.f32.mrf.mxu0
        %v2794 = vadd.f32 %v2697, %v2793
        %v2795 = vpop.f32.mrf.mxu0
        %2796 = vmatprep.mubr.bf16.mxu0 %v2398
        %2797 = vmatmul.mubr.bf16.gmra.mxu0 %v1854
        %v2798 = vpop.f32.mrf.mxu0
        %v2799 = vadd.f32 %v2702, %v2798
        %v2800 = vpop.f32.mrf.mxu0
        %v2801 = vpop.f32.mrf.mxu0
        %v2802 = vadd.f32 %v2705, %v2801
        %v2803 = vpop.f32.mrf.mxu0
        %2804 = vmatprep.mubr.bf16.mxu0 %v2401
        %2805 = vmatmul.mubr.bf16.gmra.mxu0 %v1858
        %v2806 = vpop.f32.mrf.mxu0
        %v2807 = vadd.f32 %v2710, %v2806
        %v2808 = vpop.f32.mrf.mxu0
        %v2809 = vpop.f32.mrf.mxu0
        %v2810 = vadd.f32 %v2713, %v2809
        %v2811 = vpop.f32.mrf.mxu0
        %2812 = vmatprep.mubr.bf16.mxu0 %v2404
        %2813 = vmatmul.mubr.bf16.gmra.mxu0 %v1862
        %v2814 = vpop.f32.mrf.mxu0
        %v2815 = vadd.f32 %v2718, %v2814
        %v2816 = vpop.f32.mrf.mxu0
        %v2817 = vpop.f32.mrf.mxu0
        %v2818 = vadd.f32 %v2721, %v2817
        %v2819 = vpop.f32.mrf.mxu0
        %2820 = vmatprep.mubr.bf16.mxu0 %v2407
        %2821 = vmatmul.mubr.bf16.gmra.mxu0 %v1866
        %v2822 = vpop.f32.mrf.mxu0
        %v2823 = vadd.f32 %v2726, %v2822
        %v2824 = vpop.f32.mrf.mxu0
        %v2825 = vpop.f32.mrf.mxu0
        %v2826 = vadd.f32 %v2729, %v2825
        %v2827 = vpop.f32.mrf.mxu0
        %2828 = vdwg.mxu0
        %v2829 = vld [vmem:[%s7] sm:$0x7]
        %v2830 = vld [vmem:[%s8] sm:$0x7]
        %v2831 = vadd.f32 %v2557, %v2559
        %vm2832 = vcmask 359424
        %v2833 = vsel %vm2832, %v2767, 0.0
        %v2834 = vadd.f32 %v2831, %v2833
        %2835 = vadd.xlane.f32.xlu0 %v2834
        %v2836 = vpop.xlane.xlu0 %2835
        %v2837 = vadd.f32 %v2561, %v2563
        %v2838 = vsel %vm2832, %v2770, 0.0
        %v2839 = vadd.f32 %v2837, %v2838
        %2840 = vadd.xlane.f32.xlu0 %v2839
        %v2841 = vpop.xlane.xlu0 %2840
        %v2842 = vadd.f32 %v2567, %v2569
        %v2843 = vsel %vm2832, %v2775, 0.0
        %v2844 = vadd.f32 %v2842, %v2843
        %2845 = vadd.xlane.f32.xlu0 %v2844
        %v2846 = vpop.xlane.xlu0 %2845
        %v2847 = vadd.f32 %v2571, %v2573
        %v2848 = vsel %vm2832, %v2778, 0.0
        %v2849 = vadd.f32 %v2847, %v2848
        %2850 = vadd.xlane.f32.xlu0 %v2849
        %v2851 = vpop.xlane.xlu0 %2850
        %v2852 = vadd.f32 %v2577, %v2579
        %v2853 = vsel %vm2832, %v2783, 0.0
        %v2854 = vadd.f32 %v2852, %v2853
        %2855 = vadd.xlane.f32.xlu0 %v2854
        %v2856 = vpop.xlane.xlu0 %2855
        %v2857 = vadd.f32 %v2581, %v2583
        %v2858 = vsel %vm2832, %v2786, 0.0
        %v2859 = vadd.f32 %v2857, %v2858
        %2860 = vadd.xlane.f32.xlu0 %v2859
        %v2861 = vpop.xlane.xlu0 %2860
        %v2862 = vadd.f32 %v2587, %v2589
        %v2863 = vsel %vm2832, %v2791, 0.0
        %v2864 = vadd.f32 %v2862, %v2863
        %2865 = vadd.xlane.f32.xlu0 %v2864
        %v2866 = vpop.xlane.xlu0 %2865
        %v2867 = vadd.f32 %v2591, %v2593
        %v2868 = vsel %vm2832, %v2794, 0.0
        %v2869 = vadd.f32 %v2867, %v2868
        %2870 = vadd.xlane.f32.xlu0 %v2869
        %v2871 = vpop.xlane.xlu0 %2870
        %v2872 = vadd.f32 %v2597, %v2599
        %v2873 = vsel %vm2832, %v2799, 0.0
        %v2874 = vadd.f32 %v2872, %v2873
        %2875 = vadd.xlane.f32.xlu0 %v2874
        %v2876 = vpop.xlane.xlu0 %2875
        %v2877 = vadd.f32 %v2601, %v2603
        %v2878 = vsel %vm2832, %v2802, 0.0
        %v2879 = vadd.f32 %v2877, %v2878
        %2880 = vadd.xlane.f32.xlu0 %v2879
        %v2881 = vpop.xlane.xlu0 %2880
        %v2882 = vadd.f32 %v2607, %v2609
        %v2883 = vsel %vm2832, %v2807, 0.0
        %v2884 = vadd.f32 %v2882, %v2883
        %2885 = vadd.xlane.f32.xlu0 %v2884
        %v2886 = vpop.xlane.xlu0 %2885
        %v2887 = vadd.f32 %v2611, %v2613
        %v2888 = vsel %vm2832, %v2810, 0.0
        %v2889 = vadd.f32 %v2887, %v2888
        %2890 = vadd.xlane.f32.xlu0 %v2889
        %v2891 = vpop.xlane.xlu0 %2890
        %v2892 = vadd.f32 %v2617, %v2619
        %v2893 = vsel %vm2832, %v2815, 0.0
        %v2894 = vadd.f32 %v2892, %v2893
        %2895 = vadd.xlane.f32.xlu0 %v2894
        %v2896 = vpop.xlane.xlu0 %2895
        %v2897 = vadd.f32 %v2621, %v2623
        %v2898 = vsel %vm2832, %v2818, 0.0
        %v2899 = vadd.f32 %v2897, %v2898
        %2900 = vadd.xlane.f32.xlu0 %v2899
        %v2901 = vpop.xlane.xlu0 %2900
        %v2902 = vadd.f32 %v2627, %v2629
        %v2903 = vsel %vm2832, %v2823, 0.0
        %v2904 = vadd.f32 %v2902, %v2903
        %2905 = vadd.xlane.f32.xlu0 %v2904
        %v2906 = vpop.xlane.xlu0 %2905
        %v2907 = vadd.f32 %v2631, %v2633
        %v2908 = vsel %vm2832, %v2826, 0.0
        %v2909 = vadd.f32 %v2907, %v2908
        %2910 = vadd.xlane.f32.xlu0 %v2909
        %v2911 = vpop.xlane.xlu0 %2910
        %v2912 = vrcp.pop 300.0
        %v2913 = vmul.f32 %v2836, %v2912
        %v2914 = vmul.f32 %v2841, %v2912
        %v2915 = vmul.f32 %v2846, %v2912
        %v2916 = vmul.f32 %v2851, %v2912
        %v2917 = vmul.f32 %v2856, %v2912
        %v2918 = vmul.f32 %v2861, %v2912
        %v2919 = vmul.f32 %v2866, %v2912
        %v2920 = vmul.f32 %v2871, %v2912
        %v2921 = vmul.f32 %v2876, %v2912
        %v2922 = vmul.f32 %v2881, %v2912
        %v2923 = vmul.f32 %v2886, %v2912
        %v2924 = vmul.f32 %v2891, %v2912
        %v2925 = vmul.f32 %v2896, %v2912
        %v2926 = vmul.f32 %v2901, %v2912
        %v2927 = vmul.f32 %v2906, %v2912
        %v2928 = vmul.f32 %v2911, %v2912
        %v2929 = vsub.f32 %v2557, %v2913
        %v2930 = vsub.f32 %v2559, %v2913
        %v2931 = vsub.f32 %v2767, %v2913
        %v2932 = vsub.f32 %v2561, %v2914
        %v2933 = vsub.f32 %v2563, %v2914
        %v2934 = vsub.f32 %v2770, %v2914
        %v2935 = vsub.f32 %v2567, %v2915
        %v2936 = vsub.f32 %v2569, %v2915
        %v2937 = vsub.f32 %v2775, %v2915
        %v2938 = vsub.f32 %v2571, %v2916
        %v2939 = vsub.f32 %v2573, %v2916
        %v2940 = vsub.f32 %v2778, %v2916
        %v2941 = vsub.f32 %v2577, %v2917
        %v2942 = vsub.f32 %v2579, %v2917
        %v2943 = vsub.f32 %v2783, %v2917
        %v2944 = vsub.f32 %v2581, %v2918
        %v2945 = vsub.f32 %v2583, %v2918
        %v2946 = vsub.f32 %v2786, %v2918
        %v2947 = vsub.f32 %v2587, %v2919
        %v2948 = vsub.f32 %v2589, %v2919
        %v2949 = vsub.f32 %v2791, %v2919
        %v2950 = vsub.f32 %v2591, %v2920
        %v2951 = vsub.f32 %v2593, %v2920
        %v2952 = vsub.f32 %v2794, %v2920
        %v2953 = vsub.f32 %v2597, %v2921
        %v2954 = vsub.f32 %v2599, %v2921
        %v2955 = vsub.f32 %v2799, %v2921
        %v2956 = vsub.f32 %v2601, %v2922
        %v2957 = vsub.f32 %v2603, %v2922
        %v2958 = vsub.f32 %v2802, %v2922
        %v2959 = vsub.f32 %v2607, %v2923
        %v2960 = vsub.f32 %v2609, %v2923
        %v2961 = vsub.f32 %v2807, %v2923
        %v2962 = vsub.f32 %v2611, %v2924
        %v2963 = vsub.f32 %v2613, %v2924
        %v2964 = vsub.f32 %v2810, %v2924
        %v2965 = vsub.f32 %v2617, %v2925
        %v2966 = vsub.f32 %v2619, %v2925
        %v2967 = vsub.f32 %v2815, %v2925
        %v2968 = vsub.f32 %v2621, %v2926
        %v2969 = vsub.f32 %v2623, %v2926
        %v2970 = vsub.f32 %v2818, %v2926
        %v2971 = vsub.f32 %v2627, %v2927
        %v2972 = vsub.f32 %v2629, %v2927
        %v2973 = vsub.f32 %v2823, %v2927
        %v2974 = vsub.f32 %v2631, %v2928
        %v2975 = vsub.f32 %v2633, %v2928
        %v2976 = vsub.f32 %v2826, %v2928
        %v2977 = vmul.f32 %v2929, %v2929
        %v2978 = vmul.f32 %v2930, %v2930
        %v2979 = vmul.f32 %v2931, %v2931
        %v2980 = vmul.f32 %v2932, %v2932
        %v2981 = vmul.f32 %v2933, %v2933
        %v2982 = vmul.f32 %v2934, %v2934
        %v2983 = vmul.f32 %v2935, %v2935
        %v2984 = vmul.f32 %v2936, %v2936
        %v2985 = vmul.f32 %v2937, %v2937
        %v2986 = vmul.f32 %v2938, %v2938
        %v2987 = vmul.f32 %v2939, %v2939
        %v2988 = vmul.f32 %v2940, %v2940
        %v2989 = vmul.f32 %v2941, %v2941
        %v2990 = vmul.f32 %v2942, %v2942
        %v2991 = vmul.f32 %v2943, %v2943
        %v2992 = vmul.f32 %v2944, %v2944
        %v2993 = vmul.f32 %v2945, %v2945
        %v2994 = vmul.f32 %v2946, %v2946
        %v2995 = vmul.f32 %v2947, %v2947
        %v2996 = vmul.f32 %v2948, %v2948
        %v2997 = vmul.f32 %v2949, %v2949
        %v2998 = vmul.f32 %v2950, %v2950
        %v2999 = vmul.f32 %v2951, %v2951
        %v3000 = vmul.f32 %v2952, %v2952
        %v3001 = vmul.f32 %v2953, %v2953
        %v3002 = vmul.f32 %v2954, %v2954
        %v3003 = vmul.f32 %v2955, %v2955
        %v3004 = vmul.f32 %v2956, %v2956
        %v3005 = vmul.f32 %v2957, %v2957
        %v3006 = vmul.f32 %v2958, %v2958
        %v3007 = vmul.f32 %v2959, %v2959
        %v3008 = vmul.f32 %v2960, %v2960
        %v3009 = vmul.f32 %v2961, %v2961
        %v3010 = vmul.f32 %v2962, %v2962
        %v3011 = vmul.f32 %v2963, %v2963
        %v3012 = vmul.f32 %v2964, %v2964
        %v3013 = vmul.f32 %v2965, %v2965
        %v3014 = vmul.f32 %v2966, %v2966
        %v3015 = vmul.f32 %v2967, %v2967
        %v3016 = vmul.f32 %v2968, %v2968
        %v3017 = vmul.f32 %v2969, %v2969
        %v3018 = vmul.f32 %v2970, %v2970
        %v3019 = vmul.f32 %v2971, %v2971
        %v3020 = vmul.f32 %v2972, %v2972
        %v3021 = vmul.f32 %v2973, %v2973
        %v3022 = vmul.f32 %v2974, %v2974
        %v3023 = vmul.f32 %v2975, %v2975
        %v3024 = vmul.f32 %v2976, %v2976
        %v3025 = vadd.f32 %v2977, %v2978
        %v3026 = vsel %vm2832, %v2979, 0.0
        %v3027 = vadd.f32 %v3025, %v3026
        %3028 = vadd.xlane.f32.xlu0 %v3027
        %v3029 = vpop.xlane.xlu0 %3028
        %v3030 = vadd.f32 %v2980, %v2981
        %v3031 = vsel %vm2832, %v2982, 0.0
        %v3032 = vadd.f32 %v3030, %v3031
        %3033 = vadd.xlane.f32.xlu0 %v3032
        %v3034 = vpop.xlane.xlu0 %3033
        %v3035 = vadd.f32 %v2983, %v2984
        %v3036 = vsel %vm2832, %v2985, 0.0
        %v3037 = vadd.f32 %v3035, %v3036
        %3038 = vadd.xlane.f32.xlu0 %v3037
        %v3039 = vpop.xlane.xlu0 %3038
        %v3040 = vadd.f32 %v2986, %v2987
        %v3041 = vsel %vm2832, %v2988, 0.0
        %v3042 = vadd.f32 %v3040, %v3041
        %3043 = vadd.xlane.f32.xlu0 %v3042
        %v3044 = vpop.xlane.xlu0 %3043
        %v3045 = vadd.f32 %v2989, %v2990
        %v3046 = vsel %vm2832, %v2991, 0.0
        %v3047 = vadd.f32 %v3045, %v3046
        %3048 = vadd.xlane.f32.xlu0 %v3047
        %v3049 = vpop.xlane.xlu0 %3048
        %v3050 = vadd.f32 %v2992, %v2993
        %v3051 = vsel %vm2832, %v2994, 0.0
        %v3052 = vadd.f32 %v3050, %v3051
        %3053 = vadd.xlane.f32.xlu0 %v3052
        %v3054 = vpop.xlane.xlu0 %3053
        %v3055 = vadd.f32 %v2995, %v2996
        %v3056 = vsel %vm2832, %v2997, 0.0
        %v3057 = vadd.f32 %v3055, %v3056
        %3058 = vadd.xlane.f32.xlu0 %v3057
        %v3059 = vpop.xlane.xlu0 %3058
        %v3060 = vadd.f32 %v2998, %v2999
        %v3061 = vsel %vm2832, %v3000, 0.0
        %v3062 = vadd.f32 %v3060, %v3061
        %3063 = vadd.xlane.f32.xlu0 %v3062
        %v3064 = vpop.xlane.xlu0 %3063
        %v3065 = vadd.f32 %v3001, %v3002
        %v3066 = vsel %vm2832, %v3003, 0.0
        %v3067 = vadd.f32 %v3065, %v3066
        %3068 = vadd.xlane.f32.xlu0 %v3067
        %v3069 = vpop.xlane.xlu0 %3068
        %v3070 = vadd.f32 %v3004, %v3005
        %v3071 = vsel %vm2832, %v3006, 0.0
        %v3072 = vadd.f32 %v3070, %v3071
        %3073 = vadd.xlane.f32.xlu0 %v3072
        %v3074 = vpop.xlane.xlu0 %3073
        %v3075 = vadd.f32 %v3007, %v3008
        %v3076 = vsel %vm2832, %v3009, 0.0
        %v3077 = vadd.f32 %v3075, %v3076
        %3078 = vadd.xlane.f32.xlu0 %v3077
        %v3079 = vpop.xlane.xlu0 %3078
        %v3080 = vadd.f32 %v3010, %v3011
        %v3081 = vsel %vm2832, %v3012, 0.0
        %v3082 = vadd.f32 %v3080, %v3081
        %3083 = vadd.xlane.f32.xlu0 %v3082
        %v3084 = vpop.xlane.xlu0 %3083
        %v3085 = vadd.f32 %v3013, %v3014
        %v3086 = vsel %vm2832, %v3015, 0.0
        %v3087 = vadd.f32 %v3085, %v3086
        %3088 = vadd.xlane.f32.xlu0 %v3087
        %v3089 = vpop.xlane.xlu0 %3088
        %v3090 = vadd.f32 %v3016, %v3017
        %v3091 = vsel %vm2832, %v3018, 0.0
        %v3092 = vadd.f32 %v3090, %v3091
        %3093 = vadd.xlane.f32.xlu0 %v3092
        %v3094 = vpop.xlane.xlu0 %3093
        %v3095 = vadd.f32 %v3019, %v3020
        %v3096 = vsel %vm2832, %v3021, 0.0
        %v3097 = vadd.f32 %v3095, %v3096
        %3098 = vadd.xlane.f32.xlu0 %v3097
        %v3099 = vpop.xlane.xlu0 %3098
        %v3100 = vadd.f32 %v3022, %v3023
        %v3101 = vsel %vm2832, %v3024, 0.0
        %v3102 = vadd.f32 %v3100, %v3101
        %3103 = vadd.xlane.f32.xlu0 %v3102
        %v3104 = vpop.xlane.xlu0 %3103
        %v3105 = vmul.f32 %v3029, %v2912
        %v3106 = vmul.f32 %v3034, %v2912
        %v3107 = vmul.f32 %v3039, %v2912
        %v3108 = vmul.f32 %v3044, %v2912
        %v3109 = vmul.f32 %v3049, %v2912
        %v3110 = vmul.f32 %v3054, %v2912
        %v3111 = vmul.f32 %v3059, %v2912
        %v3112 = vmul.f32 %v3064, %v2912
        %v3113 = vmul.f32 %v3069, %v2912
        %v3114 = vmul.f32 %v3074, %v2912
        %v3115 = vmul.f32 %v3079, %v2912
        %v3116 = vmul.f32 %v3084, %v2912
        %v3117 = vmul.f32 %v3089, %v2912
        %v3118 = vmul.f32 %v3094, %v2912
        %v3119 = vmul.f32 %v3099, %v2912
        %v3120 = vmul.f32 %v3104, %v2912
        %v3121 = vadd.f32 %v3105, 1e-05
        %v3122 = vadd.f32 %v3106, 1e-05
        %v3123 = vadd.f32 %v3107, 1e-05
        %v3124 = vadd.f32 %v3108, 1e-05
        %v3125 = vadd.f32 %v3109, 1e-05
        %v3126 = vadd.f32 %v3110, 1e-05
        %v3127 = vadd.f32 %v3111, 1e-05
        %v3128 = vadd.f32 %v3112, 1e-05
        %v3129 = vadd.f32 %v3113, 1e-05
        %v3130 = vadd.f32 %v3114, 1e-05
        %v3131 = vadd.f32 %v3115, 1e-05
        %v3132 = vadd.f32 %v3116, 1e-05
        %v3133 = vadd.f32 %v3117, 1e-05
        %v3134 = vadd.f32 %v3118, 1e-05
        %v3135 = vadd.f32 %v3119, 1e-05
        %v3136 = vadd.f32 %v3120, 1e-05
        %v3137 = vrsqrt.pop %v3121
        %v3138 = vrsqrt.pop %v3122
        %v3139 = vrsqrt.pop %v3123
        %v3140 = vrsqrt.pop %v3124
        %v3141 = vrsqrt.pop %v3125
        %v3142 = vrsqrt.pop %v3126
        %v3143 = vrsqrt.pop %v3127
        %v3144 = vrsqrt.pop %v3128
        %v3145 = vrsqrt.pop %v3129
        %v3146 = vrsqrt.pop %v3130
        %v3147 = vrsqrt.pop %v3131
        %v3148 = vrsqrt.pop %v3132
        %v3149 = vrsqrt.pop %v3133
        %v3150 = vrsqrt.pop %v3134
        %v3151 = vrsqrt.pop %v3135
        %v3152 = vrsqrt.pop %v3136
        %v3153 = vmul.f32 %v2929, %v3137
        %v3154 = vmul.f32 %v2930, %v3137
        %v3155 = vmul.f32 %v2931, %v3137
        %v3156 = vmul.f32 %v2932, %v3138
        %v3157 = vmul.f32 %v2933, %v3138
        %v3158 = vmul.f32 %v2934, %v3138
        %v3159 = vmul.f32 %v2935, %v3139
        %v3160 = vmul.f32 %v2936, %v3139
        %v3161 = vmul.f32 %v2937, %v3139
        %v3162 = vmul.f32 %v2938, %v3140
        %v3163 = vmul.f32 %v2939, %v3140
        %v3164 = vmul.f32 %v2940, %v3140
        %v3165 = vmul.f32 %v2941, %v3141
        %v3166 = vmul.f32 %v2942, %v3141
        %v3167 = vmul.f32 %v2943, %v3141
        %v3168 = vmul.f32 %v2944, %v3142
        %v3169 = vmul.f32 %v2945, %v3142
        %v3170 = vmul.f32 %v2946, %v3142
        %v3171 = vmul.f32 %v2947, %v3143
        %v3172 = vmul.f32 %v2948, %v3143
        %v3173 = vmul.f32 %v2949, %v3143
        %v3174 = vmul.f32 %v2950, %v3144
        %v3175 = vmul.f32 %v2951, %v3144
        %v3176 = vmul.f32 %v2952, %v3144
        %v3177 = vmul.f32 %v2953, %v3145
        %v3178 = vmul.f32 %v2954, %v3145
        %v3179 = vmul.f32 %v2955, %v3145
        %v3180 = vmul.f32 %v2956, %v3146
        %v3181 = vmul.f32 %v2957, %v3146
        %v3182 = vmul.f32 %v2958, %v3146
        %v3183 = vmul.f32 %v2959, %v3147
        %v3184 = vmul.f32 %v2960, %v3147
        %v3185 = vmul.f32 %v2961, %v3147
        %v3186 = vmul.f32 %v2962, %v3148
        %v3187 = vmul.f32 %v2963, %v3148
        %v3188 = vmul.f32 %v2964, %v3148
        %v3189 = vmul.f32 %v2965, %v3149
        %v3190 = vmul.f32 %v2966, %v3149
        %v3191 = vmul.f32 %v2967, %v3149
        %v3192 = vmul.f32 %v2968, %v3150
        %v3193 = vmul.f32 %v2969, %v3150
        %v3194 = vmul.f32 %v2970, %v3150
        %v3195 = vmul.f32 %v2971, %v3151
        %v3196 = vmul.f32 %v2972, %v3151
        %v3197 = vmul.f32 %v2973, %v3151
        %v3198 = vmul.f32 %v2974, %v3152
        %v3199 = vmul.f32 %v2975, %v3152
        %v3200 = vmul.f32 %v2976, %v3152
        %v3202 = vlaneseq
        %v3203 = vshrl.u32 %v3202, 7
        %v3204 = vsub.s32 0, %v3203
        %v3205 = vrot.slane %v2829, %v3204
        %v3206 = vlaneseq
        %v3207 = vshrl.u32 %v3206, 7
        %v3208 = vsub.s32 1, %v3207
        %v3209 = vrot.slane %v2829, %v3208
        %v3210 = vlaneseq
        %v3211 = vshrl.u32 %v3210, 7
        %v3212 = vsub.s32 2, %v3211
        %v3213 = vrot.slane %v2829, %v3212
        %v3217 = vmul.f32 %v3153, %v3205
        %v3218 = vmul.f32 %v3154, %v3209
        %v3219 = vmul.f32 %v3155, %v3213
        %v3220 = vmul.f32 %v3156, %v3205
        %v3221 = vmul.f32 %v3157, %v3209
        %v3222 = vmul.f32 %v3158, %v3213
        %v3223 = vmul.f32 %v3159, %v3205
        %v3224 = vmul.f32 %v3160, %v3209
        %v3225 = vmul.f32 %v3161, %v3213
        %v3226 = vmul.f32 %v3162, %v3205
        %v3227 = vmul.f32 %v3163, %v3209
        %v3228 = vmul.f32 %v3164, %v3213
        %v3229 = vmul.f32 %v3165, %v3205
        %v3230 = vmul.f32 %v3166, %v3209
        %v3231 = vmul.f32 %v3167, %v3213
        %v3232 = vmul.f32 %v3168, %v3205
        %v3233 = vmul.f32 %v3169, %v3209
        %v3234 = vmul.f32 %v3170, %v3213
        %v3235 = vmul.f32 %v3171, %v3205
        %v3236 = vmul.f32 %v3172, %v3209
        %v3237 = vmul.f32 %v3173, %v3213
        %v3238 = vmul.f32 %v3174, %v3205
        %v3239 = vmul.f32 %v3175, %v3209
        %v3240 = vmul.f32 %v3176, %v3213
        %v3241 = vmul.f32 %v3177, %v3205
        %v3242 = vmul.f32 %v3178, %v3209
        %v3243 = vmul.f32 %v3179, %v3213
        %v3244 = vmul.f32 %v3180, %v3205
        %v3245 = vmul.f32 %v3181, %v3209
        %v3246 = vmul.f32 %v3182, %v3213
        %v3247 = vmul.f32 %v3183, %v3205
        %v3248 = vmul.f32 %v3184, %v3209
        %v3249 = vmul.f32 %v3185, %v3213
        %v3250 = vmul.f32 %v3186, %v3205
        %v3251 = vmul.f32 %v3187, %v3209
        %v3252 = vmul.f32 %v3188, %v3213
        %v3253 = vmul.f32 %v3189, %v3205
        %v3254 = vmul.f32 %v3190, %v3209
        %v3255 = vmul.f32 %v3191, %v3213
        %v3256 = vmul.f32 %v3192, %v3205
        %v3257 = vmul.f32 %v3193, %v3209
        %v3258 = vmul.f32 %v3194, %v3213
        %v3259 = vmul.f32 %v3195, %v3205
        %v3260 = vmul.f32 %v3196, %v3209
        %v3261 = vmul.f32 %v3197, %v3213
        %v3262 = vmul.f32 %v3198, %v3205
        %v3263 = vmul.f32 %v3199, %v3209
        %v3264 = vmul.f32 %v3200, %v3213
        %v3266 = vlaneseq
        %v3267 = vshrl.u32 %v3266, 7
        %v3268 = vsub.s32 0, %v3267
        %v3269 = vrot.slane %v2830, %v3268
        %v3270 = vlaneseq
        %v3271 = vshrl.u32 %v3270, 7
        %v3272 = vsub.s32 1, %v3271
        %v3273 = vrot.slane %v2830, %v3272
        %v3274 = vlaneseq
        %v3275 = vshrl.u32 %v3274, 7
        %v3276 = vsub.s32 2, %v3275
        %v3277 = vrot.slane %v2830, %v3276
        %v3281 = vadd.f32 %v3217, %v3269
        %v3282 = vadd.f32 %v3218, %v3273
        %v3283 = vadd.f32 %v3219, %v3277
        %v3284 = vadd.f32 %v3220, %v3269
        %v3285 = vadd.f32 %v3221, %v3273
        %v3286 = vadd.f32 %v3222, %v3277
        %v3287 = vadd.f32 %v3223, %v3269
        %v3288 = vadd.f32 %v3224, %v3273
        %v3289 = vadd.f32 %v3225, %v3277
        %v3290 = vadd.f32 %v3226, %v3269
        %v3291 = vadd.f32 %v3227, %v3273
        %v3292 = vadd.f32 %v3228, %v3277
        %v3293 = vadd.f32 %v3229, %v3269
        %v3294 = vadd.f32 %v3230, %v3273
        %v3295 = vadd.f32 %v3231, %v3277
        %v3296 = vadd.f32 %v3232, %v3269
        %v3297 = vadd.f32 %v3233, %v3273
        %v3298 = vadd.f32 %v3234, %v3277
        %v3299 = vadd.f32 %v3235, %v3269
        %v3300 = vadd.f32 %v3236, %v3273
        %v3301 = vadd.f32 %v3237, %v3277
        %v3302 = vadd.f32 %v3238, %v3269
        %v3303 = vadd.f32 %v3239, %v3273
        %v3304 = vadd.f32 %v3240, %v3277
        %v3305 = vadd.f32 %v3241, %v3269
        %v3306 = vadd.f32 %v3242, %v3273
        %v3307 = vadd.f32 %v3243, %v3277
        %v3308 = vadd.f32 %v3244, %v3269
        %v3309 = vadd.f32 %v3245, %v3273
        %v3310 = vadd.f32 %v3246, %v3277
        %v3311 = vadd.f32 %v3247, %v3269
        %v3312 = vadd.f32 %v3248, %v3273
        %v3313 = vadd.f32 %v3249, %v3277
        %v3314 = vadd.f32 %v3250, %v3269
        %v3315 = vadd.f32 %v3251, %v3273
        %v3316 = vadd.f32 %v3252, %v3277
        %v3317 = vadd.f32 %v3253, %v3269
        %v3318 = vadd.f32 %v3254, %v3273
        %v3319 = vadd.f32 %v3255, %v3277
        %v3320 = vadd.f32 %v3256, %v3269
        %v3321 = vadd.f32 %v3257, %v3273
        %v3322 = vadd.f32 %v3258, %v3277
        %v3323 = vadd.f32 %v3259, %v3269
        %v3324 = vadd.f32 %v3260, %v3273
        %v3325 = vadd.f32 %v3261, %v3277
        %v3326 = vadd.f32 %v3262, %v3269
        %v3327 = vadd.f32 %v3263, %v3273
        %v3328 = vadd.f32 %v3264, %v3277
        %v3329 = vmax.f32 %v3281, 0.0
        %v3330 = vmax.f32 %v3282, 0.0
        %v3331 = vmax.f32 %v3283, 0.0
        %v3332 = vmax.f32 %v3284, 0.0
        %v3333 = vmax.f32 %v3285, 0.0
        %v3334 = vmax.f32 %v3286, 0.0
        %v3335 = vmax.f32 %v3287, 0.0
        %v3336 = vmax.f32 %v3288, 0.0
        %v3337 = vmax.f32 %v3289, 0.0
        %v3338 = vmax.f32 %v3290, 0.0
        %v3339 = vmax.f32 %v3291, 0.0
        %v3340 = vmax.f32 %v3292, 0.0
        %v3341 = vmax.f32 %v3293, 0.0
        %v3342 = vmax.f32 %v3294, 0.0
        %v3343 = vmax.f32 %v3295, 0.0
        %v3344 = vmax.f32 %v3296, 0.0
        %v3345 = vmax.f32 %v3297, 0.0
        %v3346 = vmax.f32 %v3298, 0.0
        %v3347 = vmax.f32 %v3299, 0.0
        %v3348 = vmax.f32 %v3300, 0.0
        %v3349 = vmax.f32 %v3301, 0.0
        %v3350 = vmax.f32 %v3302, 0.0
        %v3351 = vmax.f32 %v3303, 0.0
        %v3352 = vmax.f32 %v3304, 0.0
        %v3353 = vmax.f32 %v3305, 0.0
        %v3354 = vmax.f32 %v3306, 0.0
        %v3355 = vmax.f32 %v3307, 0.0
        %v3356 = vmax.f32 %v3308, 0.0
        %v3357 = vmax.f32 %v3309, 0.0
        %v3358 = vmax.f32 %v3310, 0.0
        %v3359 = vmax.f32 %v3311, 0.0
        %v3360 = vmax.f32 %v3312, 0.0
        %v3361 = vmax.f32 %v3313, 0.0
        %v3362 = vmax.f32 %v3314, 0.0
        %v3363 = vmax.f32 %v3315, 0.0
        %v3364 = vmax.f32 %v3316, 0.0
        %v3365 = vmax.f32 %v3317, 0.0
        %v3366 = vmax.f32 %v3318, 0.0
        %v3367 = vmax.f32 %v3319, 0.0
        %v3368 = vmax.f32 %v3320, 0.0
        %v3369 = vmax.f32 %v3321, 0.0
        %v3370 = vmax.f32 %v3322, 0.0
        %v3371 = vmax.f32 %v3323, 0.0
        %v3372 = vmax.f32 %v3324, 0.0
        %v3373 = vmax.f32 %v3325, 0.0
        %v3374 = vmax.f32 %v3326, 0.0
        %v3375 = vmax.f32 %v3327, 0.0
        %v3376 = vmax.f32 %v3328, 0.0
        %v3377 = vpack.c.bf16 %v3332, %v3329
        %v3378 = vpack.c.bf16 %v3333, %v3330
        %v3379 = vpack.c.bf16 %v3334, %v3331
        %v3380 = vpack.c.bf16 %v3338, %v3335
        %v3381 = vpack.c.bf16 %v3339, %v3336
        %v3382 = vpack.c.bf16 %v3340, %v3337
        %v3383 = vpack.c.bf16 %v3344, %v3341
        %v3384 = vpack.c.bf16 %v3345, %v3342
        %v3385 = vpack.c.bf16 %v3346, %v3343
        %v3386 = vpack.c.bf16 %v3350, %v3347
        %v3387 = vpack.c.bf16 %v3351, %v3348
        %v3388 = vpack.c.bf16 %v3352, %v3349
        %v3389 = vpack.c.bf16 %v3356, %v3353
        %v3390 = vpack.c.bf16 %v3357, %v3354
        %v3391 = vpack.c.bf16 %v3358, %v3355
        %v3392 = vpack.c.bf16 %v3362, %v3359
        %v3393 = vpack.c.bf16 %v3363, %v3360
        %v3394 = vpack.c.bf16 %v3364, %v3361
        %v3395 = vpack.c.bf16 %v3368, %v3365
        %v3396 = vpack.c.bf16 %v3369, %v3366
        %v3397 = vpack.c.bf16 %v3370, %v3367
        %v3398 = vpack.c.bf16 %v3374, %v3371
        %v3399 = vpack.c.bf16 %v3375, %v3372
        %v3400 = vpack.c.bf16 %v3376, %v3373
        %v3401 = vld [vmem:[%s9] sm:$0xf]
        %v3402 = vld [vmem:[%s9 + $0x4] sm:$0xf]
        %v3403 = vld [vmem:[%s9 + $0x8] sm:$0xf]
        %v3404 = vld [vmem:[%s9 + $0xc] sm:$0xf]
        %v3405 = vld [vmem:[%s9 + $0x10] sm:$0xf]
        %v3406 = vld [vmem:[%s9 + $0x14] sm:$0xf]
        %v3407 = vld [vmem:[%s9 + $0x18] sm:$0xf]
        %v3408 = vld [vmem:[%s9 + $0x1c] sm:$0xf]
        %v3409 = vld [vmem:[%s9 + $0x20] sm:$0xf]
        %v3410 = vld [vmem:[%s9 + $0x24] sm:$0xf]
        %v3411 = vld [vmem:[%s9 + $0x28] sm:$0xf]
        %v3412 = vld [vmem:[%s9 + $0x2c] sm:$0xf]
        %v3413 = vld [vmem:[%s9 + $0x30] sm:$0xf]
        %v3414 = vld [vmem:[%s9 + $0x34] sm:$0xf]
        %v3415 = vld [vmem:[%s9 + $0x38] sm:$0xf]
        %v3416 = vld [vmem:[%s9 + $0x3c] sm:$0xf]
        %v3417 = vld [vmem:[%s9 + $0x40] sm:$0xf]
        %v3418 = vld [vmem:[%s9 + $0x44] sm:$0xf]
        %v3419 = vld [vmem:[%s9 + $0x48] sm:$0xf]
        %v3420 = vld [vmem:[%s9 + $0x4c] sm:$0xf]
        %v3421 = vld [vmem:[%s9 + $0x50] sm:$0xf]
        %v3422 = vld [vmem:[%s9 + $0x54] sm:$0xf]
        %v3423 = vld [vmem:[%s9 + $0x58] sm:$0xf]
        %v3424 = vld [vmem:[%s9 + $0x5c] sm:$0xf]
        %v3425 = vld [vmem:[%s9 + $0x60] sm:$0xf]
        %v3426 = vld [vmem:[%s9 + $0x64] sm:$0xf]
        %v3427 = vld [vmem:[%s9 + $0x68] sm:$0xf]
        %v3428 = vld [vmem:[%s9 + $0x6c] sm:$0xf]
        %v3429 = vld [vmem:[%s9 + $0x70] sm:$0xf]
        %v3430 = vld [vmem:[%s9 + $0x74] sm:$0xf]
        %v3431 = vld [vmem:[%s9 + $0x78] sm:$0xf]
        %v3432 = vld [vmem:[%s9 + $0x7c] sm:$0xf]
        %v3433 = vld [vmem:[%s9 + $0x80] sm:$0xf]
        %v3434 = vld [vmem:[%s9 + $0x84] sm:$0xf]
        %v3435 = vld [vmem:[%s9 + $0x88] sm:$0xf]
        %v3436 = vld [vmem:[%s9 + $0x8c] sm:$0xf]
        %v3437 = vld [vmem:[%s9 + $0x90] sm:$0xf]
        %v3438 = vld [vmem:[%s9 + $0x94] sm:$0x3]
        %v3439 = vld [vmem:[#allocation2] sm:$0x1]
        %v3441 = vlaneseq
        %v3442 = vshrl.u32 %v3441, 7
        %v3443 = vsub.s32 0, %v3442
        %v3444 = vrot.slane %v3439, %v3443
        %v3484 = vunpack.c.l.b16 %v3401
        %v3485 = vunpack.c.l.b16 %v3402
        %v3486 = vunpack.c.l.b16 %v3403
        %v3487 = vunpack.c.l.b16 %v3404
        %v3488 = vunpack.c.l.b16 %v3405
        %v3489 = vunpack.c.l.b16 %v3406
        %v3490 = vunpack.c.l.b16 %v3407
        %v3491 = vunpack.c.l.b16 %v3408
        %v3492 = vunpack.c.l.b16 %v3409
        %v3493 = vunpack.c.l.b16 %v3410
        %v3494 = vunpack.c.l.b16 %v3411
        %v3495 = vunpack.c.l.b16 %v3412
        %v3496 = vunpack.c.l.b16 %v3413
        %v3497 = vunpack.c.l.b16 %v3414
        %v3498 = vunpack.c.l.b16 %v3415
        %v3499 = vunpack.c.l.b16 %v3416
        %v3500 = vunpack.c.l.b16 %v3417
        %v3501 = vunpack.c.l.b16 %v3418
        %v3502 = vunpack.c.l.b16 %v3419
        %v3503 = vunpack.c.l.b16 %v3420
        %v3504 = vunpack.c.l.b16 %v3421
        %v3505 = vunpack.c.l.b16 %v3422
        %v3506 = vunpack.c.l.b16 %v3423
        %v3507 = vunpack.c.l.b16 %v3424
        %v3508 = vunpack.c.l.b16 %v3425
        %v3509 = vunpack.c.l.b16 %v3426
        %v3510 = vunpack.c.l.b16 %v3427
        %v3511 = vunpack.c.l.b16 %v3428
        %v3512 = vunpack.c.l.b16 %v3429
        %v3513 = vunpack.c.l.b16 %v3430
        %v3514 = vunpack.c.l.b16 %v3431
        %v3515 = vunpack.c.l.b16 %v3432
        %v3516 = vunpack.c.l.b16 %v3433
        %v3517 = vunpack.c.l.b16 %v3434
        %v3518 = vunpack.c.l.b16 %v3435
        %v3519 = vunpack.c.l.b16 %v3436
        %v3520 = vunpack.c.l.b16 %v3437
        %v3521 = vunpack.c.l.b16 %v3438
        %v3522 = vpack.c.b16 %v3485, %v3484
        %v3523 = vpack.c.b16 %v3487, %v3486
        %v3524 = vpack.c.b16 %v3489, %v3488
        %v3525 = vpack.c.b16 %v3491, %v3490
        %v3526 = vpack.c.b16 %v3493, %v3492
        %v3527 = vpack.c.b16 %v3495, %v3494
        %v3528 = vpack.c.b16 %v3497, %v3496
        %v3529 = vpack.c.b16 %v3499, %v3498
        %v3530 = vpack.c.b16 %v3501, %v3500
        %v3531 = vpack.c.b16 %v3503, %v3502
        %v3532 = vpack.c.b16 %v3505, %v3504
        %v3533 = vpack.c.b16 %v3507, %v3506
        %v3534 = vpack.c.b16 %v3509, %v3508
        %v3535 = vpack.c.b16 %v3511, %v3510
        %v3536 = vpack.c.b16 %v3513, %v3512
        %v3537 = vpack.c.b16 %v3515, %v3514
        %v3538 = vpack.c.b16 %v3517, %v3516
        %v3539 = vpack.c.b16 %v3519, %v3518
        %v3540 = vpack.c.b16 %v3521, %v3520
        %v3560 = vsel %vm2832, %v3379, 0
        %v3563 = vsel %vm2832, %v3382, 0
        %v3566 = vsel %vm2832, %v3385, 0
        %v3569 = vsel %vm2832, %v3388, 0
        %v3572 = vsel %vm2832, %v3391, 0
        %v3575 = vsel %vm2832, %v3394, 0
        %v3578 = vsel %vm2832, %v3397, 0
        %v3581 = vsel %vm2832, %v3400, 0
        %vm3583 = vcmask 1045504
        %v3585 = vsel %vm3583, %v3540, 0
        %3587 = vmatprep.subr.bf16.mxu0 0
        %3588 = vmatpush1.bf16.msra.mxu0 %v3529
        %3589 = vmatprep.subr.bf16.mxu0 0
        %3590 = vmatpush1.bf16.msra.mxu0 %v3528
        %3591 = vmatprep.subr.bf16.mxu0 0
        %3592 = vmatpush1.bf16.msra.mxu0 %v3527
        %3593 = vmatprep.subr.bf16.mxu0 0
        %3594 = vmatpush1.bf16.msra.mxu0 %v3526
        %3595 = vmatprep.subr.bf16.mxu0 0
        %3596 = vmatpush1.bf16.msra.mxu0 %v3525
        %3597 = vmatprep.subr.bf16.mxu0 0
        %3598 = vmatpush1.bf16.msra.mxu0 %v3524
        %3599 = vmatprep.subr.bf16.mxu0 0
        %3600 = vmatpush1.bf16.msra.mxu0 %v3523
        %3601 = vmatprep.subr.bf16.mxu0 0
        %3602 = vmatpush1.bf16.msra.mxu0 %v3522
        %3603 = vmatprep.subr.bf16.mxu0 0
        %3604 = vmatpush2.bf16.msra.mxu0 %v3537
        %3605 = vmatprep.subr.bf16.mxu0 0
        %3606 = vmatpush2.bf16.msra.mxu0 %v3536
        %3607 = vmatprep.subr.bf16.mxu0 0
        %3608 = vmatpush2.bf16.msra.mxu0 %v3535
        %3609 = vmatprep.subr.bf16.mxu0 0
        %3610 = vmatpush2.bf16.msra.mxu0 %v3534
        %3611 = vmatprep.subr.bf16.mxu0 0
        %3612 = vmatpush2.bf16.msra.mxu0 %v3533
        %3613 = vmatprep.subr.bf16.mxu0 0
        %3614 = vmatpush2.bf16.msra.mxu0 %v3532
        %3615 = vmatprep.subr.bf16.mxu0 0
        %3616 = vmatpush2.bf16.msra.mxu0 %v3531
        %3617 = vmatprep.subr.bf16.mxu0 0
        %3618 = vmatpush2.bf16.msra.mxu0 %v3530
        %3619 = vmatprep.mubr.bf16.mxu0 %v3378
        %3620 = vmatmul.mubr.bf16.gmra.mxu0 %v3377
        %v3621 = vpop.f32.mrf.mxu0
        %v3622 = vadd.f32 %v3444, %v3621
        %v3623 = vpop.f32.mrf.mxu0
        %v3624 = vpop.f32.mrf.mxu0
        %v3625 = vadd.f32 %v3444, %v3624
        %v3626 = vpop.f32.mrf.mxu0
        %3627 = vmatprep.mubr.bf16.mxu0 %v3381
        %3628 = vmatmul.mubr.bf16.gmra.mxu0 %v3380
        %v3629 = vpop.f32.mrf.mxu0
        %v3630 = vadd.f32 %v3444, %v3629
        %v3631 = vpop.f32.mrf.mxu0
        %v3632 = vpop.f32.mrf.mxu0
        %v3633 = vadd.f32 %v3444, %v3632
        %v3634 = vpop.f32.mrf.mxu0
        %3635 = vmatprep.mubr.bf16.mxu0 %v3384
        %3636 = vmatmul.mubr.bf16.gmra.mxu0 %v3383
        %v3637 = vpop.f32.mrf.mxu0
        %v3638 = vadd.f32 %v3444, %v3637
        %v3639 = vpop.f32.mrf.mxu0
        %v3640 = vpop.f32.mrf.mxu0
        %v3641 = vadd.f32 %v3444, %v3640
        %v3642 = vpop.f32.mrf.mxu0
        %3643 = vmatprep.mubr.bf16.mxu0 %v3387
        %3644 = vmatmul.mubr.bf16.gmra.mxu0 %v3386
        %v3645 = vpop.f32.mrf.mxu0
        %v3646 = vadd.f32 %v3444, %v3645
        %v3647 = vpop.f32.mrf.mxu0
        %v3648 = vpop.f32.mrf.mxu0
        %v3649 = vadd.f32 %v3444, %v3648
        %v3650 = vpop.f32.mrf.mxu0
        %3651 = vmatprep.mubr.bf16.mxu0 %v3390
        %3652 = vmatmul.mubr.bf16.gmra.mxu0 %v3389
        %v3653 = vpop.f32.mrf.mxu0
        %v3654 = vadd.f32 %v3444, %v3653
        %v3655 = vpop.f32.mrf.mxu0
        %v3656 = vpop.f32.mrf.mxu0
        %v3657 = vadd.f32 %v3444, %v3656
        %v3658 = vpop.f32.mrf.mxu0
        %3659 = vmatprep.mubr.bf16.mxu0 %v3393
        %3660 = vmatmul.mubr.bf16.gmra.mxu0 %v3392
        %v3661 = vpop.f32.mrf.mxu0
        %v3662 = vadd.f32 %v3444, %v3661
        %v3663 = vpop.f32.mrf.mxu0
        %v3664 = vpop.f32.mrf.mxu0
        %v3665 = vadd.f32 %v3444, %v3664
        %v3666 = vpop.f32.mrf.mxu0
        %3667 = vmatprep.mubr.bf16.mxu0 %v3396
        %3668 = vmatmul.mubr.bf16.gmra.mxu0 %v3395
        %v3669 = vpop.f32.mrf.mxu0
        %v3670 = vadd.f32 %v3444, %v3669
        %v3671 = vpop.f32.mrf.mxu0
        %v3672 = vpop.f32.mrf.mxu0
        %v3673 = vadd.f32 %v3444, %v3672
        %v3674 = vpop.f32.mrf.mxu0
        %3675 = vmatprep.mubr.bf16.mxu0 %v3399
        %3676 = vmatmul.mubr.bf16.gmra.mxu0 %v3398
        %v3677 = vpop.f32.mrf.mxu0
        %v3678 = vadd.f32 %v3444, %v3677
        %v3679 = vpop.f32.mrf.mxu0
        %v3680 = vpop.f32.mrf.mxu0
        %v3681 = vadd.f32 %v3444, %v3680
        %v3682 = vpop.f32.mrf.mxu0
        %3683 = vdwg.mxu0
        %3684 = vmatprep.subr.bf16.mxu0 0
        %3685 = vmatpush1.bf16.msra.mxu0 0
        %3686 = vmatprep.subr.bf16.mxu0 0
        %3687 = vmatpush1.bf16.msra.mxu0 0
        %3688 = vmatprep.subr.bf16.mxu0 0
        %3689 = vmatpush1.bf16.msra.mxu0 0
        %3690 = vmatprep.subr.bf16.mxu0 0
        %3691 = vmatpush1.bf16.msra.mxu0 0
        %3692 = vmatprep.subr.bf16.mxu0 0
        %3693 = vmatpush1.bf16.msra.mxu0 0
        %3694 = vmatprep.subr.bf16.mxu0 0
        %3695 = vmatpush1.bf16.msra.mxu0 %v3585
        %3696 = vmatprep.subr.bf16.mxu0 0
        %3697 = vmatpush1.bf16.msra.mxu0 %v3539
        %3698 = vmatprep.subr.bf16.mxu0 0
        %3699 = vmatpush1.bf16.msra.mxu0 %v3538
        %3700 = vmatprep.subr.bf16.mxu0 0
        %3701 = vmatpush2.bf16.msra.mxu0 0
        %3702 = vmatprep.subr.bf16.mxu0 0
        %3703 = vmatpush2.bf16.msra.mxu0 0
        %3704 = vmatprep.subr.bf16.mxu0 0
        %3705 = vmatpush2.bf16.msra.mxu0 0
        %3706 = vmatprep.subr.bf16.mxu0 0
        %3707 = vmatpush2.bf16.msra.mxu0 0
        %3708 = vmatprep.subr.bf16.mxu0 0
        %3709 = vmatpush2.bf16.msra.mxu0 0
        %3710 = vmatprep.subr.bf16.mxu0 0
        %3711 = vmatpush2.bf16.msra.mxu0 0
        %3712 = vmatprep.subr.bf16.mxu0 0
        %3713 = vmatpush2.bf16.msra.mxu0 0
        %3714 = vmatprep.subr.bf16.mxu0 0
        %3715 = vmatpush2.bf16.msra.mxu0 0
        %3716 = vmatprep.mubr.bf16.mxu0 0
        %3717 = vmatmul.mubr.bf16.gmra.mxu0 %v3560
        %v3718 = vpop.f32.mrf.mxu0
        %v3719 = vadd.f32 %v3622, %v3718
        %v3720 = vpop.f32.mrf.mxu0
        %v3721 = vpop.f32.mrf.mxu0
        %v3722 = vadd.f32 %v3625, %v3721
        %v3723 = vpop.f32.mrf.mxu0
        %3724 = vmatprep.mubr.bf16.mxu0 0
        %3725 = vmatmul.mubr.bf16.gmra.mxu0 %v3563
        %v3726 = vpop.f32.mrf.mxu0
        %v3727 = vadd.f32 %v3630, %v3726
        %v3728 = vpop.f32.mrf.mxu0
        %v3729 = vpop.f32.mrf.mxu0
        %v3730 = vadd.f32 %v3633, %v3729
        %v3731 = vpop.f32.mrf.mxu0
        %3732 = vmatprep.mubr.bf16.mxu0 0
        %3733 = vmatmul.mubr.bf16.gmra.mxu0 %v3566
        %v3734 = vpop.f32.mrf.mxu0
        %v3735 = vadd.f32 %v3638, %v3734
        %v3736 = vpop.f32.mrf.mxu0
        %v3737 = vpop.f32.mrf.mxu0
        %v3738 = vadd.f32 %v3641, %v3737
        %v3739 = vpop.f32.mrf.mxu0
        %3740 = vmatprep.mubr.bf16.mxu0 0
        %3741 = vmatmul.mubr.bf16.gmra.mxu0 %v3569
        %v3742 = vpop.f32.mrf.mxu0
        %v3743 = vadd.f32 %v3646, %v3742
        %v3744 = vpop.f32.mrf.mxu0
        %v3745 = vpop.f32.mrf.mxu0
        %v3746 = vadd.f32 %v3649, %v3745
        %v3747 = vpop.f32.mrf.mxu0
        %3748 = vmatprep.mubr.bf16.mxu0 0
        %3749 = vmatmul.mubr.bf16.gmra.mxu0 %v3572
        %v3750 = vpop.f32.mrf.mxu0
        %v3751 = vadd.f32 %v3654, %v3750
        %v3752 = vpop.f32.mrf.mxu0
        %v3753 = vpop.f32.mrf.mxu0
        %v3754 = vadd.f32 %v3657, %v3753
        %v3755 = vpop.f32.mrf.mxu0
        %3756 = vmatprep.mubr.bf16.mxu0 0
        %3757 = vmatmul.mubr.bf16.gmra.mxu0 %v3575
        %v3758 = vpop.f32.mrf.mxu0
        %v3759 = vadd.f32 %v3662, %v3758
        %v3760 = vpop.f32.mrf.mxu0
        %v3761 = vpop.f32.mrf.mxu0
        %v3762 = vadd.f32 %v3665, %v3761
        %v3763 = vpop.f32.mrf.mxu0
        %3764 = vmatprep.mubr.bf16.mxu0 0
        %3765 = vmatmul.mubr.bf16.gmra.mxu0 %v3578
        %v3766 = vpop.f32.mrf.mxu0
        %v3767 = vadd.f32 %v3670, %v3766
        %v3768 = vpop.f32.mrf.mxu0
        %v3769 = vpop.f32.mrf.mxu0
        %v3770 = vadd.f32 %v3673, %v3769
        %v3771 = vpop.f32.mrf.mxu0
        %3772 = vmatprep.mubr.bf16.mxu0 0
        %3773 = vmatmul.mubr.bf16.gmra.mxu0 %v3581
        %v3774 = vpop.f32.mrf.mxu0
        %v3775 = vadd.f32 %v3678, %v3774
        %v3776 = vpop.f32.mrf.mxu0
        %v3777 = vpop.f32.mrf.mxu0
        %v3778 = vadd.f32 %v3681, %v3777
        %v3779 = vpop.f32.mrf.mxu0
        %3780 = vdwg.mxu0
        %v3781 = vtanh.pop %v3719
        %v3782 = vtanh.pop %v3722
        %v3783 = vtanh.pop %v3727
        %v3784 = vtanh.pop %v3730
        %v3785 = vtanh.pop %v3735
        %v3786 = vtanh.pop %v3738
        %v3787 = vtanh.pop %v3743
        %v3788 = vtanh.pop %v3746
        %v3789 = vtanh.pop %v3751
        %v3790 = vtanh.pop %v3754
        %v3791 = vtanh.pop %v3759
        %v3792 = vtanh.pop %v3762
        %v3793 = vtanh.pop %v3767
        %v3794 = vtanh.pop %v3770
        %v3795 = vtanh.pop %v3775
        %v3796 = vtanh.pop %v3778
        %vm3797 = vcmask 7168
        %3798 = vst.msk [vmem:[%s405] sm:$0xff] %vm3797, %v3781
        %3799 = vst.msk [vmem:[%s405 + $0x8] sm:$0xff] %vm3797, %v3782
        %3800 = vst.msk [vmem:[%s405 + $0x10] sm:$0xff] %vm3797, %v3783
        %3801 = vst.msk [vmem:[%s405 + $0x18] sm:$0xff] %vm3797, %v3784
        %3802 = vst.msk [vmem:[%s405 + $0x20] sm:$0xff] %vm3797, %v3785
        %3803 = vst.msk [vmem:[%s405 + $0x28] sm:$0xff] %vm3797, %v3786
        %3804 = vst.msk [vmem:[%s405 + $0x30] sm:$0xff] %vm3797, %v3787
        %3805 = vst.msk [vmem:[%s405 + $0x38] sm:$0xff] %vm3797, %v3788
        %3806 = vst.msk [vmem:[%s405 + $0x40] sm:$0xff] %vm3797, %v3789
        %3807 = vst.msk [vmem:[%s405 + $0x48] sm:$0xff] %vm3797, %v3790
        %3808 = vst.msk [vmem:[%s405 + $0x50] sm:$0xff] %vm3797, %v3791
        %3809 = vst.msk [vmem:[%s405 + $0x58] sm:$0xff] %vm3797, %v3792
        %3810 = vst.msk [vmem:[%s405 + $0x60] sm:$0xff] %vm3797, %v3793
        %3811 = vst.msk [vmem:[%s405 + $0x68] sm:$0xff] %vm3797, %v3794
        %3812 = vst.msk [vmem:[%s405 + $0x70] sm:$0xff] %vm3797, %v3795
        %3813 = vst.msk [vmem:[%s405 + $0x78] sm:$0xff] %vm3797, %v3796
        %s3814 = smul.u32 16, %s25
        %p3815 = scmp.lt.s32.totalorder %s3814, 31
        %s3816 = scalar_select %p3815, %s3814, 31
        %s3817 = smul.addr %s3816, 8
        %s3818 = scalar_lea.vmem %s11, %s3817
        // Predicated region
        $region69: #{tpu_custom_call.1} parent=63 // pred_check
          %p3819 = pneg %p279
        $region70: #{tpu_custom_call.1} parent=63 // pred_check_branch
          %3821 = sbr.rel (%p3819) target = $region72
        $region71: #{tpu_custom_call.1} parent=63 // pred_region
          %s3822 = smul.u32 16, %s25
        $region72: #{tpu_custom_call.1} parent=63 // pred_fallthru
          _
      $region64: #{tpu_custom_call.1} parent=5 // pred_fallthru
        _
      %p3823 = scmp.le.s32.totalorder 2, %s20
      // Predicated region
      $region73: #{tpu_custom_call.1} parent=5 // pred_check
        %p3824 = pneg %p3823
      $region74: #{tpu_custom_call.1} parent=5 // pred_check_branch
        %3826 = sbr.rel (%p3824) target = $region76
      $region75: #{tpu_custom_call.1} parent=5 // pred_region
        %s3827 = ssub.s32 %s20, 2
        // Predicated region
        $region77: #{tpu_custom_call.1} parent=75 // pred_check
          %p3828 = pneg %p285
        $region78: #{tpu_custom_call.1} parent=75 // pred_check_branch
          %3830 = sbr.rel (%p3828) target = $region80
        $region79: #{tpu_custom_call.1} parent=75 // pred_region
          %s3831 = smul.u32 16, %s26
          %p3832 = scmp.lt.s32.totalorder %s3831, 31
          %s3833 = scalar_select %p3832, %s3831, 31
          %s3834 = smul.addr %s3833, 8
          %s3835 = scalar_lea.vmem %s11, %s3834
        $region80: #{tpu_custom_call.1} parent=75 // pred_fallthru
          _
      $region76: #{tpu_custom_call.1} parent=5 // pred_fallthru
        _
    $region6: #{tpu_custom_call.1} parent=1 // loop_footer
      %s24 = sadd.s32 1, %s20
    $region7: #{tpu_custom_call.1} parent=1 // loop_footer_branch
      %19 = sbr.rel target = $region3
    $region8: #{tpu_custom_call.1} parent=1 // loop_exit
      _
    %3836 = vsyncpa [#allocation4], 1
    %s3837 = scalar_lea.sflag [#allocation4], 1
    %3838 = vsyncpa %s3837, 1

</llo_original>
